<compile_context>
chip_gen: v7x
topology: tpu7x:2x2x1
jax: 0.10.0
libtpu: 0.0.40
codegen_flags: <defaults>
</compile_context>

<pallas_src>
import functools

import jax
import jax.numpy as jnp
from jax.experimental import pallas as pl
from jax.experimental.pallas import tpu as pltpu


def seq2seq_lstm_kernel(xf_ref, seed_ref,
                        ewih0_ref, ewhh0_ref, eb0_ref,
                        ewih1_ref, ewhh1_ref, eb1_ref,
                        dwih0_ref, dwhh0_ref, db0_ref,
                        wfold_ref, bfold_ref,
                        dwih1_ref, dwhh1_ref, db1_ref,
                        wfcb_ref, bfc_ref,
                        out_ref):
    f32 = jnp.float32
    TB = xf_ref.shape[0]
    Bp = seed_ref.shape[0]
    T = TB // Bp
    H = ewhh0_ref.shape[0]
    NF = out_ref.shape[1]
    G = 4 * H
    cd = ewhh0_ref.dtype  # MXU compute dtype: bf16 on the perf path, f32 on the check path

    # Recurrent weights resident for the whole kernel (already in compute dtype).
    ewhh0 = ewhh0_ref[...]
    ewih1 = ewih1_ref[...]
    ewhh1 = ewhh1_ref[...]
    dwhh0 = dwhh0_ref[...]
    wfold = wfold_ref[...]
    dwih1 = dwih1_ref[...]
    dwhh1 = dwhh1_ref[...]

    # Pre-broadcast the biases once (f32; JAX does not CSE broadcast_in_dim in loops).
    eb1b = jnp.broadcast_to(eb1_ref[...], (Bp, G))
    db0b = jnp.broadcast_to(db0_ref[...], (Bp, G))
    bfoldb = jnp.broadcast_to(bfold_ref[...], (Bp, G))
    db1b = jnp.broadcast_to(db1_ref[...], (Bp, G))

    def mm(a, w):
        # LHS cast to the MXU dtype; accumulate in f32. State itself stays f32
        # (v5e has no bf16 VPU/EUP, so all elementwise math is kept f32 everywhere).
        return jnp.dot(a.astype(cd), w, preferred_element_type=f32)

    def gate_act(gates, c):
        # PyTorch gate order: i, f, g, o.  One EUP sigmoid push over the full
        # (Bp, 4H) vreg, then lane slices for i/f/o (XLU has slack); tanh only
        # for the g slice and for c_new.
        s = jax.nn.sigmoid(gates)
        i = s[:, 0:H]
        f = s[:, H:2 * H]
        o = s[:, 3 * H:4 * H]
        g = jnp.tanh(gates[:, 2 * H:3 * H])
        c_new = f * c + i * g
        return o * jnp.tanh(c_new), c_new

    # Hoisted encoder layer-0 input projection (+ bias): one GEMM before the loop.
    # Row t*Bp + b corresponds to x[b, t, :]; Bp is a sublane multiple so each
    # per-step slice below is a whole aligned vreg tile.
    gx = (jnp.dot(xf_ref[...], ewih0_ref[...], preferred_element_type=f32)
          + eb0_ref[...])                                   # (T*Bp, 4H) f32

    zeros = jnp.zeros((Bp, H), f32)
    h0 = c0 = h1 = c1 = zeros

    # ---- encoder (unrolled: T static & small) ----
    # TODO(synk): inter-layer dropout (p=0.2) is train-mode only; inference path implemented.
    for t in range(T):
        g0 = gx[t * Bp:(t + 1) * Bp, :] + mm(h0, ewhh0)
        h0, c0 = gate_act(g0, c0)
        g1 = mm(h0, ewih1) + mm(h1, ewhh1) + eb1b
        h1, c1 = gate_act(g1, c1)

    # ---- decoder step 0: seeded with x[:, -1, 0] ----
    # K=1 input projection is a VPU broadcast multiply (kept f32), no MXU round-trip.
    g0 = seed_ref[...] * dwih0_ref[...] + mm(h0, dwhh0) + db0b
    h0, c0 = gate_act(g0, c0)
    g1 = mm(h0, dwih1) + mm(h1, dwhh1) + db1b
    h1, c1 = gate_act(g1, c1)
    h1_steps = [h1]

    # ---- decoder steps 1..NF-1: FC back-projection folded into layer-0 ----
    #   gates0 = h1 @ (wfc @ dwih0) + h0 @ dwhh0 + (bfc @ dwih0 + db0)
    # TODO(synk): teacher forcing (optional y + host RNG) is train-only; the
    # y=None pure-autoregressive path is implemented.
    for _ in range(1, NF):
        g0 = mm(h1, wfold) + mm(h0, dwhh0) + bfoldb
        h0, c0 = gate_act(g0, c0)
        g1 = mm(h0, dwih1) + mm(h1, dwhh1) + db1b
        h1, c1 = gate_act(g1, c1)
        h1_steps.append(h1)

    # ---- predictions off the critical path: one block-diagonal GEMM, one store ----
    # Kept in f32 (single off-chain GEMM; keeps the final outputs precise).
    # TODO(synk): (Bp, NF) is a lane-masked store (NF=5); pad NF to 128 / write a
    # lane-dense intermediate if NF ever grows.
    h1cat = jnp.concatenate(h1_steps, axis=1)               # (Bp, NF*H)
    out_ref[...] = (jnp.dot(h1cat, wfcb_ref[...], preferred_element_type=f32)
                    + bfc_ref[...])                          # (Bp, NF)


def prepare_inference_params(params, n_forecasts, compute_dtype=jnp.bfloat16):
    """One-time weight fusion/cast (hoisted out of the per-call path).

    Note: each layer uses a single pre-summed bias; to load a real PyTorch
    checkpoint, sum bias_ih + bias_hh per layer before passing them here.
    """
    f32 = jnp.float32
    cd = compute_dtype
    wfc = params["wfc"].astype(f32)
    bfc = params["bfc"].astype(f32)
    # Decoder layer-0 with the FC back-projection folded in
    # (pred @ dwih0 == h1 @ (wfc @ dwih0) + bfc @ dwih0).
    wfold = (wfc @ params["dwih0"]).astype(cd)                       # (H, 4H)
    bfold = (bfc @ params["dwih0"] + params["db0"]).astype(f32)      # (1, 4H)
    # Block-diagonal FC so all NF predictions come from one GEMM after the loop.
    wfc_block = jnp.kron(jnp.eye(n_forecasts, dtype=f32), wfc)       # (NF*H, NF)
    return dict(
        ewih0=params["ewih0"].astype(cd), ewhh0=params["ewhh0"].astype(cd),
        eb0=params["eb0"].astype(f32),
        ewih1=params["ewih1"].astype(cd), ewhh1=params["ewhh1"].astype(cd),
        eb1=params["eb1"].astype(f32),
        dwih0=params["dwih0"].astype(f32),   # used by the VPU broadcast-mult (step 0)
        dwhh0=params["dwhh0"].astype(cd), db0=params["db0"].astype(f32),
        wfold=wfold, bfold=bfold,
        dwih1=params["dwih1"].astype(cd), dwhh1=params["dwhh1"].astype(cd),
        db1=params["db1"].astype(f32),
        wfc_block=wfc_block, bfc=bfc,
    )


@jax.jit
def lstm_multistep_forward(x, prepped):
    """x: (B, T, I) batch-first (like the PyTorch module). Returns (B, n_forecasts, 1)."""
    B, T, I = x.shape
    NF = prepped["wfc_block"].shape[1]
    cd = prepped["ewhh0"].dtype
    # Pad batch to the sublane multiple of the MXU dtype so every state op / gx
    # slice is an unmasked full tile (f32 sublane = 8, bf16 packed tile = 16).
    sub = 16 if cd == jnp.bfloat16 else 8
    Bp = ((B + sub - 1) // sub) * sub

    x = x.astype(jnp.float32)
    dec_seed = jnp.pad(x[:, -1, 0:1], ((0, Bp - B), (0, 0)))         # (Bp, 1) f32
    # Time-major flatten + batch pad: flat row t*Bp + b == x[b, t, :].
    xt = jnp.pad(jnp.transpose(x, (1, 0, 2)), ((0, 0), (0, Bp - B), (0, 0)))
    x_flat = xt.reshape(T * Bp, I).astype(cd)

    # TODO(synk): at production T*B*H the all-resident-VMEM layout (gx is
    # (T*Bp,4H)) must be re-tiled (grid over T / emit_pipeline) and
    # vmem_limit_bytes set explicitly — v7x only has 64 MiB VMEM (32 MiB default).
    args = (x_flat, dec_seed,
            prepped["ewih0"], prepped["ewhh0"], prepped["eb0"],
            prepped["ewih1"], prepped["ewhh1"], prepped["eb1"],
            prepped["dwih0"], prepped["dwhh0"], prepped["db0"],
            prepped["wfold"], prepped["bfold"],
            prepped["dwih1"], prepped["dwhh1"], prepped["db1"],
            prepped["wfc_block"], prepped["bfc"])
    vmem = pl.BlockSpec(memory_space=pltpu.MemorySpace.VMEM)
    out = pl.pallas_call(
        seq2seq_lstm_kernel,
        out_shape=jax.ShapeDtypeStruct((Bp, NF), jnp.float32),
        in_specs=[vmem] * len(args),
        out_specs=vmem,
    )(*args)
    # TODO(synk): with a real batch on v7x, add a grid over B with
    # dimension_semantics=("parallel",) so both TensorCores are used; at toy B a
    # single invocation is the right call (on v5e/v6e a grid is just a serial loop).
    return out[:B, :, None]  # (B, n_forecasts, 1)


def init_params(key, input_size, hidden):
    """Deterministic synthetic parameters, PyTorch-style U(-1/sqrt(H), 1/sqrt(H))."""
    H = hidden
    bound = 1.0 / float(H) ** 0.5
    names_shapes = [
        ("ewih0", (input_size, 4 * H)), ("ewhh0", (H, 4 * H)), ("eb0", (1, 4 * H)),
        ("ewih1", (H, 4 * H)),          ("ewhh1", (H, 4 * H)), ("eb1", (1, 4 * H)),
        ("dwih0", (1, 4 * H)),          ("dwhh0", (H, 4 * H)), ("db0", (1, 4 * H)),
        ("dwih1", (H, 4 * H)),          ("dwhh1", (H, 4 * H)), ("db1", (1, 4 * H)),
        ("wfc",   (H, 1)),              ("bfc",   (1, 1)),
    ]
    keys = jax.random.split(key, len(names_shapes))
    return {name: jax.random.uniform(k, shape, jnp.float32, -bound, bound)
            for k, (name, shape) in zip(keys, names_shapes)}


def reference_forward(x, params, n_forecasts):
    """Pure-JAX f32 reference using the original (unfolded) PyTorch formulation."""
    B, T, I = x.shape
    H = params["ewhh0"].shape[0]
    P = jax.lax.Precision.HIGHEST

    def cell(xt, h, c, wih, whh, b):
        g = jnp.dot(xt, wih, precision=P) + jnp.dot(h, whh, precision=P) + b
        i = jax.nn.sigmoid(g[:, :H]); f = jax.nn.sigmoid(g[:, H:2 * H])
        gg = jnp.tanh(g[:, 2 * H:3 * H]); o = jax.nn.sigmoid(g[:, 3 * H:])
        c = f * c + i * gg
        return o * jnp.tanh(c), c

    h0 = c0 = h1 = c1 = jnp.zeros((B, H), jnp.float32)
    for t in range(T):
        h0, c0 = cell(x[:, t, :], h0, c0, params["ewih0"], params["ewhh0"], params["eb0"])
        h1, c1 = cell(h0, h1, c1, params["ewih1"], params["ewhh1"], params["eb1"])
    dec_in = x[:, -1, 0:1]
    outs = []
    for _ in range(n_forecasts):
        h0, c0 = cell(dec_in, h0, c0, params["dwih0"], params["dwhh0"], params["db0"])
        h1, c1 = cell(h0, h1, c1, params["dwih1"], params["dwhh1"], params["db1"])
        pred = jnp.dot(h1, params["wfc"], precision=P) + params["bfc"]
        outs.append(pred)
        dec_in = pred
    return jnp.stack(outs, axis=1)  # (B, NF, 1)


if __name__ == "__main__":
    B, T, I = 2, 8, 4          # batch, seq_len, input_size
    H = 32                     # hidden_size (small demo size)
    NF = 5                     # n_forecasts

    key = jax.random.PRNGKey(0)
    k_x, k_p = jax.random.split(key)
    x = jax.random.normal(k_x, (B, T, I), jnp.float32)
    params = init_params(k_p, I, H)

    ref = jax.block_until_ready(reference_forward(x, params, NF))

    # 1) Structural-exactness check: f32 MXU operands, tight tolerance.  Proves
    #    the restructuring (hoisting / FC folding / block-diag GEMM) is exact.
    prepped_f32 = prepare_inference_params(params, NF, compute_dtype=jnp.float32)
    out_f32 = jax.block_until_ready(lstm_multistep_forward(x, prepped_f32))
    assert out_f32.shape == (B, NF, 1), out_f32.shape
    assert jnp.allclose(out_f32, ref, atol=1e-3, rtol=1e-3), (
        f"f32 max abs err {float(jnp.max(jnp.abs(out_f32 - ref)))}")

    # 2) Performance path: bf16 MXU operands (single-pass MXU), f32 state math.
    #    Tolerance is deliberately loose to accommodate bf16 rounding across the
    #    13-step autoregressive chain.
    prepped_bf16 = prepare_inference_params(params, NF, compute_dtype=jnp.bfloat16)
    out = jax.block_until_ready(lstm_multistep_forward(x, prepped_bf16))
    assert out.shape == (B, NF, 1), out.shape
    assert jnp.allclose(out, ref, atol=5e-2, rtol=5e-2), (
        f"bf16 max abs err {float(jnp.max(jnp.abs(out - ref)))}")

    print("KERNEL_OK")
</pallas_src>

<mosaic_0001>
module attributes {stable_mosaic.version = 11 : i64} {
  func.func @seq2seq_lstm_kernel(%arg0: memref<64x4xf32, #tpu.memory_space<vmem>>, %arg1: memref<8x1xf32, #tpu.memory_space<vmem>>, %arg2: memref<4x128xf32, #tpu.memory_space<vmem>>, %arg3: memref<32x128xf32, #tpu.memory_space<vmem>>, %arg4: memref<1x128xf32, #tpu.memory_space<vmem>>, %arg5: memref<32x128xf32, #tpu.memory_space<vmem>>, %arg6: memref<32x128xf32, #tpu.memory_space<vmem>>, %arg7: memref<1x128xf32, #tpu.memory_space<vmem>>, %arg8: memref<1x128xf32, #tpu.memory_space<vmem>>, %arg9: memref<32x128xf32, #tpu.memory_space<vmem>>, %arg10: memref<1x128xf32, #tpu.memory_space<vmem>>, %arg11: memref<32x128xf32, #tpu.memory_space<vmem>>, %arg12: memref<1x128xf32, #tpu.memory_space<vmem>>, %arg13: memref<32x128xf32, #tpu.memory_space<vmem>>, %arg14: memref<32x128xf32, #tpu.memory_space<vmem>>, %arg15: memref<1x128xf32, #tpu.memory_space<vmem>>, %arg16: memref<160x5xf32, #tpu.memory_space<vmem>>, %arg17: memref<1x1xf32, #tpu.memory_space<vmem>>, %arg18: memref<8x5xf32, #tpu.memory_space<vmem>>) attributes {dimension_semantics = [], scalar_prefetch = 0 : i64, scratch_operands = 0 : i64, tpu.core_type = #tpu.core_type<tc>} {
    %c0 = arith.constant 0 : index
    %c0_0 = arith.constant 0 : index
    %0 = vector.load %arg3[%c0, %c0_0] : memref<32x128xf32, #tpu.memory_space<vmem>>, vector<32x128xf32>
    %c0_1 = arith.constant 0 : index
    %c0_2 = arith.constant 0 : index
    %1 = vector.load %arg5[%c0_1, %c0_2] : memref<32x128xf32, #tpu.memory_space<vmem>>, vector<32x128xf32>
    %c0_3 = arith.constant 0 : index
    %c0_4 = arith.constant 0 : index
    %2 = vector.load %arg6[%c0_3, %c0_4] : memref<32x128xf32, #tpu.memory_space<vmem>>, vector<32x128xf32>
    %c0_5 = arith.constant 0 : index
    %c0_6 = arith.constant 0 : index
    %3 = vector.load %arg9[%c0_5, %c0_6] : memref<32x128xf32, #tpu.memory_space<vmem>>, vector<32x128xf32>
    %c0_7 = arith.constant 0 : index
    %c0_8 = arith.constant 0 : index
    %4 = vector.load %arg11[%c0_7, %c0_8] : memref<32x128xf32, #tpu.memory_space<vmem>>, vector<32x128xf32>
    %c0_9 = arith.constant 0 : index
    %c0_10 = arith.constant 0 : index
    %5 = vector.load %arg13[%c0_9, %c0_10] : memref<32x128xf32, #tpu.memory_space<vmem>>, vector<32x128xf32>
    %c0_11 = arith.constant 0 : index
    %c0_12 = arith.constant 0 : index
    %6 = vector.load %arg14[%c0_11, %c0_12] : memref<32x128xf32, #tpu.memory_space<vmem>>, vector<32x128xf32>
    %c0_13 = arith.constant 0 : index
    %c0_14 = arith.constant 0 : index
    %7 = vector.load %arg7[%c0_13, %c0_14] : memref<1x128xf32, #tpu.memory_space<vmem>>, vector<1x128xf32>
    %8 = vector.shape_cast %7 : vector<1x128xf32> to vector<1x128xf32>
    %9 = vector.broadcast %8 : vector<1x128xf32> to vector<8x128xf32>
    %c0_15 = arith.constant 0 : index
    %c0_16 = arith.constant 0 : index
    %10 = vector.load %arg10[%c0_15, %c0_16] : memref<1x128xf32, #tpu.memory_space<vmem>>, vector<1x128xf32>
    %11 = vector.shape_cast %10 : vector<1x128xf32> to vector<1x128xf32>
    %12 = vector.broadcast %11 : vector<1x128xf32> to vector<8x128xf32>
    %c0_17 = arith.constant 0 : index
    %c0_18 = arith.constant 0 : index
    %13 = vector.load %arg12[%c0_17, %c0_18] : memref<1x128xf32, #tpu.memory_space<vmem>>, vector<1x128xf32>
    %14 = vector.shape_cast %13 : vector<1x128xf32> to vector<1x128xf32>
    %15 = vector.broadcast %14 : vector<1x128xf32> to vector<8x128xf32>
    %c0_19 = arith.constant 0 : index
    %c0_20 = arith.constant 0 : index
    %16 = vector.load %arg15[%c0_19, %c0_20] : memref<1x128xf32, #tpu.memory_space<vmem>>, vector<1x128xf32>
    %17 = vector.shape_cast %16 : vector<1x128xf32> to vector<1x128xf32>
    %18 = vector.broadcast %17 : vector<1x128xf32> to vector<8x128xf32>
    %c0_21 = arith.constant 0 : index
    %c0_22 = arith.constant 0 : index
    %19 = vector.load %arg0[%c0_21, %c0_22] : memref<64x4xf32, #tpu.memory_space<vmem>>, vector<64x4xf32>
    %c0_23 = arith.constant 0 : index
    %c0_24 = arith.constant 0 : index
    %20 = vector.load %arg2[%c0_23, %c0_24] : memref<4x128xf32, #tpu.memory_space<vmem>>, vector<4x128xf32>
    %cst = arith.constant dense<0.000000e+00> : vector<64x128xf32>
    %21 = tpu.matmul %19, %20, %cst {dimension_numbers = #tpu.dot_dimension_numbers<[1], [0], [0], [1], [0, 0, 1, 1], [], []>} : vector<64x4xf32>, vector<4x128xf32>, vector<64x128xf32> -> vector<64x128xf32>
    %c0_25 = arith.constant 0 : index
    %c0_26 = arith.constant 0 : index
    %22 = vector.load %arg4[%c0_25, %c0_26] : memref<1x128xf32, #tpu.memory_space<vmem>>, vector<1x128xf32>
    %23 = vector.broadcast %22 : vector<1x128xf32> to vector<64x128xf32>
    %24 = arith.addf %21, %23 : vector<64x128xf32>
    %cst_27 = arith.constant 0.000000e+00 : f32
    %25 = vector.broadcast %cst_27 : f32 to vector<8x32xf32>
    %26 = vector.extract_strided_slice %24 {offsets = [0, 0], sizes = [8, 128], strides = [1, 1]} : vector<64x128xf32> to vector<8x128xf32>
    %cst_28 = arith.constant dense<0.000000e+00> : vector<8x128xf32>
    %27 = tpu.matmul %25, %0, %cst_28 {dimension_numbers = #tpu.dot_dimension_numbers<[1], [0], [0], [1], [0, 0, 1, 1], [], []>} : vector<8x32xf32>, vector<32x128xf32>, vector<8x128xf32> -> vector<8x128xf32>
    %28 = arith.addf %26, %27 : vector<8x128xf32>
    %29 = arith.negf %28 : vector<8x128xf32>
    %30 = math.exp %29 : vector<8x128xf32>
    %cst_29 = arith.constant 1.000000e+00 : f32
    %31 = vector.broadcast %cst_29 : f32 to vector<8x128xf32>
    %32 = arith.addf %31, %30 : vector<8x128xf32>
    %33 = arith.divf %31, %32 : vector<8x128xf32>
    %34 = vector.extract_strided_slice %33 {offsets = [0, 0], sizes = [8, 32], strides = [1, 1]} : vector<8x128xf32> to vector<8x32xf32>
    %35 = vector.extract_strided_slice %33 {offsets = [0, 32], sizes = [8, 32], strides = [1, 1]} : vector<8x128xf32> to vector<8x32xf32>
    %36 = vector.extract_strided_slice %33 {offsets = [0, 96], sizes = [8, 32], strides = [1, 1]} : vector<8x128xf32> to vector<8x32xf32>
    %37 = vector.extract_strided_slice %28 {offsets = [0, 64], sizes = [8, 32], strides = [1, 1]} : vector<8x128xf32> to vector<8x32xf32>
    %38 = math.tanh %37 : vector<8x32xf32>
    %39 = arith.mulf %35, %25 : vector<8x32xf32>
    %40 = arith.mulf %34, %38 : vector<8x32xf32>
    %41 = arith.addf %39, %40 : vector<8x32xf32>
    %42 = math.tanh %41 : vector<8x32xf32>
    %43 = arith.mulf %36, %42 : vector<8x32xf32>
    %cst_30 = arith.constant dense<0.000000e+00> : vector<8x128xf32>
    %44 = tpu.matmul %43, %1, %cst_30 {dimension_numbers = #tpu.dot_dimension_numbers<[1], [0], [0], [1], [0, 0, 1, 1], [], []>} : vector<8x32xf32>, vector<32x128xf32>, vector<8x128xf32> -> vector<8x128xf32>
    %cst_31 = arith.constant dense<0.000000e+00> : vector<8x128xf32>
    %45 = tpu.matmul %25, %2, %cst_31 {dimension_numbers = #tpu.dot_dimension_numbers<[1], [0], [0], [1], [0, 0, 1, 1], [], []>} : vector<8x32xf32>, vector<32x128xf32>, vector<8x128xf32> -> vector<8x128xf32>
    %46 = arith.addf %44, %45 : vector<8x128xf32>
    %47 = arith.addf %46, %9 : vector<8x128xf32>
    %48 = arith.negf %47 : vector<8x128xf32>
    %49 = math.exp %48 : vector<8x128xf32>
    %cst_32 = arith.constant 1.000000e+00 : f32
    %50 = vector.broadcast %cst_32 : f32 to vector<8x128xf32>
    %51 = arith.addf %50, %49 : vector<8x128xf32>
    %52 = arith.divf %50, %51 : vector<8x128xf32>
    %53 = vector.extract_strided_slice %52 {offsets = [0, 0], sizes = [8, 32], strides = [1, 1]} : vector<8x128xf32> to vector<8x32xf32>
    %54 = vector.extract_strided_slice %52 {offsets = [0, 32], sizes = [8, 32], strides = [1, 1]} : vector<8x128xf32> to vector<8x32xf32>
    %55 = vector.extract_strided_slice %52 {offsets = [0, 96], sizes = [8, 32], strides = [1, 1]} : vector<8x128xf32> to vector<8x32xf32>
    %56 = vector.extract_strided_slice %47 {offsets = [0, 64], sizes = [8, 32], strides = [1, 1]} : vector<8x128xf32> to vector<8x32xf32>
    %57 = math.tanh %56 : vector<8x32xf32>
    %58 = arith.mulf %54, %25 : vector<8x32xf32>
    %59 = arith.mulf %53, %57 : vector<8x32xf32>
    %60 = arith.addf %58, %59 : vector<8x32xf32>
    %61 = math.tanh %60 : vector<8x32xf32>
    %62 = arith.mulf %55, %61 : vector<8x32xf32>
    %63 = vector.extract_strided_slice %24 {offsets = [8, 0], sizes = [8, 128], strides = [1, 1]} : vector<64x128xf32> to vector<8x128xf32>
    %cst_33 = arith.constant dense<0.000000e+00> : vector<8x128xf32>
    %64 = tpu.matmul %43, %0, %cst_33 {dimension_numbers = #tpu.dot_dimension_numbers<[1], [0], [0], [1], [0, 0, 1, 1], [], []>} : vector<8x32xf32>, vector<32x128xf32>, vector<8x128xf32> -> vector<8x128xf32>
    %65 = arith.addf %63, %64 : vector<8x128xf32>
    %66 = arith.negf %65 : vector<8x128xf32>
    %67 = math.exp %66 : vector<8x128xf32>
    %cst_34 = arith.constant 1.000000e+00 : f32
    %68 = vector.broadcast %cst_34 : f32 to vector<8x128xf32>
    %69 = arith.addf %68, %67 : vector<8x128xf32>
    %70 = arith.divf %68, %69 : vector<8x128xf32>
    %71 = vector.extract_strided_slice %70 {offsets = [0, 0], sizes = [8, 32], strides = [1, 1]} : vector<8x128xf32> to vector<8x32xf32>
    %72 = vector.extract_strided_slice %70 {offsets = [0, 32], sizes = [8, 32], strides = [1, 1]} : vector<8x128xf32> to vector<8x32xf32>
    %73 = vector.extract_strided_slice %70 {offsets = [0, 96], sizes = [8, 32], strides = [1, 1]} : vector<8x128xf32> to vector<8x32xf32>
    %74 = vector.extract_strided_slice %65 {offsets = [0, 64], sizes = [8, 32], strides = [1, 1]} : vector<8x128xf32> to vector<8x32xf32>
    %75 = math.tanh %74 : vector<8x32xf32>
    %76 = arith.mulf %72, %41 : vector<8x32xf32>
    %77 = arith.mulf %71, %75 : vector<8x32xf32>
    %78 = arith.addf %76, %77 : vector<8x32xf32>
    %79 = math.tanh %78 : vector<8x32xf32>
    %80 = arith.mulf %73, %79 : vector<8x32xf32>
    %cst_35 = arith.constant dense<0.000000e+00> : vector<8x128xf32>
    %81 = tpu.matmul %80, %1, %cst_35 {dimension_numbers = #tpu.dot_dimension_numbers<[1], [0], [0], [1], [0, 0, 1, 1], [], []>} : vector<8x32xf32>, vector<32x128xf32>, vector<8x128xf32> -> vector<8x128xf32>
    %cst_36 = arith.constant dense<0.000000e+00> : vector<8x128xf32>
    %82 = tpu.matmul %62, %2, %cst_36 {dimension_numbers = #tpu.dot_dimension_numbers<[1], [0], [0], [1], [0, 0, 1, 1], [], []>} : vector<8x32xf32>, vector<32x128xf32>, vector<8x128xf32> -> vector<8x128xf32>
    %83 = arith.addf %81, %82 : vector<8x128xf32>
    %84 = arith.addf %83, %9 : vector<8x128xf32>
    %85 = arith.negf %84 : vector<8x128xf32>
    %86 = math.exp %85 : vector<8x128xf32>
    %cst_37 = arith.constant 1.000000e+00 : f32
    %87 = vector.broadcast %cst_37 : f32 to vector<8x128xf32>
    %88 = arith.addf %87, %86 : vector<8x128xf32>
    %89 = arith.divf %87, %88 : vector<8x128xf32>
    %90 = vector.extract_strided_slice %89 {offsets = [0, 0], sizes = [8, 32], strides = [1, 1]} : vector<8x128xf32> to vector<8x32xf32>
    %91 = vector.extract_strided_slice %89 {offsets = [0, 32], sizes = [8, 32], strides = [1, 1]} : vector<8x128xf32> to vector<8x32xf32>
    %92 = vector.extract_strided_slice %89 {offsets = [0, 96], sizes = [8, 32], strides = [1, 1]} : vector<8x128xf32> to vector<8x32xf32>
    %93 = vector.extract_strided_slice %84 {offsets = [0, 64], sizes = [8, 32], strides = [1, 1]} : vector<8x128xf32> to vector<8x32xf32>
    %94 = math.tanh %93 : vector<8x32xf32>
    %95 = arith.mulf %91, %60 : vector<8x32xf32>
    %96 = arith.mulf %90, %94 : vector<8x32xf32>
    %97 = arith.addf %95, %96 : vector<8x32xf32>
    %98 = math.tanh %97 : vector<8x32xf32>
    %99 = arith.mulf %92, %98 : vector<8x32xf32>
    %100 = vector.extract_strided_slice %24 {offsets = [16, 0], sizes = [8, 128], strides = [1, 1]} : vector<64x128xf32> to vector<8x128xf32>
    %cst_38 = arith.constant dense<0.000000e+00> : vector<8x128xf32>
    %101 = tpu.matmul %80, %0, %cst_38 {dimension_numbers = #tpu.dot_dimension_numbers<[1], [0], [0], [1], [0, 0, 1, 1], [], []>} : vector<8x32xf32>, vector<32x128xf32>, vector<8x128xf32> -> vector<8x128xf32>
    %102 = arith.addf %100, %101 : vector<8x128xf32>
    %103 = arith.negf %102 : vector<8x128xf32>
    %104 = math.exp %103 : vector<8x128xf32>
    %cst_39 = arith.constant 1.000000e+00 : f32
    %105 = vector.broadcast %cst_39 : f32 to vector<8x128xf32>
    %106 = arith.addf %105, %104 : vector<8x128xf32>
    %107 = arith.divf %105, %106 : vector<8x128xf32>
    %108 = vector.extract_strided_slice %107 {offsets = [0, 0], sizes = [8, 32], strides = [1, 1]} : vector<8x128xf32> to vector<8x32xf32>
    %109 = vector.extract_strided_slice %107 {offsets = [0, 32], sizes = [8, 32], strides = [1, 1]} : vector<8x128xf32> to vector<8x32xf32>
    %110 = vector.extract_strided_slice %107 {offsets = [0, 96], sizes = [8, 32], strides = [1, 1]} : vector<8x128xf32> to vector<8x32xf32>
    %111 = vector.extract_strided_slice %102 {offsets = [0, 64], sizes = [8, 32], strides = [1, 1]} : vector<8x128xf32> to vector<8x32xf32>
    %112 = math.tanh %111 : vector<8x32xf32>
    %113 = arith.mulf %109, %78 : vector<8x32xf32>
    %114 = arith.mulf %108, %112 : vector<8x32xf32>
    %115 = arith.addf %113, %114 : vector<8x32xf32>
    %116 = math.tanh %115 : vector<8x32xf32>
    %117 = arith.mulf %110, %116 : vector<8x32xf32>
    %cst_40 = arith.constant dense<0.000000e+00> : vector<8x128xf32>
    %118 = tpu.matmul %117, %1, %cst_40 {dimension_numbers = #tpu.dot_dimension_numbers<[1], [0], [0], [1], [0, 0, 1, 1], [], []>} : vector<8x32xf32>, vector<32x128xf32>, vector<8x128xf32> -> vector<8x128xf32>
    %cst_41 = arith.constant dense<0.000000e+00> : vector<8x128xf32>
    %119 = tpu.matmul %99, %2, %cst_41 {dimension_numbers = #tpu.dot_dimension_numbers<[1], [0], [0], [1], [0, 0, 1, 1], [], []>} : vector<8x32xf32>, vector<32x128xf32>, vector<8x128xf32> -> vector<8x128xf32>
    %120 = arith.addf %118, %119 : vector<8x128xf32>
    %121 = arith.addf %120, %9 : vector<8x128xf32>
    %122 = arith.negf %121 : vector<8x128xf32>
    %123 = math.exp %122 : vector<8x128xf32>
    %cst_42 = arith.constant 1.000000e+00 : f32
    %124 = vector.broadcast %cst_42 : f32 to vector<8x128xf32>
    %125 = arith.addf %124, %123 : vector<8x128xf32>
    %126 = arith.divf %124, %125 : vector<8x128xf32>
    %127 = vector.extract_strided_slice %126 {offsets = [0, 0], sizes = [8, 32], strides = [1, 1]} : vector<8x128xf32> to vector<8x32xf32>
    %128 = vector.extract_strided_slice %126 {offsets = [0, 32], sizes = [8, 32], strides = [1, 1]} : vector<8x128xf32> to vector<8x32xf32>
    %129 = vector.extract_strided_slice %126 {offsets = [0, 96], sizes = [8, 32], strides = [1, 1]} : vector<8x128xf32> to vector<8x32xf32>
    %130 = vector.extract_strided_slice %121 {offsets = [0, 64], sizes = [8, 32], strides = [1, 1]} : vector<8x128xf32> to vector<8x32xf32>
    %131 = math.tanh %130 : vector<8x32xf32>
    %132 = arith.mulf %128, %97 : vector<8x32xf32>
    %133 = arith.mulf %127, %131 : vector<8x32xf32>
    %134 = arith.addf %132, %133 : vector<8x32xf32>
    %135 = math.tanh %134 : vector<8x32xf32>
    %136 = arith.mulf %129, %135 : vector<8x32xf32>
    %137 = vector.extract_strided_slice %24 {offsets = [24, 0], sizes = [8, 128], strides = [1, 1]} : vector<64x128xf32> to vector<8x128xf32>
    %cst_43 = arith.constant dense<0.000000e+00> : vector<8x128xf32>
    %138 = tpu.matmul %117, %0, %cst_43 {dimension_numbers = #tpu.dot_dimension_numbers<[1], [0], [0], [1], [0, 0, 1, 1], [], []>} : vector<8x32xf32>, vector<32x128xf32>, vector<8x128xf32> -> vector<8x128xf32>
    %139 = arith.addf %137, %138 : vector<8x128xf32>
    %140 = arith.negf %139 : vector<8x128xf32>
    %141 = math.exp %140 : vector<8x128xf32>
    %cst_44 = arith.constant 1.000000e+00 : f32
    %142 = vector.broadcast %cst_44 : f32 to vector<8x128xf32>
    %143 = arith.addf %142, %141 : vector<8x128xf32>
    %144 = arith.divf %142, %143 : vector<8x128xf32>
    %145 = vector.extract_strided_slice %144 {offsets = [0, 0], sizes = [8, 32], strides = [1, 1]} : vector<8x128xf32> to vector<8x32xf32>
    %146 = vector.extract_strided_slice %144 {offsets = [0, 32], sizes = [8, 32], strides = [1, 1]} : vector<8x128xf32> to vector<8x32xf32>
    %147 = vector.extract_strided_slice %144 {offsets = [0, 96], sizes = [8, 32], strides = [1, 1]} : vector<8x128xf32> to vector<8x32xf32>
    %148 = vector.extract_strided_slice %139 {offsets = [0, 64], sizes = [8, 32], strides = [1, 1]} : vector<8x128xf32> to vector<8x32xf32>
    %149 = math.tanh %148 : vector<8x32xf32>
    %150 = arith.mulf %146, %115 : vector<8x32xf32>
    %151 = arith.mulf %145, %149 : vector<8x32xf32>
    %152 = arith.addf %150, %151 : vector<8x32xf32>
    %153 = math.tanh %152 : vector<8x32xf32>
    %154 = arith.mulf %147, %153 : vector<8x32xf32>
    %cst_45 = arith.constant dense<0.000000e+00> : vector<8x128xf32>
    %155 = tpu.matmul %154, %1, %cst_45 {dimension_numbers = #tpu.dot_dimension_numbers<[1], [0], [0], [1], [0, 0, 1, 1], [], []>} : vector<8x32xf32>, vector<32x128xf32>, vector<8x128xf32> -> vector<8x128xf32>
    %cst_46 = arith.constant dense<0.000000e+00> : vector<8x128xf32>
    %156 = tpu.matmul %136, %2, %cst_46 {dimension_numbers = #tpu.dot_dimension_numbers<[1], [0], [0], [1], [0, 0, 1, 1], [], []>} : vector<8x32xf32>, vector<32x128xf32>, vector<8x128xf32> -> vector<8x128xf32>
    %157 = arith.addf %155, %156 : vector<8x128xf32>
    %158 = arith.addf %157, %9 : vector<8x128xf32>
    %159 = arith.negf %158 : vector<8x128xf32>
    %160 = math.exp %159 : vector<8x128xf32>
    %cst_47 = arith.constant 1.000000e+00 : f32
    %161 = vector.broadcast %cst_47 : f32 to vector<8x128xf32>
    %162 = arith.addf %161, %160 : vector<8x128xf32>
    %163 = arith.divf %161, %162 : vector<8x128xf32>
    %164 = vector.extract_strided_slice %163 {offsets = [0, 0], sizes = [8, 32], strides = [1, 1]} : vector<8x128xf32> to vector<8x32xf32>
    %165 = vector.extract_strided_slice %163 {offsets = [0, 32], sizes = [8, 32], strides = [1, 1]} : vector<8x128xf32> to vector<8x32xf32>
    %166 = vector.extract_strided_slice %163 {offsets = [0, 96], sizes = [8, 32], strides = [1, 1]} : vector<8x128xf32> to vector<8x32xf32>
    %167 = vector.extract_strided_slice %158 {offsets = [0, 64], sizes = [8, 32], strides = [1, 1]} : vector<8x128xf32> to vector<8x32xf32>
    %168 = math.tanh %167 : vector<8x32xf32>
    %169 = arith.mulf %165, %134 : vector<8x32xf32>
    %170 = arith.mulf %164, %168 : vector<8x32xf32>
    %171 = arith.addf %169, %170 : vector<8x32xf32>
    %172 = math.tanh %171 : vector<8x32xf32>
    %173 = arith.mulf %166, %172 : vector<8x32xf32>
    %174 = vector.extract_strided_slice %24 {offsets = [32, 0], sizes = [8, 128], strides = [1, 1]} : vector<64x128xf32> to vector<8x128xf32>
    %cst_48 = arith.constant dense<0.000000e+00> : vector<8x128xf32>
    %175 = tpu.matmul %154, %0, %cst_48 {dimension_numbers = #tpu.dot_dimension_numbers<[1], [0], [0], [1], [0, 0, 1, 1], [], []>} : vector<8x32xf32>, vector<32x128xf32>, vector<8x128xf32> -> vector<8x128xf32>
    %176 = arith.addf %174, %175 : vector<8x128xf32>
    %177 = arith.negf %176 : vector<8x128xf32>
    %178 = math.exp %177 : vector<8x128xf32>
    %cst_49 = arith.constant 1.000000e+00 : f32
    %179 = vector.broadcast %cst_49 : f32 to vector<8x128xf32>
    %180 = arith.addf %179, %178 : vector<8x128xf32>
    %181 = arith.divf %179, %180 : vector<8x128xf32>
    %182 = vector.extract_strided_slice %181 {offsets = [0, 0], sizes = [8, 32], strides = [1, 1]} : vector<8x128xf32> to vector<8x32xf32>
    %183 = vector.extract_strided_slice %181 {offsets = [0, 32], sizes = [8, 32], strides = [1, 1]} : vector<8x128xf32> to vector<8x32xf32>
    %184 = vector.extract_strided_slice %181 {offsets = [0, 96], sizes = [8, 32], strides = [1, 1]} : vector<8x128xf32> to vector<8x32xf32>
    %185 = vector.extract_strided_slice %176 {offsets = [0, 64], sizes = [8, 32], strides = [1, 1]} : vector<8x128xf32> to vector<8x32xf32>
    %186 = math.tanh %185 : vector<8x32xf32>
    %187 = arith.mulf %183, %152 : vector<8x32xf32>
    %188 = arith.mulf %182, %186 : vector<8x32xf32>
    %189 = arith.addf %187, %188 : vector<8x32xf32>
    %190 = math.tanh %189 : vector<8x32xf32>
    %191 = arith.mulf %184, %190 : vector<8x32xf32>
    %cst_50 = arith.constant dense<0.000000e+00> : vector<8x128xf32>
    %192 = tpu.matmul %191, %1, %cst_50 {dimension_numbers = #tpu.dot_dimension_numbers<[1], [0], [0], [1], [0, 0, 1, 1], [], []>} : vector<8x32xf32>, vector<32x128xf32>, vector<8x128xf32> -> vector<8x128xf32>
    %cst_51 = arith.constant dense<0.000000e+00> : vector<8x128xf32>
    %193 = tpu.matmul %173, %2, %cst_51 {dimension_numbers = #tpu.dot_dimension_numbers<[1], [0], [0], [1], [0, 0, 1, 1], [], []>} : vector<8x32xf32>, vector<32x128xf32>, vector<8x128xf32> -> vector<8x128xf32>
    %194 = arith.addf %192, %193 : vector<8x128xf32>
    %195 = arith.addf %194, %9 : vector<8x128xf32>
    %196 = arith.negf %195 : vector<8x128xf32>
    %197 = math.exp %196 : vector<8x128xf32>
    %cst_52 = arith.constant 1.000000e+00 : f32
    %198 = vector.broadcast %cst_52 : f32 to vector<8x128xf32>
    %199 = arith.addf %198, %197 : vector<8x128xf32>
    %200 = arith.divf %198, %199 : vector<8x128xf32>
    %201 = vector.extract_strided_slice %200 {offsets = [0, 0], sizes = [8, 32], strides = [1, 1]} : vector<8x128xf32> to vector<8x32xf32>
    %202 = vector.extract_strided_slice %200 {offsets = [0, 32], sizes = [8, 32], strides = [1, 1]} : vector<8x128xf32> to vector<8x32xf32>
    %203 = vector.extract_strided_slice %200 {offsets = [0, 96], sizes = [8, 32], strides = [1, 1]} : vector<8x128xf32> to vector<8x32xf32>
    %204 = vector.extract_strided_slice %195 {offsets = [0, 64], sizes = [8, 32], strides = [1, 1]} : vector<8x128xf32> to vector<8x32xf32>
    %205 = math.tanh %204 : vector<8x32xf32>
    %206 = arith.mulf %202, %171 : vector<8x32xf32>
    %207 = arith.mulf %201, %205 : vector<8x32xf32>
    %208 = arith.addf %206, %207 : vector<8x32xf32>
    %209 = math.tanh %208 : vector<8x32xf32>
    %210 = arith.mulf %203, %209 : vector<8x32xf32>
    %211 = vector.extract_strided_slice %24 {offsets = [40, 0], sizes = [8, 128], strides = [1, 1]} : vector<64x128xf32> to vector<8x128xf32>
    %cst_53 = arith.constant dense<0.000000e+00> : vector<8x128xf32>
    %212 = tpu.matmul %191, %0, %cst_53 {dimension_numbers = #tpu.dot_dimension_numbers<[1], [0], [0], [1], [0, 0, 1, 1], [], []>} : vector<8x32xf32>, vector<32x128xf32>, vector<8x128xf32> -> vector<8x128xf32>
    %213 = arith.addf %211, %212 : vector<8x128xf32>
    %214 = arith.negf %213 : vector<8x128xf32>
    %215 = math.exp %214 : vector<8x128xf32>
    %cst_54 = arith.constant 1.000000e+00 : f32
    %216 = vector.broadcast %cst_54 : f32 to vector<8x128xf32>
    %217 = arith.addf %216, %215 : vector<8x128xf32>
    %218 = arith.divf %216, %217 : vector<8x128xf32>
    %219 = vector.extract_strided_slice %218 {offsets = [0, 0], sizes = [8, 32], strides = [1, 1]} : vector<8x128xf32> to vector<8x32xf32>
    %220 = vector.extract_strided_slice %218 {offsets = [0, 32], sizes = [8, 32], strides = [1, 1]} : vector<8x128xf32> to vector<8x32xf32>
    %221 = vector.extract_strided_slice %218 {offsets = [0, 96], sizes = [8, 32], strides = [1, 1]} : vector<8x128xf32> to vector<8x32xf32>
    %222 = vector.extract_strided_slice %213 {offsets = [0, 64], sizes = [8, 32], strides = [1, 1]} : vector<8x128xf32> to vector<8x32xf32>
    %223 = math.tanh %222 : vector<8x32xf32>
    %224 = arith.mulf %220, %189 : vector<8x32xf32>
    %225 = arith.mulf %219, %223 : vector<8x32xf32>
    %226 = arith.addf %224, %225 : vector<8x32xf32>
    %227 = math.tanh %226 : vector<8x32xf32>
    %228 = arith.mulf %221, %227 : vector<8x32xf32>
    %cst_55 = arith.constant dense<0.000000e+00> : vector<8x128xf32>
    %229 = tpu.matmul %228, %1, %cst_55 {dimension_numbers = #tpu.dot_dimension_numbers<[1], [0], [0], [1], [0, 0, 1, 1], [], []>} : vector<8x32xf32>, vector<32x128xf32>, vector<8x128xf32> -> vector<8x128xf32>
    %cst_56 = arith.constant dense<0.000000e+00> : vector<8x128xf32>
    %230 = tpu.matmul %210, %2, %cst_56 {dimension_numbers = #tpu.dot_dimension_numbers<[1], [0], [0], [1], [0, 0, 1, 1], [], []>} : vector<8x32xf32>, vector<32x128xf32>, vector<8x128xf32> -> vector<8x128xf32>
    %231 = arith.addf %229, %230 : vector<8x128xf32>
    %232 = arith.addf %231, %9 : vector<8x128xf32>
    %233 = arith.negf %232 : vector<8x128xf32>
    %234 = math.exp %233 : vector<8x128xf32>
    %cst_57 = arith.constant 1.000000e+00 : f32
    %235 = vector.broadcast %cst_57 : f32 to vector<8x128xf32>
    %236 = arith.addf %235, %234 : vector<8x128xf32>
    %237 = arith.divf %235, %236 : vector<8x128xf32>
    %238 = vector.extract_strided_slice %237 {offsets = [0, 0], sizes = [8, 32], strides = [1, 1]} : vector<8x128xf32> to vector<8x32xf32>
    %239 = vector.extract_strided_slice %237 {offsets = [0, 32], sizes = [8, 32], strides = [1, 1]} : vector<8x128xf32> to vector<8x32xf32>
    %240 = vector.extract_strided_slice %237 {offsets = [0, 96], sizes = [8, 32], strides = [1, 1]} : vector<8x128xf32> to vector<8x32xf32>
    %241 = vector.extract_strided_slice %232 {offsets = [0, 64], sizes = [8, 32], strides = [1, 1]} : vector<8x128xf32> to vector<8x32xf32>
    %242 = math.tanh %241 : vector<8x32xf32>
    %243 = arith.mulf %239, %208 : vector<8x32xf32>
    %244 = arith.mulf %238, %242 : vector<8x32xf32>
    %245 = arith.addf %243, %244 : vector<8x32xf32>
    %246 = math.tanh %245 : vector<8x32xf32>
    %247 = arith.mulf %240, %246 : vector<8x32xf32>
    %248 = vector.extract_strided_slice %24 {offsets = [48, 0], sizes = [8, 128], strides = [1, 1]} : vector<64x128xf32> to vector<8x128xf32>
    %cst_58 = arith.constant dense<0.000000e+00> : vector<8x128xf32>
    %249 = tpu.matmul %228, %0, %cst_58 {dimension_numbers = #tpu.dot_dimension_numbers<[1], [0], [0], [1], [0, 0, 1, 1], [], []>} : vector<8x32xf32>, vector<32x128xf32>, vector<8x128xf32> -> vector<8x128xf32>
    %250 = arith.addf %248, %249 : vector<8x128xf32>
    %251 = arith.negf %250 : vector<8x128xf32>
    %252 = math.exp %251 : vector<8x128xf32>
    %cst_59 = arith.constant 1.000000e+00 : f32
    %253 = vector.broadcast %cst_59 : f32 to vector<8x128xf32>
    %254 = arith.addf %253, %252 : vector<8x128xf32>
    %255 = arith.divf %253, %254 : vector<8x128xf32>
    %256 = vector.extract_strided_slice %255 {offsets = [0, 0], sizes = [8, 32], strides = [1, 1]} : vector<8x128xf32> to vector<8x32xf32>
    %257 = vector.extract_strided_slice %255 {offsets = [0, 32], sizes = [8, 32], strides = [1, 1]} : vector<8x128xf32> to vector<8x32xf32>
    %258 = vector.extract_strided_slice %255 {offsets = [0, 96], sizes = [8, 32], strides = [1, 1]} : vector<8x128xf32> to vector<8x32xf32>
    %259 = vector.extract_strided_slice %250 {offsets = [0, 64], sizes = [8, 32], strides = [1, 1]} : vector<8x128xf32> to vector<8x32xf32>
    %260 = math.tanh %259 : vector<8x32xf32>
    %261 = arith.mulf %257, %226 : vector<8x32xf32>
    %262 = arith.mulf %256, %260 : vector<8x32xf32>
    %263 = arith.addf %261, %262 : vector<8x32xf32>
    %264 = math.tanh %263 : vector<8x32xf32>
    %265 = arith.mulf %258, %264 : vector<8x32xf32>
    %cst_60 = arith.constant dense<0.000000e+00> : vector<8x128xf32>
    %266 = tpu.matmul %265, %1, %cst_60 {dimension_numbers = #tpu.dot_dimension_numbers<[1], [0], [0], [1], [0, 0, 1, 1], [], []>} : vector<8x32xf32>, vector<32x128xf32>, vector<8x128xf32> -> vector<8x128xf32>
    %cst_61 = arith.constant dense<0.000000e+00> : vector<8x128xf32>
    %267 = tpu.matmul %247, %2, %cst_61 {dimension_numbers = #tpu.dot_dimension_numbers<[1], [0], [0], [1], [0, 0, 1, 1], [], []>} : vector<8x32xf32>, vector<32x128xf32>, vector<8x128xf32> -> vector<8x128xf32>
    %268 = arith.addf %266, %267 : vector<8x128xf32>
    %269 = arith.addf %268, %9 : vector<8x128xf32>
    %270 = arith.negf %269 : vector<8x128xf32>
    %271 = math.exp %270 : vector<8x128xf32>
    %cst_62 = arith.constant 1.000000e+00 : f32
    %272 = vector.broadcast %cst_62 : f32 to vector<8x128xf32>
    %273 = arith.addf %272, %271 : vector<8x128xf32>
    %274 = arith.divf %272, %273 : vector<8x128xf32>
    %275 = vector.extract_strided_slice %274 {offsets = [0, 0], sizes = [8, 32], strides = [1, 1]} : vector<8x128xf32> to vector<8x32xf32>
    %276 = vector.extract_strided_slice %274 {offsets = [0, 32], sizes = [8, 32], strides = [1, 1]} : vector<8x128xf32> to vector<8x32xf32>
    %277 = vector.extract_strided_slice %274 {offsets = [0, 96], sizes = [8, 32], strides = [1, 1]} : vector<8x128xf32> to vector<8x32xf32>
    %278 = vector.extract_strided_slice %269 {offsets = [0, 64], sizes = [8, 32], strides = [1, 1]} : vector<8x128xf32> to vector<8x32xf32>
    %279 = math.tanh %278 : vector<8x32xf32>
    %280 = arith.mulf %276, %245 : vector<8x32xf32>
    %281 = arith.mulf %275, %279 : vector<8x32xf32>
    %282 = arith.addf %280, %281 : vector<8x32xf32>
    %283 = math.tanh %282 : vector<8x32xf32>
    %284 = arith.mulf %277, %283 : vector<8x32xf32>
    %285 = vector.extract_strided_slice %24 {offsets = [56, 0], sizes = [8, 128], strides = [1, 1]} : vector<64x128xf32> to vector<8x128xf32>
    %cst_63 = arith.constant dense<0.000000e+00> : vector<8x128xf32>
    %286 = tpu.matmul %265, %0, %cst_63 {dimension_numbers = #tpu.dot_dimension_numbers<[1], [0], [0], [1], [0, 0, 1, 1], [], []>} : vector<8x32xf32>, vector<32x128xf32>, vector<8x128xf32> -> vector<8x128xf32>
    %287 = arith.addf %285, %286 : vector<8x128xf32>
    %288 = arith.negf %287 : vector<8x128xf32>
    %289 = math.exp %288 : vector<8x128xf32>
    %cst_64 = arith.constant 1.000000e+00 : f32
    %290 = vector.broadcast %cst_64 : f32 to vector<8x128xf32>
    %291 = arith.addf %290, %289 : vector<8x128xf32>
    %292 = arith.divf %290, %291 : vector<8x128xf32>
    %293 = vector.extract_strided_slice %292 {offsets = [0, 0], sizes = [8, 32], strides = [1, 1]} : vector<8x128xf32> to vector<8x32xf32>
    %294 = vector.extract_strided_slice %292 {offsets = [0, 32], sizes = [8, 32], strides = [1, 1]} : vector<8x128xf32> to vector<8x32xf32>
    %295 = vector.extract_strided_slice %292 {offsets = [0, 96], sizes = [8, 32], strides = [1, 1]} : vector<8x128xf32> to vector<8x32xf32>
    %296 = vector.extract_strided_slice %287 {offsets = [0, 64], sizes = [8, 32], strides = [1, 1]} : vector<8x128xf32> to vector<8x32xf32>
    %297 = math.tanh %296 : vector<8x32xf32>
    %298 = arith.mulf %294, %263 : vector<8x32xf32>
    %299 = arith.mulf %293, %297 : vector<8x32xf32>
    %300 = arith.addf %298, %299 : vector<8x32xf32>
    %301 = math.tanh %300 : vector<8x32xf32>
    %302 = arith.mulf %295, %301 : vector<8x32xf32>
    %cst_65 = arith.constant dense<0.000000e+00> : vector<8x128xf32>
    %303 = tpu.matmul %302, %1, %cst_65 {dimension_numbers = #tpu.dot_dimension_numbers<[1], [0], [0], [1], [0, 0, 1, 1], [], []>} : vector<8x32xf32>, vector<32x128xf32>, vector<8x128xf32> -> vector<8x128xf32>
    %cst_66 = arith.constant dense<0.000000e+00> : vector<8x128xf32>
    %304 = tpu.matmul %284, %2, %cst_66 {dimension_numbers = #tpu.dot_dimension_numbers<[1], [0], [0], [1], [0, 0, 1, 1], [], []>} : vector<8x32xf32>, vector<32x128xf32>, vector<8x128xf32> -> vector<8x128xf32>
    %305 = arith.addf %303, %304 : vector<8x128xf32>
    %306 = arith.addf %305, %9 : vector<8x128xf32>
    %307 = arith.negf %306 : vector<8x128xf32>
    %308 = math.exp %307 : vector<8x128xf32>
    %cst_67 = arith.constant 1.000000e+00 : f32
    %309 = vector.broadcast %cst_67 : f32 to vector<8x128xf32>
    %310 = arith.addf %309, %308 : vector<8x128xf32>
    %311 = arith.divf %309, %310 : vector<8x128xf32>
    %312 = vector.extract_strided_slice %311 {offsets = [0, 0], sizes = [8, 32], strides = [1, 1]} : vector<8x128xf32> to vector<8x32xf32>
    %313 = vector.extract_strided_slice %311 {offsets = [0, 32], sizes = [8, 32], strides = [1, 1]} : vector<8x128xf32> to vector<8x32xf32>
    %314 = vector.extract_strided_slice %311 {offsets = [0, 96], sizes = [8, 32], strides = [1, 1]} : vector<8x128xf32> to vector<8x32xf32>
    %315 = vector.extract_strided_slice %306 {offsets = [0, 64], sizes = [8, 32], strides = [1, 1]} : vector<8x128xf32> to vector<8x32xf32>
    %316 = math.tanh %315 : vector<8x32xf32>
    %317 = arith.mulf %313, %282 : vector<8x32xf32>
    %318 = arith.mulf %312, %316 : vector<8x32xf32>
    %319 = arith.addf %317, %318 : vector<8x32xf32>
    %320 = math.tanh %319 : vector<8x32xf32>
    %321 = arith.mulf %314, %320 : vector<8x32xf32>
    %c0_68 = arith.constant 0 : index
    %c0_69 = arith.constant 0 : index
    %322 = vector.load %arg1[%c0_68, %c0_69] : memref<8x1xf32, #tpu.memory_space<vmem>>, vector<8x1xf32>
    %c0_70 = arith.constant 0 : index
    %c0_71 = arith.constant 0 : index
    %323 = vector.load %arg8[%c0_70, %c0_71] : memref<1x128xf32, #tpu.memory_space<vmem>>, vector<1x128xf32>
    %324 = vector.broadcast %322 : vector<8x1xf32> to vector<8x128xf32>
    %325 = vector.broadcast %323 : vector<1x128xf32> to vector<8x128xf32>
    %326 = arith.mulf %324, %325 : vector<8x128xf32>
    %cst_72 = arith.constant dense<0.000000e+00> : vector<8x128xf32>
    %327 = tpu.matmul %302, %3, %cst_72 {dimension_numbers = #tpu.dot_dimension_numbers<[1], [0], [0], [1], [0, 0, 1, 1], [], []>} : vector<8x32xf32>, vector<32x128xf32>, vector<8x128xf32> -> vector<8x128xf32>
    %328 = arith.addf %326, %327 : vector<8x128xf32>
    %329 = arith.addf %328, %12 : vector<8x128xf32>
    %330 = arith.negf %329 : vector<8x128xf32>
    %331 = math.exp %330 : vector<8x128xf32>
    %cst_73 = arith.constant 1.000000e+00 : f32
    %332 = vector.broadcast %cst_73 : f32 to vector<8x128xf32>
    %333 = arith.addf %332, %331 : vector<8x128xf32>
    %334 = arith.divf %332, %333 : vector<8x128xf32>
    %335 = vector.extract_strided_slice %334 {offsets = [0, 0], sizes = [8, 32], strides = [1, 1]} : vector<8x128xf32> to vector<8x32xf32>
    %336 = vector.extract_strided_slice %334 {offsets = [0, 32], sizes = [8, 32], strides = [1, 1]} : vector<8x128xf32> to vector<8x32xf32>
    %337 = vector.extract_strided_slice %334 {offsets = [0, 96], sizes = [8, 32], strides = [1, 1]} : vector<8x128xf32> to vector<8x32xf32>
    %338 = vector.extract_strided_slice %329 {offsets = [0, 64], sizes = [8, 32], strides = [1, 1]} : vector<8x128xf32> to vector<8x32xf32>
    %339 = math.tanh %338 : vector<8x32xf32>
    %340 = arith.mulf %336, %300 : vector<8x32xf32>
    %341 = arith.mulf %335, %339 : vector<8x32xf32>
    %342 = arith.addf %340, %341 : vector<8x32xf32>
    %343 = math.tanh %342 : vector<8x32xf32>
    %344 = arith.mulf %337, %343 : vector<8x32xf32>
    %cst_74 = arith.constant dense<0.000000e+00> : vector<8x128xf32>
    %345 = tpu.matmul %344, %5, %cst_74 {dimension_numbers = #tpu.dot_dimension_numbers<[1], [0], [0], [1], [0, 0, 1, 1], [], []>} : vector<8x32xf32>, vector<32x128xf32>, vector<8x128xf32> -> vector<8x128xf32>
    %cst_75 = arith.constant dense<0.000000e+00> : vector<8x128xf32>
    %346 = tpu.matmul %321, %6, %cst_75 {dimension_numbers = #tpu.dot_dimension_numbers<[1], [0], [0], [1], [0, 0, 1, 1], [], []>} : vector<8x32xf32>, vector<32x128xf32>, vector<8x128xf32> -> vector<8x128xf32>
    %347 = arith.addf %345, %346 : vector<8x128xf32>
    %348 = arith.addf %347, %18 : vector<8x128xf32>
    %349 = arith.negf %348 : vector<8x128xf32>
    %350 = math.exp %349 : vector<8x128xf32>
    %cst_76 = arith.constant 1.000000e+00 : f32
    %351 = vector.broadcast %cst_76 : f32 to vector<8x128xf32>
    %352 = arith.addf %351, %350 : vector<8x128xf32>
    %353 = arith.divf %351, %352 : vector<8x128xf32>
    %354 = vector.extract_strided_slice %353 {offsets = [0, 0], sizes = [8, 32], strides = [1, 1]} : vector<8x128xf32> to vector<8x32xf32>
    %355 = vector.extract_strided_slice %353 {offsets = [0, 32], sizes = [8, 32], strides = [1, 1]} : vector<8x128xf32> to vector<8x32xf32>
    %356 = vector.extract_strided_slice %353 {offsets = [0, 96], sizes = [8, 32], strides = [1, 1]} : vector<8x128xf32> to vector<8x32xf32>
    %357 = vector.extract_strided_slice %348 {offsets = [0, 64], sizes = [8, 32], strides = [1, 1]} : vector<8x128xf32> to vector<8x32xf32>
    %358 = math.tanh %357 : vector<8x32xf32>
    %359 = arith.mulf %355, %319 : vector<8x32xf32>
    %360 = arith.mulf %354, %358 : vector<8x32xf32>
    %361 = arith.addf %359, %360 : vector<8x32xf32>
    %362 = math.tanh %361 : vector<8x32xf32>
    %363 = arith.mulf %356, %362 : vector<8x32xf32>
    %cst_77 = arith.constant dense<0.000000e+00> : vector<8x128xf32>
    %364 = tpu.matmul %363, %4, %cst_77 {dimension_numbers = #tpu.dot_dimension_numbers<[1], [0], [0], [1], [0, 0, 1, 1], [], []>} : vector<8x32xf32>, vector<32x128xf32>, vector<8x128xf32> -> vector<8x128xf32>
    %cst_78 = arith.constant dense<0.000000e+00> : vector<8x128xf32>
    %365 = tpu.matmul %344, %3, %cst_78 {dimension_numbers = #tpu.dot_dimension_numbers<[1], [0], [0], [1], [0, 0, 1, 1], [], []>} : vector<8x32xf32>, vector<32x128xf32>, vector<8x128xf32> -> vector<8x128xf32>
    %366 = arith.addf %364, %365 : vector<8x128xf32>
    %367 = arith.addf %366, %15 : vector<8x128xf32>
    %368 = arith.negf %367 : vector<8x128xf32>
    %369 = math.exp %368 : vector<8x128xf32>
    %cst_79 = arith.constant 1.000000e+00 : f32
    %370 = vector.broadcast %cst_79 : f32 to vector<8x128xf32>
    %371 = arith.addf %370, %369 : vector<8x128xf32>
    %372 = arith.divf %370, %371 : vector<8x128xf32>
    %373 = vector.extract_strided_slice %372 {offsets = [0, 0], sizes = [8, 32], strides = [1, 1]} : vector<8x128xf32> to vector<8x32xf32>
    %374 = vector.extract_strided_slice %372 {offsets = [0, 32], sizes = [8, 32], strides = [1, 1]} : vector<8x128xf32> to vector<8x32xf32>
    %375 = vector.extract_strided_slice %372 {offsets = [0, 96], sizes = [8, 32], strides = [1, 1]} : vector<8x128xf32> to vector<8x32xf32>
    %376 = vector.extract_strided_slice %367 {offsets = [0, 64], sizes = [8, 32], strides = [1, 1]} : vector<8x128xf32> to vector<8x32xf32>
    %377 = math.tanh %376 : vector<8x32xf32>
    %378 = arith.mulf %374, %342 : vector<8x32xf32>
    %379 = arith.mulf %373, %377 : vector<8x32xf32>
    %380 = arith.addf %378, %379 : vector<8x32xf32>
    %381 = math.tanh %380 : vector<8x32xf32>
    %382 = arith.mulf %375, %381 : vector<8x32xf32>
    %cst_80 = arith.constant dense<0.000000e+00> : vector<8x128xf32>
    %383 = tpu.matmul %382, %5, %cst_80 {dimension_numbers = #tpu.dot_dimension_numbers<[1], [0], [0], [1], [0, 0, 1, 1], [], []>} : vector<8x32xf32>, vector<32x128xf32>, vector<8x128xf32> -> vector<8x128xf32>
    %cst_81 = arith.constant dense<0.000000e+00> : vector<8x128xf32>
    %384 = tpu.matmul %363, %6, %cst_81 {dimension_numbers = #tpu.dot_dimension_numbers<[1], [0], [0], [1], [0, 0, 1, 1], [], []>} : vector<8x32xf32>, vector<32x128xf32>, vector<8x128xf32> -> vector<8x128xf32>
    %385 = arith.addf %383, %384 : vector<8x128xf32>
    %386 = arith.addf %385, %18 : vector<8x128xf32>
    %387 = arith.negf %386 : vector<8x128xf32>
    %388 = math.exp %387 : vector<8x128xf32>
    %cst_82 = arith.constant 1.000000e+00 : f32
    %389 = vector.broadcast %cst_82 : f32 to vector<8x128xf32>
    %390 = arith.addf %389, %388 : vector<8x128xf32>
    %391 = arith.divf %389, %390 : vector<8x128xf32>
    %392 = vector.extract_strided_slice %391 {offsets = [0, 0], sizes = [8, 32], strides = [1, 1]} : vector<8x128xf32> to vector<8x32xf32>
    %393 = vector.extract_strided_slice %391 {offsets = [0, 32], sizes = [8, 32], strides = [1, 1]} : vector<8x128xf32> to vector<8x32xf32>
    %394 = vector.extract_strided_slice %391 {offsets = [0, 96], sizes = [8, 32], strides = [1, 1]} : vector<8x128xf32> to vector<8x32xf32>
    %395 = vector.extract_strided_slice %386 {offsets = [0, 64], sizes = [8, 32], strides = [1, 1]} : vector<8x128xf32> to vector<8x32xf32>
    %396 = math.tanh %395 : vector<8x32xf32>
    %397 = arith.mulf %393, %361 : vector<8x32xf32>
    %398 = arith.mulf %392, %396 : vector<8x32xf32>
    %399 = arith.addf %397, %398 : vector<8x32xf32>
    %400 = math.tanh %399 : vector<8x32xf32>
    %401 = arith.mulf %394, %400 : vector<8x32xf32>
    %cst_83 = arith.constant dense<0.000000e+00> : vector<8x128xf32>
    %402 = tpu.matmul %401, %4, %cst_83 {dimension_numbers = #tpu.dot_dimension_numbers<[1], [0], [0], [1], [0, 0, 1, 1], [], []>} : vector<8x32xf32>, vector<32x128xf32>, vector<8x128xf32> -> vector<8x128xf32>
    %cst_84 = arith.constant dense<0.000000e+00> : vector<8x128xf32>
    %403 = tpu.matmul %382, %3, %cst_84 {dimension_numbers = #tpu.dot_dimension_numbers<[1], [0], [0], [1], [0, 0, 1, 1], [], []>} : vector<8x32xf32>, vector<32x128xf32>, vector<8x128xf32> -> vector<8x128xf32>
    %404 = arith.addf %402, %403 : vector<8x128xf32>
    %405 = arith.addf %404, %15 : vector<8x128xf32>
    %406 = arith.negf %405 : vector<8x128xf32>
    %407 = math.exp %406 : vector<8x128xf32>
    %cst_85 = arith.constant 1.000000e+00 : f32
    %408 = vector.broadcast %cst_85 : f32 to vector<8x128xf32>
    %409 = arith.addf %408, %407 : vector<8x128xf32>
    %410 = arith.divf %408, %409 : vector<8x128xf32>
    %411 = vector.extract_strided_slice %410 {offsets = [0, 0], sizes = [8, 32], strides = [1, 1]} : vector<8x128xf32> to vector<8x32xf32>
    %412 = vector.extract_strided_slice %410 {offsets = [0, 32], sizes = [8, 32], strides = [1, 1]} : vector<8x128xf32> to vector<8x32xf32>
    %413 = vector.extract_strided_slice %410 {offsets = [0, 96], sizes = [8, 32], strides = [1, 1]} : vector<8x128xf32> to vector<8x32xf32>
    %414 = vector.extract_strided_slice %405 {offsets = [0, 64], sizes = [8, 32], strides = [1, 1]} : vector<8x128xf32> to vector<8x32xf32>
    %415 = math.tanh %414 : vector<8x32xf32>
    %416 = arith.mulf %412, %380 : vector<8x32xf32>
    %417 = arith.mulf %411, %415 : vector<8x32xf32>
    %418 = arith.addf %416, %417 : vector<8x32xf32>
    %419 = math.tanh %418 : vector<8x32xf32>
    %420 = arith.mulf %413, %419 : vector<8x32xf32>
    %cst_86 = arith.constant dense<0.000000e+00> : vector<8x128xf32>
    %421 = tpu.matmul %420, %5, %cst_86 {dimension_numbers = #tpu.dot_dimension_numbers<[1], [0], [0], [1], [0, 0, 1, 1], [], []>} : vector<8x32xf32>, vector<32x128xf32>, vector<8x128xf32> -> vector<8x128xf32>
    %cst_87 = arith.constant dense<0.000000e+00> : vector<8x128xf32>
    %422 = tpu.matmul %401, %6, %cst_87 {dimension_numbers = #tpu.dot_dimension_numbers<[1], [0], [0], [1], [0, 0, 1, 1], [], []>} : vector<8x32xf32>, vector<32x128xf32>, vector<8x128xf32> -> vector<8x128xf32>
    %423 = arith.addf %421, %422 : vector<8x128xf32>
    %424 = arith.addf %423, %18 : vector<8x128xf32>
    %425 = arith.negf %424 : vector<8x128xf32>
    %426 = math.exp %425 : vector<8x128xf32>
    %cst_88 = arith.constant 1.000000e+00 : f32
    %427 = vector.broadcast %cst_88 : f32 to vector<8x128xf32>
    %428 = arith.addf %427, %426 : vector<8x128xf32>
    %429 = arith.divf %427, %428 : vector<8x128xf32>
    %430 = vector.extract_strided_slice %429 {offsets = [0, 0], sizes = [8, 32], strides = [1, 1]} : vector<8x128xf32> to vector<8x32xf32>
    %431 = vector.extract_strided_slice %429 {offsets = [0, 32], sizes = [8, 32], strides = [1, 1]} : vector<8x128xf32> to vector<8x32xf32>
    %432 = vector.extract_strided_slice %429 {offsets = [0, 96], sizes = [8, 32], strides = [1, 1]} : vector<8x128xf32> to vector<8x32xf32>
    %433 = vector.extract_strided_slice %424 {offsets = [0, 64], sizes = [8, 32], strides = [1, 1]} : vector<8x128xf32> to vector<8x32xf32>
    %434 = math.tanh %433 : vector<8x32xf32>
    %435 = arith.mulf %431, %399 : vector<8x32xf32>
    %436 = arith.mulf %430, %434 : vector<8x32xf32>
    %437 = arith.addf %435, %436 : vector<8x32xf32>
    %438 = math.tanh %437 : vector<8x32xf32>
    %439 = arith.mulf %432, %438 : vector<8x32xf32>
    %cst_89 = arith.constant dense<0.000000e+00> : vector<8x128xf32>
    %440 = tpu.matmul %439, %4, %cst_89 {dimension_numbers = #tpu.dot_dimension_numbers<[1], [0], [0], [1], [0, 0, 1, 1], [], []>} : vector<8x32xf32>, vector<32x128xf32>, vector<8x128xf32> -> vector<8x128xf32>
    %cst_90 = arith.constant dense<0.000000e+00> : vector<8x128xf32>
    %441 = tpu.matmul %420, %3, %cst_90 {dimension_numbers = #tpu.dot_dimension_numbers<[1], [0], [0], [1], [0, 0, 1, 1], [], []>} : vector<8x32xf32>, vector<32x128xf32>, vector<8x128xf32> -> vector<8x128xf32>
    %442 = arith.addf %440, %441 : vector<8x128xf32>
    %443 = arith.addf %442, %15 : vector<8x128xf32>
    %444 = arith.negf %443 : vector<8x128xf32>
    %445 = math.exp %444 : vector<8x128xf32>
    %cst_91 = arith.constant 1.000000e+00 : f32
    %446 = vector.broadcast %cst_91 : f32 to vector<8x128xf32>
    %447 = arith.addf %446, %445 : vector<8x128xf32>
    %448 = arith.divf %446, %447 : vector<8x128xf32>
    %449 = vector.extract_strided_slice %448 {offsets = [0, 0], sizes = [8, 32], strides = [1, 1]} : vector<8x128xf32> to vector<8x32xf32>
    %450 = vector.extract_strided_slice %448 {offsets = [0, 32], sizes = [8, 32], strides = [1, 1]} : vector<8x128xf32> to vector<8x32xf32>
    %451 = vector.extract_strided_slice %448 {offsets = [0, 96], sizes = [8, 32], strides = [1, 1]} : vector<8x128xf32> to vector<8x32xf32>
    %452 = vector.extract_strided_slice %443 {offsets = [0, 64], sizes = [8, 32], strides = [1, 1]} : vector<8x128xf32> to vector<8x32xf32>
    %453 = math.tanh %452 : vector<8x32xf32>
    %454 = arith.mulf %450, %418 : vector<8x32xf32>
    %455 = arith.mulf %449, %453 : vector<8x32xf32>
    %456 = arith.addf %454, %455 : vector<8x32xf32>
    %457 = math.tanh %456 : vector<8x32xf32>
    %458 = arith.mulf %451, %457 : vector<8x32xf32>
    %cst_92 = arith.constant dense<0.000000e+00> : vector<8x128xf32>
    %459 = tpu.matmul %458, %5, %cst_92 {dimension_numbers = #tpu.dot_dimension_numbers<[1], [0], [0], [1], [0, 0, 1, 1], [], []>} : vector<8x32xf32>, vector<32x128xf32>, vector<8x128xf32> -> vector<8x128xf32>
    %cst_93 = arith.constant dense<0.000000e+00> : vector<8x128xf32>
    %460 = tpu.matmul %439, %6, %cst_93 {dimension_numbers = #tpu.dot_dimension_numbers<[1], [0], [0], [1], [0, 0, 1, 1], [], []>} : vector<8x32xf32>, vector<32x128xf32>, vector<8x128xf32> -> vector<8x128xf32>
    %461 = arith.addf %459, %460 : vector<8x128xf32>
    %462 = arith.addf %461, %18 : vector<8x128xf32>
    %463 = arith.negf %462 : vector<8x128xf32>
    %464 = math.exp %463 : vector<8x128xf32>
    %cst_94 = arith.constant 1.000000e+00 : f32
    %465 = vector.broadcast %cst_94 : f32 to vector<8x128xf32>
    %466 = arith.addf %465, %464 : vector<8x128xf32>
    %467 = arith.divf %465, %466 : vector<8x128xf32>
    %468 = vector.extract_strided_slice %467 {offsets = [0, 0], sizes = [8, 32], strides = [1, 1]} : vector<8x128xf32> to vector<8x32xf32>
    %469 = vector.extract_strided_slice %467 {offsets = [0, 32], sizes = [8, 32], strides = [1, 1]} : vector<8x128xf32> to vector<8x32xf32>
    %470 = vector.extract_strided_slice %467 {offsets = [0, 96], sizes = [8, 32], strides = [1, 1]} : vector<8x128xf32> to vector<8x32xf32>
    %471 = vector.extract_strided_slice %462 {offsets = [0, 64], sizes = [8, 32], strides = [1, 1]} : vector<8x128xf32> to vector<8x32xf32>
    %472 = math.tanh %471 : vector<8x32xf32>
    %473 = arith.mulf %469, %437 : vector<8x32xf32>
    %474 = arith.mulf %468, %472 : vector<8x32xf32>
    %475 = arith.addf %473, %474 : vector<8x32xf32>
    %476 = math.tanh %475 : vector<8x32xf32>
    %477 = arith.mulf %470, %476 : vector<8x32xf32>
    %cst_95 = arith.constant dense<0.000000e+00> : vector<8x128xf32>
    %478 = tpu.matmul %477, %4, %cst_95 {dimension_numbers = #tpu.dot_dimension_numbers<[1], [0], [0], [1], [0, 0, 1, 1], [], []>} : vector<8x32xf32>, vector<32x128xf32>, vector<8x128xf32> -> vector<8x128xf32>
    %cst_96 = arith.constant dense<0.000000e+00> : vector<8x128xf32>
    %479 = tpu.matmul %458, %3, %cst_96 {dimension_numbers = #tpu.dot_dimension_numbers<[1], [0], [0], [1], [0, 0, 1, 1], [], []>} : vector<8x32xf32>, vector<32x128xf32>, vector<8x128xf32> -> vector<8x128xf32>
    %480 = arith.addf %478, %479 : vector<8x128xf32>
    %481 = arith.addf %480, %15 : vector<8x128xf32>
    %482 = arith.negf %481 : vector<8x128xf32>
    %483 = math.exp %482 : vector<8x128xf32>
    %cst_97 = arith.constant 1.000000e+00 : f32
    %484 = vector.broadcast %cst_97 : f32 to vector<8x128xf32>
    %485 = arith.addf %484, %483 : vector<8x128xf32>
    %486 = arith.divf %484, %485 : vector<8x128xf32>
    %487 = vector.extract_strided_slice %486 {offsets = [0, 0], sizes = [8, 32], strides = [1, 1]} : vector<8x128xf32> to vector<8x32xf32>
    %488 = vector.extract_strided_slice %486 {offsets = [0, 32], sizes = [8, 32], strides = [1, 1]} : vector<8x128xf32> to vector<8x32xf32>
    %489 = vector.extract_strided_slice %486 {offsets = [0, 96], sizes = [8, 32], strides = [1, 1]} : vector<8x128xf32> to vector<8x32xf32>
    %490 = vector.extract_strided_slice %481 {offsets = [0, 64], sizes = [8, 32], strides = [1, 1]} : vector<8x128xf32> to vector<8x32xf32>
    %491 = math.tanh %490 : vector<8x32xf32>
    %492 = arith.mulf %488, %456 : vector<8x32xf32>
    %493 = arith.mulf %487, %491 : vector<8x32xf32>
    %494 = arith.addf %492, %493 : vector<8x32xf32>
    %495 = math.tanh %494 : vector<8x32xf32>
    %496 = arith.mulf %489, %495 : vector<8x32xf32>
    %cst_98 = arith.constant dense<0.000000e+00> : vector<8x128xf32>
    %497 = tpu.matmul %496, %5, %cst_98 {dimension_numbers = #tpu.dot_dimension_numbers<[1], [0], [0], [1], [0, 0, 1, 1], [], []>} : vector<8x32xf32>, vector<32x128xf32>, vector<8x128xf32> -> vector<8x128xf32>
    %cst_99 = arith.constant dense<0.000000e+00> : vector<8x128xf32>
    %498 = tpu.matmul %477, %6, %cst_99 {dimension_numbers = #tpu.dot_dimension_numbers<[1], [0], [0], [1], [0, 0, 1, 1], [], []>} : vector<8x32xf32>, vector<32x128xf32>, vector<8x128xf32> -> vector<8x128xf32>
    %499 = arith.addf %497, %498 : vector<8x128xf32>
    %500 = arith.addf %499, %18 : vector<8x128xf32>
    %501 = arith.negf %500 : vector<8x128xf32>
    %502 = math.exp %501 : vector<8x128xf32>
    %cst_100 = arith.constant 1.000000e+00 : f32
    %503 = vector.broadcast %cst_100 : f32 to vector<8x128xf32>
    %504 = arith.addf %503, %502 : vector<8x128xf32>
    %505 = arith.divf %503, %504 : vector<8x128xf32>
    %506 = vector.extract_strided_slice %505 {offsets = [0, 0], sizes = [8, 32], strides = [1, 1]} : vector<8x128xf32> to vector<8x32xf32>
    %507 = vector.extract_strided_slice %505 {offsets = [0, 32], sizes = [8, 32], strides = [1, 1]} : vector<8x128xf32> to vector<8x32xf32>
    %508 = vector.extract_strided_slice %505 {offsets = [0, 96], sizes = [8, 32], strides = [1, 1]} : vector<8x128xf32> to vector<8x32xf32>
    %509 = vector.extract_strided_slice %500 {offsets = [0, 64], sizes = [8, 32], strides = [1, 1]} : vector<8x128xf32> to vector<8x32xf32>
    %510 = math.tanh %509 : vector<8x32xf32>
    %511 = arith.mulf %507, %475 : vector<8x32xf32>
    %512 = arith.mulf %506, %510 : vector<8x32xf32>
    %513 = arith.addf %511, %512 : vector<8x32xf32>
    %514 = math.tanh %513 : vector<8x32xf32>
    %515 = arith.mulf %508, %514 : vector<8x32xf32>
    %516 = tpu.concatenate %363, %401, %439, %477, %515 in 1 : vector<8x32xf32>, vector<8x32xf32>, vector<8x32xf32>, vector<8x32xf32>, vector<8x32xf32> -> vector<8x160xf32>
    %c0_101 = arith.constant 0 : index
    %c0_102 = arith.constant 0 : index
    %517 = vector.load %arg16[%c0_101, %c0_102] : memref<160x5xf32, #tpu.memory_space<vmem>>, vector<160x5xf32>
    %cst_103 = arith.constant dense<0.000000e+00> : vector<8x5xf32>
    %518 = tpu.matmul %516, %517, %cst_103 {dimension_numbers = #tpu.dot_dimension_numbers<[1], [0], [0], [1], [0, 0, 1, 1], [], []>} : vector<8x160xf32>, vector<160x5xf32>, vector<8x5xf32> -> vector<8x5xf32>
    %c0_104 = arith.constant 0 : index
    %c0_105 = arith.constant 0 : index
    %519 = vector.load %arg17[%c0_104, %c0_105] : memref<1x1xf32, #tpu.memory_space<vmem>>, vector<1x1xf32>
    %520 = vector.broadcast %519 : vector<1x1xf32> to vector<8x5xf32>
    %521 = arith.addf %518, %520 : vector<8x5xf32>
    %c0_106 = arith.constant 0 : index
    %c0_107 = arith.constant 0 : index
    %522 = vector.load %arg18[%c0_106, %c0_107] : memref<8x5xf32, #tpu.memory_space<vmem>>, vector<8x5xf32>
    tpu.vector_store %arg18[%c0_106, %c0_107], %521 {strides = array<i32>} : memref<8x5xf32, #tpu.memory_space<vmem>>, vector<8x5xf32>,
    return
  }
}

</mosaic_0001>

<llo_original>
// kernel: lstm_multistep_forward.1
$region0: #{lstm_multistep_forward.1}
  #allocation0 [shape = 'u32[]', space=smem, size = 0x4, offset = 0x4, fixed_abs, tag = 'smem constant byte address 0x4 - core index']
  #allocation1 [shape = 'u32[144,128]{1,0:T(1,128)}', space=vmem, size = 0x12000, scoped, tag = 'internal scratch']
  #allocation2 [shape = 'f32[1,1]{1,0:T(1,128)S(1)}', space=vmem, size = 0x200, scoped, tag = 'scoped memory for lstm_multistep_forward.1']
  %s0 = inlined_call_operand.vmem [shape: f32[64,4], index: 0, kind: input, shape index: {}]
  %s1 = inlined_call_operand.vmem [shape: f32[8,1], index: 1, kind: input, shape index: {}]
  %s2 = inlined_call_operand.vmem [shape: f32[4,128], index: 2, kind: input, shape index: {}]
  %s3 = inlined_call_operand.vmem [shape: f32[32,128], index: 3, kind: input, shape index: {}]
  %s4 = inlined_call_operand.vmem [shape: f32[1,128], index: 4, kind: input, shape index: {}]
  %s5 = inlined_call_operand.vmem [shape: f32[32,128], index: 5, kind: input, shape index: {}]
  %s6 = inlined_call_operand.vmem [shape: f32[32,128], index: 6, kind: input, shape index: {}]
  %s7 = inlined_call_operand.vmem [shape: f32[1,128], index: 7, kind: input, shape index: {}]
  %s8 = inlined_call_operand.vmem [shape: f32[1,128], index: 8, kind: input, shape index: {}]
  %s9 = inlined_call_operand.vmem [shape: f32[32,128], index: 9, kind: input, shape index: {}]
  %s10 = inlined_call_operand.vmem [shape: f32[1,128], index: 10, kind: input, shape index: {}]
  %s11 = inlined_call_operand.vmem [shape: f32[32,128], index: 11, kind: input, shape index: {}]
  %s12 = inlined_call_operand.vmem [shape: f32[1,128], index: 12, kind: input, shape index: {}]
  %s13 = inlined_call_operand.vmem [shape: f32[32,128], index: 13, kind: input, shape index: {}]
  %s14 = inlined_call_operand.vmem [shape: f32[32,128], index: 14, kind: input, shape index: {}]
  %s15 = inlined_call_operand.vmem [shape: f32[1,128], index: 15, kind: input, shape index: {}]
  %s16 = inlined_call_operand.vmem [shape: f32[160,5], index: 16, kind: input, shape index: {}]
  %s17 = inlined_call_operand.<no memory space> [shape: f32[1,1], index: 17, kind: input, shape index: {}]
  %s18 = inlined_call_operand.vmem [shape: f32[8,5], index: 18, kind: output, shape index: {}]
  %s19 = sld [smem:[#allocation0]]
  $region82: #{lstm_multistep_forward.1} parent=0
    _
  %s21 = ssub.s32 1, %s19
  %s22 = scalar_select 0, %s21, %s19
  %v23 = vstv %s17
  %24 = vst [vmem:[#allocation2] sm:$0x1] %v23
  // Predicated region
  $region2: #{lstm_multistep_forward.1} parent=0 // pred_check
    _
  $region3: #{lstm_multistep_forward.1} parent=0 // pred_check_branch
    %26 = sbr.rel (0) target = $region5
  $region4: #{lstm_multistep_forward.1} parent=0 // pred_region
    _
  $region5: #{lstm_multistep_forward.1} parent=0 // pred_fallthru
    _
  // Predicated region
  $region6: #{lstm_multistep_forward.1} parent=0 // pred_check
    _
  $region7: #{lstm_multistep_forward.1} parent=0 // pred_check_branch
    %28 = sbr.rel (0) target = $region9
  $region8: #{lstm_multistep_forward.1} parent=0 // pred_region
    _
  $region9: #{lstm_multistep_forward.1} parent=0 // pred_fallthru
    _
  // Predicated region
  $region10: #{lstm_multistep_forward.1} parent=0 // pred_check
    _
  $region11: #{lstm_multistep_forward.1} parent=0 // pred_check_branch
    %30 = sbr.rel (0) target = $region13
  $region12: #{lstm_multistep_forward.1} parent=0 // pred_region
    _
  $region13: #{lstm_multistep_forward.1} parent=0 // pred_fallthru
    _
  // Predicated region
  $region14: #{lstm_multistep_forward.1} parent=0 // pred_check
    _
  $region15: #{lstm_multistep_forward.1} parent=0 // pred_check_branch
    %32 = sbr.rel (0) target = $region17
  $region16: #{lstm_multistep_forward.1} parent=0 // pred_region
    _
  $region17: #{lstm_multistep_forward.1} parent=0 // pred_fallthru
    _
  // Predicated region
  $region18: #{lstm_multistep_forward.1} parent=0 // pred_check
    _
  $region19: #{lstm_multistep_forward.1} parent=0 // pred_check_branch
    %34 = sbr.rel (0) target = $region21
  $region20: #{lstm_multistep_forward.1} parent=0 // pred_region
    _
  $region21: #{lstm_multistep_forward.1} parent=0 // pred_fallthru
    _
  // Predicated region
  $region22: #{lstm_multistep_forward.1} parent=0 // pred_check
    _
  $region23: #{lstm_multistep_forward.1} parent=0 // pred_check_branch
    %36 = sbr.rel (0) target = $region25
  $region24: #{lstm_multistep_forward.1} parent=0 // pred_region
    _
  $region25: #{lstm_multistep_forward.1} parent=0 // pred_fallthru
    _
  // Predicated region
  $region26: #{lstm_multistep_forward.1} parent=0 // pred_check
    _
  $region27: #{lstm_multistep_forward.1} parent=0 // pred_check_branch
    %38 = sbr.rel (0) target = $region29
  $region28: #{lstm_multistep_forward.1} parent=0 // pred_region
    _
  $region29: #{lstm_multistep_forward.1} parent=0 // pred_fallthru
    _
  // Predicated region
  $region30: #{lstm_multistep_forward.1} parent=0 // pred_check
    _
  $region31: #{lstm_multistep_forward.1} parent=0 // pred_check_branch
    %40 = sbr.rel (0) target = $region33
  $region32: #{lstm_multistep_forward.1} parent=0 // pred_region
    _
  $region33: #{lstm_multistep_forward.1} parent=0 // pred_fallthru
    _
  // Predicated region
  $region34: #{lstm_multistep_forward.1} parent=0 // pred_check
    _
  $region35: #{lstm_multistep_forward.1} parent=0 // pred_check_branch
    %42 = sbr.rel (0) target = $region37
  $region36: #{lstm_multistep_forward.1} parent=0 // pred_region
    _
  $region37: #{lstm_multistep_forward.1} parent=0 // pred_fallthru
    _
  // Predicated region
  $region38: #{lstm_multistep_forward.1} parent=0 // pred_check
    _
  $region39: #{lstm_multistep_forward.1} parent=0 // pred_check_branch
    %44 = sbr.rel (0) target = $region41
  $region40: #{lstm_multistep_forward.1} parent=0 // pred_region
    _
  $region41: #{lstm_multistep_forward.1} parent=0 // pred_fallthru
    _
  // Predicated region
  $region42: #{lstm_multistep_forward.1} parent=0 // pred_check
    _
  $region43: #{lstm_multistep_forward.1} parent=0 // pred_check_branch
    %46 = sbr.rel (0) target = $region45
  $region44: #{lstm_multistep_forward.1} parent=0 // pred_region
    _
  $region45: #{lstm_multistep_forward.1} parent=0 // pred_fallthru
    _
  // Predicated region
  $region46: #{lstm_multistep_forward.1} parent=0 // pred_check
    _
  $region47: #{lstm_multistep_forward.1} parent=0 // pred_check_branch
    %48 = sbr.rel (0) target = $region49
  $region48: #{lstm_multistep_forward.1} parent=0 // pred_region
    _
  $region49: #{lstm_multistep_forward.1} parent=0 // pred_fallthru
    _
  // Predicated region
  $region50: #{lstm_multistep_forward.1} parent=0 // pred_check
    _
  $region51: #{lstm_multistep_forward.1} parent=0 // pred_check_branch
    %50 = sbr.rel (0) target = $region53
  $region52: #{lstm_multistep_forward.1} parent=0 // pred_region
    _
  $region53: #{lstm_multistep_forward.1} parent=0 // pred_fallthru
    _
  // Predicated region
  $region54: #{lstm_multistep_forward.1} parent=0 // pred_check
    _
  $region55: #{lstm_multistep_forward.1} parent=0 // pred_check_branch
    %52 = sbr.rel (0) target = $region57
  $region56: #{lstm_multistep_forward.1} parent=0 // pred_region
    _
  $region57: #{lstm_multistep_forward.1} parent=0 // pred_fallthru
    _
  // Predicated region
  $region58: #{lstm_multistep_forward.1} parent=0 // pred_check
    _
  $region59: #{lstm_multistep_forward.1} parent=0 // pred_check_branch
    %54 = sbr.rel (0) target = $region61
  $region60: #{lstm_multistep_forward.1} parent=0 // pred_region
    _
  $region61: #{lstm_multistep_forward.1} parent=0 // pred_fallthru
    _
  // Predicated region
  $region62: #{lstm_multistep_forward.1} parent=0 // pred_check
    _
  $region63: #{lstm_multistep_forward.1} parent=0 // pred_check_branch
    %56 = sbr.rel (0) target = $region65
  $region64: #{lstm_multistep_forward.1} parent=0 // pred_region
    _
  $region65: #{lstm_multistep_forward.1} parent=0 // pred_fallthru
    _
  // Predicated region
  $region66: #{lstm_multistep_forward.1} parent=0 // pred_check
    _
  $region67: #{lstm_multistep_forward.1} parent=0 // pred_check_branch
    %58 = sbr.rel (0) target = $region69
  $region68: #{lstm_multistep_forward.1} parent=0 // pred_region
    _
  $region69: #{lstm_multistep_forward.1} parent=0 // pred_fallthru
    _
  // Predicated region
  $region70: #{lstm_multistep_forward.1} parent=0 // pred_check
    _
  $region71: #{lstm_multistep_forward.1} parent=0 // pred_check_branch
    %60 = sbr.rel (0) target = $region73
  $region72: #{lstm_multistep_forward.1} parent=0 // pred_region
    _
  $region73: #{lstm_multistep_forward.1} parent=0 // pred_fallthru
    _
  %v61 = vld [vmem:[%s3] sm:$0xff]
  %v62 = vld [vmem:[%s3 + $0x8] sm:$0xff]
  %v63 = vld [vmem:[%s3 + $0x10] sm:$0xff]
  %v64 = vld [vmem:[%s3 + $0x18] sm:$0xff]
  %v65 = vld [vmem:[%s5] sm:$0xff]
  %v66 = vld [vmem:[%s5 + $0x8] sm:$0xff]
  %v67 = vld [vmem:[%s5 + $0x10] sm:$0xff]
  %v68 = vld [vmem:[%s5 + $0x18] sm:$0xff]
  %v69 = vld [vmem:[%s6] sm:$0xff]
  %v70 = vld [vmem:[%s6 + $0x8] sm:$0xff]
  %v71 = vld [vmem:[%s6 + $0x10] sm:$0xff]
  %v72 = vld [vmem:[%s6 + $0x18] sm:$0xff]
  %v73 = vld [vmem:[%s9] sm:$0xff]
  %v74 = vld [vmem:[%s9 + $0x8] sm:$0xff]
  %v75 = vld [vmem:[%s9 + $0x10] sm:$0xff]
  %v76 = vld [vmem:[%s9 + $0x18] sm:$0xff]
  %v77 = vld [vmem:[%s11] sm:$0xff]
  %v78 = vld [vmem:[%s11 + $0x8] sm:$0xff]
  %v79 = vld [vmem:[%s11 + $0x10] sm:$0xff]
  %v80 = vld [vmem:[%s11 + $0x18] sm:$0xff]
  %v81 = vld [vmem:[%s13] sm:$0xff]
  %v82 = vld [vmem:[%s13 + $0x8] sm:$0xff]
  %v83 = vld [vmem:[%s13 + $0x10] sm:$0xff]
  %v84 = vld [vmem:[%s13 + $0x18] sm:$0xff]
  %v85 = vld [vmem:[%s14] sm:$0xff]
  %v86 = vld [vmem:[%s14 + $0x8] sm:$0xff]
  %v87 = vld [vmem:[%s14 + $0x10] sm:$0xff]
  %v88 = vld [vmem:[%s14 + $0x18] sm:$0xff]
  %v89 = vld [vmem:[%s7] sm:$0x1]
  %v91 = vlaneseq
  %v92 = vshrl.u32 %v91, 7
  %v93 = vsub.s32 0, %v92
  %v94 = vrot.slane %v89, %v93
  %v96 = vld [vmem:[%s10] sm:$0x1]
  %v98 = vlaneseq
  %v99 = vshrl.u32 %v98, 7
  %v100 = vsub.s32 0, %v99
  %v101 = vrot.slane %v96, %v100
  %v103 = vld [vmem:[%s12] sm:$0x1]
  %v105 = vlaneseq
  %v106 = vshrl.u32 %v105, 7
  %v107 = vsub.s32 0, %v106
  %v108 = vrot.slane %v103, %v107
  %v110 = vld [vmem:[%s15] sm:$0x1]
  %v112 = vlaneseq
  %v113 = vshrl.u32 %v112, 7
  %v114 = vsub.s32 0, %v113
  %v115 = vrot.slane %v110, %v114
  %v117 = vld [vmem:[%s0] sm:$0xff]
  %v118 = vld [vmem:[%s0 + $0x8] sm:$0xff]
  %v119 = vld [vmem:[%s0 + $0x10] sm:$0xff]
  %v120 = vld [vmem:[%s0 + $0x18] sm:$0xff]
  %v121 = vld [vmem:[%s0 + $0x20] sm:$0xff]
  %v122 = vld [vmem:[%s0 + $0x28] sm:$0xff]
  %v123 = vld [vmem:[%s0 + $0x30] sm:$0xff]
  %v124 = vld [vmem:[%s0 + $0x38] sm:$0xff]
  %v125 = vld [vmem:[%s2] sm:$0xf]
  %v126 = vld [vmem:[%s4] sm:$0x1]
  %v128 = vlaneseq
  %v129 = vshrl.u32 %v128, 7
  %v130 = vsub.s32 0, %v129
  %v131 = vrot.slane %v126, %v130
  %vm133 = vcmask 31744
  %v135 = vsel %vm133, %v117, 0
  %v138 = vsel %vm133, %v118, 0
  %v141 = vsel %vm133, %v119, 0
  %v144 = vsel %vm133, %v120, 0
  %v147 = vsel %vm133, %v121, 0
  %v150 = vsel %vm133, %v122, 0
  %v153 = vsel %vm133, %v123, 0
  %v156 = vsel %vm133, %v124, 0
  %vm158 = vcmask 1043456
  %v160 = vsel %vm158, %v125, 0
  %162 = vmatprep.subr.mxu0 0.0
  %163 = vmatpush1.msra.mxu0 %v160
  %164 = vmatprep.subr.mxu0 0.0
  %165 = vmatpush1.msra.mxu0 0.0
  %166 = vmatprep.subr.mxu0 0.0
  %167 = vmatpush1.msra.mxu0 0.0
  %168 = vmatprep.subr.mxu0 0.0
  %169 = vmatpush1.msra.mxu0 0.0
  %170 = vmatprep.subr.mxu0 0.0
  %171 = vmatpush1.msra.mxu0 0.0
  %172 = vmatprep.subr.mxu0 0.0
  %173 = vmatpush1.msra.mxu0 0.0
  %174 = vmatprep.subr.mxu0 0.0
  %175 = vmatpush1.msra.mxu0 0.0
  %176 = vmatprep.subr.mxu0 0.0
  %177 = vmatpush1.msra.mxu0 0.0
  %178 = vmatprep.subr.mxu0 0.0
  %179 = vmatpush1.msra.mxu0 0.0
  %180 = vmatprep.subr.mxu0 0.0
  %181 = vmatpush1.msra.mxu0 0.0
  %182 = vmatprep.subr.mxu0 0.0
  %183 = vmatpush1.msra.mxu0 0.0
  %184 = vmatprep.subr.mxu0 0.0
  %185 = vmatpush1.msra.mxu0 0.0
  %186 = vmatprep.subr.mxu0 0.0
  %187 = vmatpush1.msra.mxu0 0.0
  %188 = vmatprep.subr.mxu0 0.0
  %189 = vmatpush1.msra.mxu0 0.0
  %190 = vmatprep.subr.mxu0 0.0
  %191 = vmatpush1.msra.mxu0 0.0
  %192 = vmatprep.subr.mxu0 0.0
  %193 = vmatpush1.msra.mxu0 0.0
  %194 = vmatprep.subr.mxu0 0.0
  %195 = vmatpush1.msra.mxu0 0.0
  %196 = vmatprep.subr.mxu0 0.0
  %197 = vmatpush1.msra.mxu0 0.0
  %198 = vmatprep.subr.mxu0 0.0
  %199 = vmatpush1.msra.mxu0 0.0
  %200 = vmatprep.subr.mxu0 0.0
  %201 = vmatpush1.msra.mxu0 0.0
  %202 = vmatprep.subr.mxu0 0.0
  %203 = vmatpush1.msra.mxu0 0.0
  %204 = vmatprep.subr.mxu0 0.0
  %205 = vmatpush1.msra.mxu0 0.0
  %206 = vmatprep.subr.mxu0 0.0
  %207 = vmatpush1.msra.mxu0 0.0
  %208 = vmatprep.subr.mxu0 0.0
  %209 = vmatpush1.msra.mxu0 0.0
  %210 = vmatprep.subr.mxu0 0.0
  %211 = vmatpush1.msra.mxu0 0.0
  %212 = vmatprep.subr.mxu0 0.0
  %213 = vmatpush1.msra.mxu0 0.0
  %214 = vmatprep.subr.mxu0 0.0
  %215 = vmatpush1.msra.mxu0 0.0
  %216 = vmatprep.subr.mxu0 0.0
  %217 = vmatpush1.msra.mxu0 0.0
  %218 = vmatprep.subr.mxu0 0.0
  %219 = vmatpush1.msra.mxu0 0.0
  %220 = vmatprep.subr.mxu0 0.0
  %221 = vmatpush1.msra.mxu0 0.0
  %222 = vmatprep.subr.mxu0 0.0
  %223 = vmatpush1.msra.mxu0 0.0
  %224 = vmatprep.subr.mxu0 0.0
  %225 = vmatpush1.msra.mxu0 0.0
  %226 = vmatprep.mubr.f32.mxu0 0.0
  %227 = vmatmul.mubr.f32.gmra.mrb[0].mxu0 %v135
  %v228 = vpop.f32.mrb[0].mxu0
  %v229 = vadd.f32 %v131, %v228
  %v230 = vpop.f32.mrb[0].mxu0
  %231 = vmatprep.mubr.f32.mxu0 0.0
  %232 = vmatmul.mubr.f32.gmra.mrb[0].mxu0 %v138
  %v233 = vpop.f32.mrb[0].mxu0
  %v234 = vadd.f32 %v131, %v233
  %v235 = vpop.f32.mrb[0].mxu0
  %236 = vmatprep.mubr.f32.mxu0 0.0
  %237 = vmatmul.mubr.f32.gmra.mrb[0].mxu0 %v141
  %v238 = vpop.f32.mrb[0].mxu0
  %v239 = vadd.f32 %v131, %v238
  %v240 = vpop.f32.mrb[0].mxu0
  %241 = vmatprep.mubr.f32.mxu0 0.0
  %242 = vmatmul.mubr.f32.gmra.mrb[0].mxu0 %v144
  %v243 = vpop.f32.mrb[0].mxu0
  %v244 = vadd.f32 %v131, %v243
  %v245 = vpop.f32.mrb[0].mxu0
  %246 = vmatprep.mubr.f32.mxu0 0.0
  %247 = vmatmul.mubr.f32.gmra.mrb[0].mxu0 %v147
  %v248 = vpop.f32.mrb[0].mxu0
  %v249 = vadd.f32 %v131, %v248
  %v250 = vpop.f32.mrb[0].mxu0
  %251 = vmatprep.mubr.f32.mxu0 0.0
  %252 = vmatmul.mubr.f32.gmra.mrb[0].mxu0 %v150
  %v253 = vpop.f32.mrb[0].mxu0
  %v254 = vadd.f32 %v131, %v253
  %v255 = vpop.f32.mrb[0].mxu0
  %256 = vmatprep.mubr.f32.mxu0 0.0
  %257 = vmatmul.mubr.f32.gmra.mrb[0].mxu0 %v153
  %v258 = vpop.f32.mrb[0].mxu0
  %v259 = vadd.f32 %v131, %v258
  %v260 = vpop.f32.mrb[0].mxu0
  %261 = vmatprep.mubr.f32.mxu0 0.0
  %262 = vmatmul.mubr.f32.gmra.mrb[0].mxu0 %v156
  %v263 = vpop.f32.mrb[0].mxu0
  %v264 = vadd.f32 %v131, %v263
  %v265 = vpop.f32.mrb[0].mxu0
  %266 = vdwg.mxu0
  %vm267 = vcmask 261120
  %v269 = vsel %vm267, 0.0, 0
  %271 = vmatprep.subr.mxu0 0.0
  %272 = vmatpush1.msra.mxu0 %v61
  %273 = vmatprep.subr.mxu0 0.0
  %274 = vmatpush1.msra.mxu0 %v62
  %275 = vmatprep.subr.mxu0 0.0
  %276 = vmatpush1.msra.mxu0 %v63
  %277 = vmatprep.subr.mxu0 0.0
  %278 = vmatpush1.msra.mxu0 %v64
  %279 = vmatprep.subr.mxu0 0.0
  %280 = vmatpush1.msra.mxu0 0.0
  %281 = vmatprep.subr.mxu0 0.0
  %282 = vmatpush1.msra.mxu0 0.0
  %283 = vmatprep.subr.mxu0 0.0
  %284 = vmatpush1.msra.mxu0 0.0
  %285 = vmatprep.subr.mxu0 0.0
  %286 = vmatpush1.msra.mxu0 0.0
  %287 = vmatprep.subr.mxu0 0.0
  %288 = vmatpush1.msra.mxu0 0.0
  %289 = vmatprep.subr.mxu0 0.0
  %290 = vmatpush1.msra.mxu0 0.0
  %291 = vmatprep.subr.mxu0 0.0
  %292 = vmatpush1.msra.mxu0 0.0
  %293 = vmatprep.subr.mxu0 0.0
  %294 = vmatpush1.msra.mxu0 0.0
  %295 = vmatprep.subr.mxu0 0.0
  %296 = vmatpush1.msra.mxu0 0.0
  %297 = vmatprep.subr.mxu0 0.0
  %298 = vmatpush1.msra.mxu0 0.0
  %299 = vmatprep.subr.mxu0 0.0
  %300 = vmatpush1.msra.mxu0 0.0
  %301 = vmatprep.subr.mxu0 0.0
  %302 = vmatpush1.msra.mxu0 0.0
  %303 = vmatprep.subr.mxu0 0.0
  %304 = vmatpush1.msra.mxu0 0.0
  %305 = vmatprep.subr.mxu0 0.0
  %306 = vmatpush1.msra.mxu0 0.0
  %307 = vmatprep.subr.mxu0 0.0
  %308 = vmatpush1.msra.mxu0 0.0
  %309 = vmatprep.subr.mxu0 0.0
  %310 = vmatpush1.msra.mxu0 0.0
  %311 = vmatprep.subr.mxu0 0.0
  %312 = vmatpush1.msra.mxu0 0.0
  %313 = vmatprep.subr.mxu0 0.0
  %314 = vmatpush1.msra.mxu0 0.0
  %315 = vmatprep.subr.mxu0 0.0
  %316 = vmatpush1.msra.mxu0 0.0
  %317 = vmatprep.subr.mxu0 0.0
  %318 = vmatpush1.msra.mxu0 0.0
  %319 = vmatprep.subr.mxu0 0.0
  %320 = vmatpush1.msra.mxu0 0.0
  %321 = vmatprep.subr.mxu0 0.0
  %322 = vmatpush1.msra.mxu0 0.0
  %323 = vmatprep.subr.mxu0 0.0
  %324 = vmatpush1.msra.mxu0 0.0
  %325 = vmatprep.subr.mxu0 0.0
  %326 = vmatpush1.msra.mxu0 0.0
  %327 = vmatprep.subr.mxu0 0.0
  %328 = vmatpush1.msra.mxu0 0.0
  %329 = vmatprep.subr.mxu0 0.0
  %330 = vmatpush1.msra.mxu0 0.0
  %331 = vmatprep.subr.mxu0 0.0
  %332 = vmatpush1.msra.mxu0 0.0
  %333 = vmatprep.subr.mxu0 0.0
  %334 = vmatpush1.msra.mxu0 0.0
  %335 = vmatprep.mubr.f32.mxu0 0.0
  %336 = vmatmul.mubr.f32.gmra.mrb[0].mxu0 %v269
  %v337 = vpop.f32.mrb[0].mxu0
  %v338 = vadd.f32 0.0, %v337
  %v339 = vpop.f32.mrb[0].mxu0
  %340 = vdwg.mxu0
  %v341 = vadd.f32 %v229, %v338
  %v342 = vxor.u32 %v341, 2147483648
  %v343 = vmul.f32 %v342, 1.442695
  %v344 = vpow.pop %v343
  %v345 = vadd.f32 %v344, 1.0
  %v346 = vrcp.pop %v345
  %v347 = vmul.f32 1.0, %v346
  %v348 = vtanh.pop %v341
  %v349 = vmul.f32 %v347, 0.0
  %351 = vrot.lane.b32.xlu0 %v348, 64
  %v352 = vpop.permute.xlu0 %351
  %v354 = vmul.f32 %v347, %v352
  %356 = vrot.lane.b32.xlu0 %v354, 32
  %v357 = vpop.permute.xlu0 %356
  %v359 = vadd.f32 %v349, %v357
  %v360 = vtanh.pop %v359
  %362 = vrot.lane.b32.xlu0 %v360, 64
  %v363 = vpop.permute.xlu0 %362
  %v365 = vmul.f32 %v347, %v363
  %366 = vmatprep.subr.mxu0 0.0
  %367 = vmatpush1.msra.mxu0 %v69
  %368 = vmatprep.subr.mxu0 0.0
  %369 = vmatpush1.msra.mxu0 %v70
  %370 = vmatprep.subr.mxu0 0.0
  %371 = vmatpush1.msra.mxu0 %v71
  %372 = vmatprep.subr.mxu0 0.0
  %373 = vmatpush1.msra.mxu0 %v72
  %374 = vmatprep.subr.mxu0 0.0
  %375 = vmatpush1.msra.mxu0 0.0
  %376 = vmatprep.subr.mxu0 0.0
  %377 = vmatpush1.msra.mxu0 0.0
  %378 = vmatprep.subr.mxu0 0.0
  %379 = vmatpush1.msra.mxu0 0.0
  %380 = vmatprep.subr.mxu0 0.0
  %381 = vmatpush1.msra.mxu0 0.0
  %382 = vmatprep.subr.mxu0 0.0
  %383 = vmatpush1.msra.mxu0 0.0
  %384 = vmatprep.subr.mxu0 0.0
  %385 = vmatpush1.msra.mxu0 0.0
  %386 = vmatprep.subr.mxu0 0.0
  %387 = vmatpush1.msra.mxu0 0.0
  %388 = vmatprep.subr.mxu0 0.0
  %389 = vmatpush1.msra.mxu0 0.0
  %390 = vmatprep.subr.mxu0 0.0
  %391 = vmatpush1.msra.mxu0 0.0
  %392 = vmatprep.subr.mxu0 0.0
  %393 = vmatpush1.msra.mxu0 0.0
  %394 = vmatprep.subr.mxu0 0.0
  %395 = vmatpush1.msra.mxu0 0.0
  %396 = vmatprep.subr.mxu0 0.0
  %397 = vmatpush1.msra.mxu0 0.0
  %398 = vmatprep.subr.mxu0 0.0
  %399 = vmatpush1.msra.mxu0 0.0
  %400 = vmatprep.subr.mxu0 0.0
  %401 = vmatpush1.msra.mxu0 0.0
  %402 = vmatprep.subr.mxu0 0.0
  %403 = vmatpush1.msra.mxu0 0.0
  %404 = vmatprep.subr.mxu0 0.0
  %405 = vmatpush1.msra.mxu0 0.0
  %406 = vmatprep.subr.mxu0 0.0
  %407 = vmatpush1.msra.mxu0 0.0
  %408 = vmatprep.subr.mxu0 0.0
  %409 = vmatpush1.msra.mxu0 0.0
  %410 = vmatprep.subr.mxu0 0.0
  %411 = vmatpush1.msra.mxu0 0.0
  %412 = vmatprep.subr.mxu0 0.0
  %413 = vmatpush1.msra.mxu0 0.0
  %414 = vmatprep.subr.mxu0 0.0
  %415 = vmatpush1.msra.mxu0 0.0
  %416 = vmatprep.subr.mxu0 0.0
  %417 = vmatpush1.msra.mxu0 0.0
  %418 = vmatprep.subr.mxu0 0.0
  %419 = vmatpush1.msra.mxu0 0.0
  %420 = vmatprep.subr.mxu0 0.0
  %421 = vmatpush1.msra.mxu0 0.0
  %422 = vmatprep.subr.mxu0 0.0
  %423 = vmatpush1.msra.mxu0 0.0
  %424 = vmatprep.subr.mxu0 0.0
  %425 = vmatpush1.msra.mxu0 0.0
  %426 = vmatprep.subr.mxu0 0.0
  %427 = vmatpush1.msra.mxu0 0.0
  %428 = vmatprep.subr.mxu0 0.0
  %429 = vmatpush1.msra.mxu0 0.0
  %430 = vmatprep.mubr.f32.mxu0 0.0
  %431 = vmatmul.mubr.f32.gmra.mrb[0].mxu0 %v269
  %v432 = vpop.f32.mrb[0].mxu0
  %v433 = vadd.f32 0.0, %v432
  %v434 = vpop.f32.mrb[0].mxu0
  %435 = vdwg.mxu0
  %437 = vrot.lane.b32.xlu0 %v365, 32
  %v438 = vpop.permute.xlu0 %437
  %v439 = vsel %vm267, %v438, 0
  %441 = vmatprep.subr.mxu0 0.0
  %442 = vmatpush1.msra.mxu0 %v65
  %443 = vmatprep.subr.mxu0 0.0
  %444 = vmatpush1.msra.mxu0 %v66
  %445 = vmatprep.subr.mxu0 0.0
  %446 = vmatpush1.msra.mxu0 %v67
  %447 = vmatprep.subr.mxu0 0.0
  %448 = vmatpush1.msra.mxu0 %v68
  %449 = vmatprep.subr.mxu0 0.0
  %450 = vmatpush1.msra.mxu0 0.0
  %451 = vmatprep.subr.mxu0 0.0
  %452 = vmatpush1.msra.mxu0 0.0
  %453 = vmatprep.subr.mxu0 0.0
  %454 = vmatpush1.msra.mxu0 0.0
  %455 = vmatprep.subr.mxu0 0.0
  %456 = vmatpush1.msra.mxu0 0.0
  %457 = vmatprep.subr.mxu0 0.0
  %458 = vmatpush1.msra.mxu0 0.0
  %459 = vmatprep.subr.mxu0 0.0
  %460 = vmatpush1.msra.mxu0 0.0
  %461 = vmatprep.subr.mxu0 0.0
  %462 = vmatpush1.msra.mxu0 0.0
  %463 = vmatprep.subr.mxu0 0.0
  %464 = vmatpush1.msra.mxu0 0.0
  %465 = vmatprep.subr.mxu0 0.0
  %466 = vmatpush1.msra.mxu0 0.0
  %467 = vmatprep.subr.mxu0 0.0
  %468 = vmatpush1.msra.mxu0 0.0
  %469 = vmatprep.subr.mxu0 0.0
  %470 = vmatpush1.msra.mxu0 0.0
  %471 = vmatprep.subr.mxu0 0.0
  %472 = vmatpush1.msra.mxu0 0.0
  %473 = vmatprep.subr.mxu0 0.0
  %474 = vmatpush1.msra.mxu0 0.0
  %475 = vmatprep.subr.mxu0 0.0
  %476 = vmatpush1.msra.mxu0 0.0
  %477 = vmatprep.subr.mxu0 0.0
  %478 = vmatpush1.msra.mxu0 0.0
  %479 = vmatprep.subr.mxu0 0.0
  %480 = vmatpush1.msra.mxu0 0.0
  %481 = vmatprep.subr.mxu0 0.0
  %482 = vmatpush1.msra.mxu0 0.0
  %483 = vmatprep.subr.mxu0 0.0
  %484 = vmatpush1.msra.mxu0 0.0
  %485 = vmatprep.subr.mxu0 0.0
  %486 = vmatpush1.msra.mxu0 0.0
  %487 = vmatprep.subr.mxu0 0.0
  %488 = vmatpush1.msra.mxu0 0.0
  %489 = vmatprep.subr.mxu0 0.0
  %490 = vmatpush1.msra.mxu0 0.0
  %491 = vmatprep.subr.mxu0 0.0
  %492 = vmatpush1.msra.mxu0 0.0
  %493 = vmatprep.subr.mxu0 0.0
  %494 = vmatpush1.msra.mxu0 0.0
  %495 = vmatprep.subr.mxu0 0.0
  %496 = vmatpush1.msra.mxu0 0.0
  %497 = vmatprep.subr.mxu0 0.0
  %498 = vmatpush1.msra.mxu0 0.0
  %499 = vmatprep.subr.mxu0 0.0
  %500 = vmatpush1.msra.mxu0 0.0
  %501 = vmatprep.subr.mxu0 0.0
  %502 = vmatpush1.msra.mxu0 0.0
  %503 = vmatprep.subr.mxu0 0.0
  %504 = vmatpush1.msra.mxu0 0.0
  %505 = vmatprep.mubr.f32.mxu0 0.0
  %506 = vmatmul.mubr.f32.gmra.mrb[0].mxu0 %v439
  %v507 = vpop.f32.mrb[0].mxu0
  %v508 = vadd.f32 %v433, %v507
  %v509 = vpop.f32.mrb[0].mxu0
  %510 = vdwg.mxu0
  %v511 = vadd.f32 %v508, %v94
  %v512 = vxor.u32 %v511, 2147483648
  %v513 = vmul.f32 %v512, 1.442695
  %v514 = vpow.pop %v513
  %v515 = vadd.f32 %v514, 1.0
  %v516 = vrcp.pop %v515
  %v517 = vmul.f32 1.0, %v516
  %v518 = vtanh.pop %v511
  %v519 = vmul.f32 %v517, 0.0
  %521 = vrot.lane.b32.xlu0 %v518, 64
  %v522 = vpop.permute.xlu0 %521
  %v524 = vmul.f32 %v517, %v522
  %526 = vrot.lane.b32.xlu0 %v524, 32
  %v527 = vpop.permute.xlu0 %526
  %v529 = vadd.f32 %v519, %v527
  %v530 = vtanh.pop %v529
  %532 = vrot.lane.b32.xlu0 %v530, 64
  %v533 = vpop.permute.xlu0 %532
  %v535 = vmul.f32 %v517, %v533
  %536 = vmatprep.subr.mxu0 0.0
  %537 = vmatpush1.msra.mxu0 %v61
  %538 = vmatprep.subr.mxu0 0.0
  %539 = vmatpush1.msra.mxu0 %v62
  %540 = vmatprep.subr.mxu0 0.0
  %541 = vmatpush1.msra.mxu0 %v63
  %542 = vmatprep.subr.mxu0 0.0
  %543 = vmatpush1.msra.mxu0 %v64
  %544 = vmatprep.subr.mxu0 0.0
  %545 = vmatpush1.msra.mxu0 0.0
  %546 = vmatprep.subr.mxu0 0.0
  %547 = vmatpush1.msra.mxu0 0.0
  %548 = vmatprep.subr.mxu0 0.0
  %549 = vmatpush1.msra.mxu0 0.0
  %550 = vmatprep.subr.mxu0 0.0
  %551 = vmatpush1.msra.mxu0 0.0
  %552 = vmatprep.subr.mxu0 0.0
  %553 = vmatpush1.msra.mxu0 0.0
  %554 = vmatprep.subr.mxu0 0.0
  %555 = vmatpush1.msra.mxu0 0.0
  %556 = vmatprep.subr.mxu0 0.0
  %557 = vmatpush1.msra.mxu0 0.0
  %558 = vmatprep.subr.mxu0 0.0
  %559 = vmatpush1.msra.mxu0 0.0
  %560 = vmatprep.subr.mxu0 0.0
  %561 = vmatpush1.msra.mxu0 0.0
  %562 = vmatprep.subr.mxu0 0.0
  %563 = vmatpush1.msra.mxu0 0.0
  %564 = vmatprep.subr.mxu0 0.0
  %565 = vmatpush1.msra.mxu0 0.0
  %566 = vmatprep.subr.mxu0 0.0
  %567 = vmatpush1.msra.mxu0 0.0
  %568 = vmatprep.subr.mxu0 0.0
  %569 = vmatpush1.msra.mxu0 0.0
  %570 = vmatprep.subr.mxu0 0.0
  %571 = vmatpush1.msra.mxu0 0.0
  %572 = vmatprep.subr.mxu0 0.0
  %573 = vmatpush1.msra.mxu0 0.0
  %574 = vmatprep.subr.mxu0 0.0
  %575 = vmatpush1.msra.mxu0 0.0
  %576 = vmatprep.subr.mxu0 0.0
  %577 = vmatpush1.msra.mxu0 0.0
  %578 = vmatprep.subr.mxu0 0.0
  %579 = vmatpush1.msra.mxu0 0.0
  %580 = vmatprep.subr.mxu0 0.0
  %581 = vmatpush1.msra.mxu0 0.0
  %582 = vmatprep.subr.mxu0 0.0
  %583 = vmatpush1.msra.mxu0 0.0
  %584 = vmatprep.subr.mxu0 0.0
  %585 = vmatpush1.msra.mxu0 0.0
  %586 = vmatprep.subr.mxu0 0.0
  %587 = vmatpush1.msra.mxu0 0.0
  %588 = vmatprep.subr.mxu0 0.0
  %589 = vmatpush1.msra.mxu0 0.0
  %590 = vmatprep.subr.mxu0 0.0
  %591 = vmatpush1.msra.mxu0 0.0
  %592 = vmatprep.subr.mxu0 0.0
  %593 = vmatpush1.msra.mxu0 0.0
  %594 = vmatprep.subr.mxu0 0.0
  %595 = vmatpush1.msra.mxu0 0.0
  %596 = vmatprep.subr.mxu0 0.0
  %597 = vmatpush1.msra.mxu0 0.0
  %598 = vmatprep.subr.mxu0 0.0
  %599 = vmatpush1.msra.mxu0 0.0
  %600 = vmatprep.mubr.f32.mxu0 0.0
  %601 = vmatmul.mubr.f32.gmra.mrb[0].mxu0 %v439
  %v602 = vpop.f32.mrb[0].mxu0
  %v603 = vadd.f32 0.0, %v602
  %v604 = vpop.f32.mrb[0].mxu0
  %605 = vdwg.mxu0
  %v606 = vadd.f32 %v234, %v603
  %v607 = vxor.u32 %v606, 2147483648
  %v608 = vmul.f32 %v607, 1.442695
  %v609 = vpow.pop %v608
  %v610 = vadd.f32 %v609, 1.0
  %v611 = vrcp.pop %v610
  %v612 = vmul.f32 1.0, %v611
  %v613 = vtanh.pop %v606
  %v614 = vmul.f32 %v612, %v359
  %616 = vrot.lane.b32.xlu0 %v613, 64
  %v617 = vpop.permute.xlu0 %616
  %v619 = vmul.f32 %v612, %v617
  %621 = vrot.lane.b32.xlu0 %v619, 32
  %v622 = vpop.permute.xlu0 %621
  %v624 = vadd.f32 %v614, %v622
  %v625 = vtanh.pop %v624
  %627 = vrot.lane.b32.xlu0 %v625, 64
  %v628 = vpop.permute.xlu0 %627
  %v630 = vmul.f32 %v612, %v628
  %632 = vrot.lane.b32.xlu0 %v535, 32
  %v633 = vpop.permute.xlu0 %632
  %v634 = vsel %vm267, %v633, 0
  %636 = vmatprep.subr.mxu0 0.0
  %637 = vmatpush1.msra.mxu0 %v69
  %638 = vmatprep.subr.mxu0 0.0
  %639 = vmatpush1.msra.mxu0 %v70
  %640 = vmatprep.subr.mxu0 0.0
  %641 = vmatpush1.msra.mxu0 %v71
  %642 = vmatprep.subr.mxu0 0.0
  %643 = vmatpush1.msra.mxu0 %v72
  %644 = vmatprep.subr.mxu0 0.0
  %645 = vmatpush1.msra.mxu0 0.0
  %646 = vmatprep.subr.mxu0 0.0
  %647 = vmatpush1.msra.mxu0 0.0
  %648 = vmatprep.subr.mxu0 0.0
  %649 = vmatpush1.msra.mxu0 0.0
  %650 = vmatprep.subr.mxu0 0.0
  %651 = vmatpush1.msra.mxu0 0.0
  %652 = vmatprep.subr.mxu0 0.0
  %653 = vmatpush1.msra.mxu0 0.0
  %654 = vmatprep.subr.mxu0 0.0
  %655 = vmatpush1.msra.mxu0 0.0
  %656 = vmatprep.subr.mxu0 0.0
  %657 = vmatpush1.msra.mxu0 0.0
  %658 = vmatprep.subr.mxu0 0.0
  %659 = vmatpush1.msra.mxu0 0.0
  %660 = vmatprep.subr.mxu0 0.0
  %661 = vmatpush1.msra.mxu0 0.0
  %662 = vmatprep.subr.mxu0 0.0
  %663 = vmatpush1.msra.mxu0 0.0
  %664 = vmatprep.subr.mxu0 0.0
  %665 = vmatpush1.msra.mxu0 0.0
  %666 = vmatprep.subr.mxu0 0.0
  %667 = vmatpush1.msra.mxu0 0.0
  %668 = vmatprep.subr.mxu0 0.0
  %669 = vmatpush1.msra.mxu0 0.0
  %670 = vmatprep.subr.mxu0 0.0
  %671 = vmatpush1.msra.mxu0 0.0
  %672 = vmatprep.subr.mxu0 0.0
  %673 = vmatpush1.msra.mxu0 0.0
  %674 = vmatprep.subr.mxu0 0.0
  %675 = vmatpush1.msra.mxu0 0.0
  %676 = vmatprep.subr.mxu0 0.0
  %677 = vmatpush1.msra.mxu0 0.0
  %678 = vmatprep.subr.mxu0 0.0
  %679 = vmatpush1.msra.mxu0 0.0
  %680 = vmatprep.subr.mxu0 0.0
  %681 = vmatpush1.msra.mxu0 0.0
  %682 = vmatprep.subr.mxu0 0.0
  %683 = vmatpush1.msra.mxu0 0.0
  %684 = vmatprep.subr.mxu0 0.0
  %685 = vmatpush1.msra.mxu0 0.0
  %686 = vmatprep.subr.mxu0 0.0
  %687 = vmatpush1.msra.mxu0 0.0
  %688 = vmatprep.subr.mxu0 0.0
  %689 = vmatpush1.msra.mxu0 0.0
  %690 = vmatprep.subr.mxu0 0.0
  %691 = vmatpush1.msra.mxu0 0.0
  %692 = vmatprep.subr.mxu0 0.0
  %693 = vmatpush1.msra.mxu0 0.0
  %694 = vmatprep.subr.mxu0 0.0
  %695 = vmatpush1.msra.mxu0 0.0
  %696 = vmatprep.subr.mxu0 0.0
  %697 = vmatpush1.msra.mxu0 0.0
  %698 = vmatprep.subr.mxu0 0.0
  %699 = vmatpush1.msra.mxu0 0.0
  %700 = vmatprep.mubr.f32.mxu0 0.0
  %701 = vmatmul.mubr.f32.gmra.mrb[0].mxu0 %v634
  %v702 = vpop.f32.mrb[0].mxu0
  %v703 = vadd.f32 0.0, %v702
  %v704 = vpop.f32.mrb[0].mxu0
  %705 = vdwg.mxu0
  %707 = vrot.lane.b32.xlu0 %v630, 32
  %v708 = vpop.permute.xlu0 %707
  %v709 = vsel %vm267, %v708, 0
  %711 = vmatprep.subr.mxu0 0.0
  %712 = vmatpush1.msra.mxu0 %v65
  %713 = vmatprep.subr.mxu0 0.0
  %714 = vmatpush1.msra.mxu0 %v66
  %715 = vmatprep.subr.mxu0 0.0
  %716 = vmatpush1.msra.mxu0 %v67
  %717 = vmatprep.subr.mxu0 0.0
  %718 = vmatpush1.msra.mxu0 %v68
  %719 = vmatprep.subr.mxu0 0.0
  %720 = vmatpush1.msra.mxu0 0.0
  %721 = vmatprep.subr.mxu0 0.0
  %722 = vmatpush1.msra.mxu0 0.0
  %723 = vmatprep.subr.mxu0 0.0
  %724 = vmatpush1.msra.mxu0 0.0
  %725 = vmatprep.subr.mxu0 0.0
  %726 = vmatpush1.msra.mxu0 0.0
  %727 = vmatprep.subr.mxu0 0.0
  %728 = vmatpush1.msra.mxu0 0.0
  %729 = vmatprep.subr.mxu0 0.0
  %730 = vmatpush1.msra.mxu0 0.0
  %731 = vmatprep.subr.mxu0 0.0
  %732 = vmatpush1.msra.mxu0 0.0
  %733 = vmatprep.subr.mxu0 0.0
  %734 = vmatpush1.msra.mxu0 0.0
  %735 = vmatprep.subr.mxu0 0.0
  %736 = vmatpush1.msra.mxu0 0.0
  %737 = vmatprep.subr.mxu0 0.0
  %738 = vmatpush1.msra.mxu0 0.0
  %739 = vmatprep.subr.mxu0 0.0
  %740 = vmatpush1.msra.mxu0 0.0
  %741 = vmatprep.subr.mxu0 0.0
  %742 = vmatpush1.msra.mxu0 0.0
  %743 = vmatprep.subr.mxu0 0.0
  %744 = vmatpush1.msra.mxu0 0.0
  %745 = vmatprep.subr.mxu0 0.0
  %746 = vmatpush1.msra.mxu0 0.0
  %747 = vmatprep.subr.mxu0 0.0
  %748 = vmatpush1.msra.mxu0 0.0
  %749 = vmatprep.subr.mxu0 0.0
  %750 = vmatpush1.msra.mxu0 0.0
  %751 = vmatprep.subr.mxu0 0.0
  %752 = vmatpush1.msra.mxu0 0.0
  %753 = vmatprep.subr.mxu0 0.0
  %754 = vmatpush1.msra.mxu0 0.0
  %755 = vmatprep.subr.mxu0 0.0
  %756 = vmatpush1.msra.mxu0 0.0
  %757 = vmatprep.subr.mxu0 0.0
  %758 = vmatpush1.msra.mxu0 0.0
  %759 = vmatprep.subr.mxu0 0.0
  %760 = vmatpush1.msra.mxu0 0.0
  %761 = vmatprep.subr.mxu0 0.0
  %762 = vmatpush1.msra.mxu0 0.0
  %763 = vmatprep.subr.mxu0 0.0
  %764 = vmatpush1.msra.mxu0 0.0
  %765 = vmatprep.subr.mxu0 0.0
  %766 = vmatpush1.msra.mxu0 0.0
  %767 = vmatprep.subr.mxu0 0.0
  %768 = vmatpush1.msra.mxu0 0.0
  %769 = vmatprep.subr.mxu0 0.0
  %770 = vmatpush1.msra.mxu0 0.0
  %771 = vmatprep.subr.mxu0 0.0
  %772 = vmatpush1.msra.mxu0 0.0
  %773 = vmatprep.subr.mxu0 0.0
  %774 = vmatpush1.msra.mxu0 0.0
  %775 = vmatprep.mubr.f32.mxu0 0.0
  %776 = vmatmul.mubr.f32.gmra.mrb[0].mxu0 %v709
  %v777 = vpop.f32.mrb[0].mxu0
  %v778 = vadd.f32 %v703, %v777
  %v779 = vpop.f32.mrb[0].mxu0
  %780 = vdwg.mxu0
  %v781 = vadd.f32 %v778, %v94
  %v782 = vxor.u32 %v781, 2147483648
  %v783 = vmul.f32 %v782, 1.442695
  %v784 = vpow.pop %v783
  %v785 = vadd.f32 %v784, 1.0
  %v786 = vrcp.pop %v785
  %v787 = vmul.f32 1.0, %v786
  %v788 = vtanh.pop %v781
  %v789 = vmul.f32 %v787, %v529
  %791 = vrot.lane.b32.xlu0 %v788, 64
  %v792 = vpop.permute.xlu0 %791
  %v794 = vmul.f32 %v787, %v792
  %796 = vrot.lane.b32.xlu0 %v794, 32
  %v797 = vpop.permute.xlu0 %796
  %v799 = vadd.f32 %v789, %v797
  %v800 = vtanh.pop %v799
  %802 = vrot.lane.b32.xlu0 %v800, 64
  %v803 = vpop.permute.xlu0 %802
  %v805 = vmul.f32 %v787, %v803
  %806 = vmatprep.subr.mxu0 0.0
  %807 = vmatpush1.msra.mxu0 %v61
  %808 = vmatprep.subr.mxu0 0.0
  %809 = vmatpush1.msra.mxu0 %v62
  %810 = vmatprep.subr.mxu0 0.0
  %811 = vmatpush1.msra.mxu0 %v63
  %812 = vmatprep.subr.mxu0 0.0
  %813 = vmatpush1.msra.mxu0 %v64
  %814 = vmatprep.subr.mxu0 0.0
  %815 = vmatpush1.msra.mxu0 0.0
  %816 = vmatprep.subr.mxu0 0.0
  %817 = vmatpush1.msra.mxu0 0.0
  %818 = vmatprep.subr.mxu0 0.0
  %819 = vmatpush1.msra.mxu0 0.0
  %820 = vmatprep.subr.mxu0 0.0
  %821 = vmatpush1.msra.mxu0 0.0
  %822 = vmatprep.subr.mxu0 0.0
  %823 = vmatpush1.msra.mxu0 0.0
  %824 = vmatprep.subr.mxu0 0.0
  %825 = vmatpush1.msra.mxu0 0.0
  %826 = vmatprep.subr.mxu0 0.0
  %827 = vmatpush1.msra.mxu0 0.0
  %828 = vmatprep.subr.mxu0 0.0
  %829 = vmatpush1.msra.mxu0 0.0
  %830 = vmatprep.subr.mxu0 0.0
  %831 = vmatpush1.msra.mxu0 0.0
  %832 = vmatprep.subr.mxu0 0.0
  %833 = vmatpush1.msra.mxu0 0.0
  %834 = vmatprep.subr.mxu0 0.0
  %835 = vmatpush1.msra.mxu0 0.0
  %836 = vmatprep.subr.mxu0 0.0
  %837 = vmatpush1.msra.mxu0 0.0
  %838 = vmatprep.subr.mxu0 0.0
  %839 = vmatpush1.msra.mxu0 0.0
  %840 = vmatprep.subr.mxu0 0.0
  %841 = vmatpush1.msra.mxu0 0.0
  %842 = vmatprep.subr.mxu0 0.0
  %843 = vmatpush1.msra.mxu0 0.0
  %844 = vmatprep.subr.mxu0 0.0
  %845 = vmatpush1.msra.mxu0 0.0
  %846 = vmatprep.subr.mxu0 0.0
  %847 = vmatpush1.msra.mxu0 0.0
  %848 = vmatprep.subr.mxu0 0.0
  %849 = vmatpush1.msra.mxu0 0.0
  %850 = vmatprep.subr.mxu0 0.0
  %851 = vmatpush1.msra.mxu0 0.0
  %852 = vmatprep.subr.mxu0 0.0
  %853 = vmatpush1.msra.mxu0 0.0
  %854 = vmatprep.subr.mxu0 0.0
  %855 = vmatpush1.msra.mxu0 0.0
  %856 = vmatprep.subr.mxu0 0.0
  %857 = vmatpush1.msra.mxu0 0.0
  %858 = vmatprep.subr.mxu0 0.0
  %859 = vmatpush1.msra.mxu0 0.0
  %860 = vmatprep.subr.mxu0 0.0
  %861 = vmatpush1.msra.mxu0 0.0
  %862 = vmatprep.subr.mxu0 0.0
  %863 = vmatpush1.msra.mxu0 0.0
  %864 = vmatprep.subr.mxu0 0.0
  %865 = vmatpush1.msra.mxu0 0.0
  %866 = vmatprep.subr.mxu0 0.0
  %867 = vmatpush1.msra.mxu0 0.0
  %868 = vmatprep.subr.mxu0 0.0
  %869 = vmatpush1.msra.mxu0 0.0
  %870 = vmatprep.mubr.f32.mxu0 0.0
  %871 = vmatmul.mubr.f32.gmra.mrb[0].mxu0 %v709
  %v872 = vpop.f32.mrb[0].mxu0
  %v873 = vadd.f32 0.0, %v872
  %v874 = vpop.f32.mrb[0].mxu0
  %875 = vdwg.mxu0
  %v876 = vadd.f32 %v239, %v873
  %v877 = vxor.u32 %v876, 2147483648
  %v878 = vmul.f32 %v877, 1.442695
  %v879 = vpow.pop %v878
  %v880 = vadd.f32 %v879, 1.0
  %v881 = vrcp.pop %v880
  %v882 = vmul.f32 1.0, %v881
  %v883 = vtanh.pop %v876
  %v884 = vmul.f32 %v882, %v624
  %886 = vrot.lane.b32.xlu0 %v883, 64
  %v887 = vpop.permute.xlu0 %886
  %v889 = vmul.f32 %v882, %v887
  %891 = vrot.lane.b32.xlu0 %v889, 32
  %v892 = vpop.permute.xlu0 %891
  %v894 = vadd.f32 %v884, %v892
  %v895 = vtanh.pop %v894
  %897 = vrot.lane.b32.xlu0 %v895, 64
  %v898 = vpop.permute.xlu0 %897
  %v900 = vmul.f32 %v882, %v898
  %902 = vrot.lane.b32.xlu0 %v805, 32
  %v903 = vpop.permute.xlu0 %902
  %v904 = vsel %vm267, %v903, 0
  %906 = vmatprep.subr.mxu0 0.0
  %907 = vmatpush1.msra.mxu0 %v69
  %908 = vmatprep.subr.mxu0 0.0
  %909 = vmatpush1.msra.mxu0 %v70
  %910 = vmatprep.subr.mxu0 0.0
  %911 = vmatpush1.msra.mxu0 %v71
  %912 = vmatprep.subr.mxu0 0.0
  %913 = vmatpush1.msra.mxu0 %v72
  %914 = vmatprep.subr.mxu0 0.0
  %915 = vmatpush1.msra.mxu0 0.0
  %916 = vmatprep.subr.mxu0 0.0
  %917 = vmatpush1.msra.mxu0 0.0
  %918 = vmatprep.subr.mxu0 0.0
  %919 = vmatpush1.msra.mxu0 0.0
  %920 = vmatprep.subr.mxu0 0.0
  %921 = vmatpush1.msra.mxu0 0.0
  %922 = vmatprep.subr.mxu0 0.0
  %923 = vmatpush1.msra.mxu0 0.0
  %924 = vmatprep.subr.mxu0 0.0
  %925 = vmatpush1.msra.mxu0 0.0
  %926 = vmatprep.subr.mxu0 0.0
  %927 = vmatpush1.msra.mxu0 0.0
  %928 = vmatprep.subr.mxu0 0.0
  %929 = vmatpush1.msra.mxu0 0.0
  %930 = vmatprep.subr.mxu0 0.0
  %931 = vmatpush1.msra.mxu0 0.0
  %932 = vmatprep.subr.mxu0 0.0
  %933 = vmatpush1.msra.mxu0 0.0
  %934 = vmatprep.subr.mxu0 0.0
  %935 = vmatpush1.msra.mxu0 0.0
  %936 = vmatprep.subr.mxu0 0.0
  %937 = vmatpush1.msra.mxu0 0.0
  %938 = vmatprep.subr.mxu0 0.0
  %939 = vmatpush1.msra.mxu0 0.0
  %940 = vmatprep.subr.mxu0 0.0
  %941 = vmatpush1.msra.mxu0 0.0
  %942 = vmatprep.subr.mxu0 0.0
  %943 = vmatpush1.msra.mxu0 0.0
  %944 = vmatprep.subr.mxu0 0.0
  %945 = vmatpush1.msra.mxu0 0.0
  %946 = vmatprep.subr.mxu0 0.0
  %947 = vmatpush1.msra.mxu0 0.0
  %948 = vmatprep.subr.mxu0 0.0
  %949 = vmatpush1.msra.mxu0 0.0
  %950 = vmatprep.subr.mxu0 0.0
  %951 = vmatpush1.msra.mxu0 0.0
  %952 = vmatprep.subr.mxu0 0.0
  %953 = vmatpush1.msra.mxu0 0.0
  %954 = vmatprep.subr.mxu0 0.0
  %955 = vmatpush1.msra.mxu0 0.0
  %956 = vmatprep.subr.mxu0 0.0
  %957 = vmatpush1.msra.mxu0 0.0
  %958 = vmatprep.subr.mxu0 0.0
  %959 = vmatpush1.msra.mxu0 0.0
  %960 = vmatprep.subr.mxu0 0.0
  %961 = vmatpush1.msra.mxu0 0.0
  %962 = vmatprep.subr.mxu0 0.0
  %963 = vmatpush1.msra.mxu0 0.0
  %964 = vmatprep.subr.mxu0 0.0
  %965 = vmatpush1.msra.mxu0 0.0
  %966 = vmatprep.subr.mxu0 0.0
  %967 = vmatpush1.msra.mxu0 0.0
  %968 = vmatprep.subr.mxu0 0.0
  %969 = vmatpush1.msra.mxu0 0.0
  %970 = vmatprep.mubr.f32.mxu0 0.0
  %971 = vmatmul.mubr.f32.gmra.mrb[0].mxu0 %v904
  %v972 = vpop.f32.mrb[0].mxu0
  %v973 = vadd.f32 0.0, %v972
  %v974 = vpop.f32.mrb[0].mxu0
  %975 = vdwg.mxu0
  %977 = vrot.lane.b32.xlu0 %v900, 32
  %v978 = vpop.permute.xlu0 %977
  %v979 = vsel %vm267, %v978, 0
  %981 = vmatprep.subr.mxu0 0.0
  %982 = vmatpush1.msra.mxu0 %v65
  %983 = vmatprep.subr.mxu0 0.0
  %984 = vmatpush1.msra.mxu0 %v66
  %985 = vmatprep.subr.mxu0 0.0
  %986 = vmatpush1.msra.mxu0 %v67
  %987 = vmatprep.subr.mxu0 0.0
  %988 = vmatpush1.msra.mxu0 %v68
  %989 = vmatprep.subr.mxu0 0.0
  %990 = vmatpush1.msra.mxu0 0.0
  %991 = vmatprep.subr.mxu0 0.0
  %992 = vmatpush1.msra.mxu0 0.0
  %993 = vmatprep.subr.mxu0 0.0
  %994 = vmatpush1.msra.mxu0 0.0
  %995 = vmatprep.subr.mxu0 0.0
  %996 = vmatpush1.msra.mxu0 0.0
  %997 = vmatprep.subr.mxu0 0.0
  %998 = vmatpush1.msra.mxu0 0.0
  %999 = vmatprep.subr.mxu0 0.0
  %1000 = vmatpush1.msra.mxu0 0.0
  %1001 = vmatprep.subr.mxu0 0.0
  %1002 = vmatpush1.msra.mxu0 0.0
  %1003 = vmatprep.subr.mxu0 0.0
  %1004 = vmatpush1.msra.mxu0 0.0
  %1005 = vmatprep.subr.mxu0 0.0
  %1006 = vmatpush1.msra.mxu0 0.0
  %1007 = vmatprep.subr.mxu0 0.0
  %1008 = vmatpush1.msra.mxu0 0.0
  %1009 = vmatprep.subr.mxu0 0.0
  %1010 = vmatpush1.msra.mxu0 0.0
  %1011 = vmatprep.subr.mxu0 0.0
  %1012 = vmatpush1.msra.mxu0 0.0
  %1013 = vmatprep.subr.mxu0 0.0
  %1014 = vmatpush1.msra.mxu0 0.0
  %1015 = vmatprep.subr.mxu0 0.0
  %1016 = vmatpush1.msra.mxu0 0.0
  %1017 = vmatprep.subr.mxu0 0.0
  %1018 = vmatpush1.msra.mxu0 0.0
  %1019 = vmatprep.subr.mxu0 0.0
  %1020 = vmatpush1.msra.mxu0 0.0
  %1021 = vmatprep.subr.mxu0 0.0
  %1022 = vmatpush1.msra.mxu0 0.0
  %1023 = vmatprep.subr.mxu0 0.0
  %1024 = vmatpush1.msra.mxu0 0.0
  %1025 = vmatprep.subr.mxu0 0.0
  %1026 = vmatpush1.msra.mxu0 0.0
  %1027 = vmatprep.subr.mxu0 0.0
  %1028 = vmatpush1.msra.mxu0 0.0
  %1029 = vmatprep.subr.mxu0 0.0
  %1030 = vmatpush1.msra.mxu0 0.0
  %1031 = vmatprep.subr.mxu0 0.0
  %1032 = vmatpush1.msra.mxu0 0.0
  %1033 = vmatprep.subr.mxu0 0.0
  %1034 = vmatpush1.msra.mxu0 0.0
  %1035 = vmatprep.subr.mxu0 0.0
  %1036 = vmatpush1.msra.mxu0 0.0
  %1037 = vmatprep.subr.mxu0 0.0
  %1038 = vmatpush1.msra.mxu0 0.0
  %1039 = vmatprep.subr.mxu0 0.0
  %1040 = vmatpush1.msra.mxu0 0.0
  %1041 = vmatprep.subr.mxu0 0.0
  %1042 = vmatpush1.msra.mxu0 0.0
  %1043 = vmatprep.subr.mxu0 0.0
  %1044 = vmatpush1.msra.mxu0 0.0
  %1045 = vmatprep.mubr.f32.mxu0 0.0
  %1046 = vmatmul.mubr.f32.gmra.mrb[0].mxu0 %v979
  %v1047 = vpop.f32.mrb[0].mxu0
  %v1048 = vadd.f32 %v973, %v1047
  %v1049 = vpop.f32.mrb[0].mxu0
  %1050 = vdwg.mxu0
  %v1051 = vadd.f32 %v1048, %v94
  %v1052 = vxor.u32 %v1051, 2147483648
  %v1053 = vmul.f32 %v1052, 1.442695
  %v1054 = vpow.pop %v1053
  %v1055 = vadd.f32 %v1054, 1.0
  %v1056 = vrcp.pop %v1055
  %v1057 = vmul.f32 1.0, %v1056
  %v1058 = vtanh.pop %v1051
  %v1059 = vmul.f32 %v1057, %v799
  %1061 = vrot.lane.b32.xlu0 %v1058, 64
  %v1062 = vpop.permute.xlu0 %1061
  %v1064 = vmul.f32 %v1057, %v1062
  %1066 = vrot.lane.b32.xlu0 %v1064, 32
  %v1067 = vpop.permute.xlu0 %1066
  %v1069 = vadd.f32 %v1059, %v1067
  %v1070 = vtanh.pop %v1069
  %1072 = vrot.lane.b32.xlu0 %v1070, 64
  %v1073 = vpop.permute.xlu0 %1072
  %v1075 = vmul.f32 %v1057, %v1073
  %1076 = vmatprep.subr.mxu0 0.0
  %1077 = vmatpush1.msra.mxu0 %v61
  %1078 = vmatprep.subr.mxu0 0.0
  %1079 = vmatpush1.msra.mxu0 %v62
  %1080 = vmatprep.subr.mxu0 0.0
  %1081 = vmatpush1.msra.mxu0 %v63
  %1082 = vmatprep.subr.mxu0 0.0
  %1083 = vmatpush1.msra.mxu0 %v64
  %1084 = vmatprep.subr.mxu0 0.0
  %1085 = vmatpush1.msra.mxu0 0.0
  %1086 = vmatprep.subr.mxu0 0.0
  %1087 = vmatpush1.msra.mxu0 0.0
  %1088 = vmatprep.subr.mxu0 0.0
  %1089 = vmatpush1.msra.mxu0 0.0
  %1090 = vmatprep.subr.mxu0 0.0
  %1091 = vmatpush1.msra.mxu0 0.0
  %1092 = vmatprep.subr.mxu0 0.0
  %1093 = vmatpush1.msra.mxu0 0.0
  %1094 = vmatprep.subr.mxu0 0.0
  %1095 = vmatpush1.msra.mxu0 0.0
  %1096 = vmatprep.subr.mxu0 0.0
  %1097 = vmatpush1.msra.mxu0 0.0
  %1098 = vmatprep.subr.mxu0 0.0
  %1099 = vmatpush1.msra.mxu0 0.0
  %1100 = vmatprep.subr.mxu0 0.0
  %1101 = vmatpush1.msra.mxu0 0.0
  %1102 = vmatprep.subr.mxu0 0.0
  %1103 = vmatpush1.msra.mxu0 0.0
  %1104 = vmatprep.subr.mxu0 0.0
  %1105 = vmatpush1.msra.mxu0 0.0
  %1106 = vmatprep.subr.mxu0 0.0
  %1107 = vmatpush1.msra.mxu0 0.0
  %1108 = vmatprep.subr.mxu0 0.0
  %1109 = vmatpush1.msra.mxu0 0.0
  %1110 = vmatprep.subr.mxu0 0.0
  %1111 = vmatpush1.msra.mxu0 0.0
  %1112 = vmatprep.subr.mxu0 0.0
  %1113 = vmatpush1.msra.mxu0 0.0
  %1114 = vmatprep.subr.mxu0 0.0
  %1115 = vmatpush1.msra.mxu0 0.0
  %1116 = vmatprep.subr.mxu0 0.0
  %1117 = vmatpush1.msra.mxu0 0.0
  %1118 = vmatprep.subr.mxu0 0.0
  %1119 = vmatpush1.msra.mxu0 0.0
  %1120 = vmatprep.subr.mxu0 0.0
  %1121 = vmatpush1.msra.mxu0 0.0
  %1122 = vmatprep.subr.mxu0 0.0
  %1123 = vmatpush1.msra.mxu0 0.0
  %1124 = vmatprep.subr.mxu0 0.0
  %1125 = vmatpush1.msra.mxu0 0.0
  %1126 = vmatprep.subr.mxu0 0.0
  %1127 = vmatpush1.msra.mxu0 0.0
  %1128 = vmatprep.subr.mxu0 0.0
  %1129 = vmatpush1.msra.mxu0 0.0
  %1130 = vmatprep.subr.mxu0 0.0
  %1131 = vmatpush1.msra.mxu0 0.0
  %1132 = vmatprep.subr.mxu0 0.0
  %1133 = vmatpush1.msra.mxu0 0.0
  %1134 = vmatprep.subr.mxu0 0.0
  %1135 = vmatpush1.msra.mxu0 0.0
  %1136 = vmatprep.subr.mxu0 0.0
  %1137 = vmatpush1.msra.mxu0 0.0
  %1138 = vmatprep.subr.mxu0 0.0
  %1139 = vmatpush1.msra.mxu0 0.0
  %1140 = vmatprep.mubr.f32.mxu0 0.0
  %1141 = vmatmul.mubr.f32.gmra.mrb[0].mxu0 %v979
  %v1142 = vpop.f32.mrb[0].mxu0
  %v1143 = vadd.f32 0.0, %v1142
  %v1144 = vpop.f32.mrb[0].mxu0
  %1145 = vdwg.mxu0
  %v1146 = vadd.f32 %v244, %v1143
  %v1147 = vxor.u32 %v1146, 2147483648
  %v1148 = vmul.f32 %v1147, 1.442695
  %v1149 = vpow.pop %v1148
  %v1150 = vadd.f32 %v1149, 1.0
  %v1151 = vrcp.pop %v1150
  %v1152 = vmul.f32 1.0, %v1151
  %v1153 = vtanh.pop %v1146
  %v1154 = vmul.f32 %v1152, %v894
  %1156 = vrot.lane.b32.xlu0 %v1153, 64
  %v1157 = vpop.permute.xlu0 %1156
  %v1159 = vmul.f32 %v1152, %v1157
  %1161 = vrot.lane.b32.xlu0 %v1159, 32
  %v1162 = vpop.permute.xlu0 %1161
  %v1164 = vadd.f32 %v1154, %v1162
  %v1165 = vtanh.pop %v1164
  %1167 = vrot.lane.b32.xlu0 %v1165, 64
  %v1168 = vpop.permute.xlu0 %1167
  %v1170 = vmul.f32 %v1152, %v1168
  %1172 = vrot.lane.b32.xlu0 %v1075, 32
  %v1173 = vpop.permute.xlu0 %1172
  %v1174 = vsel %vm267, %v1173, 0
  %1176 = vmatprep.subr.mxu0 0.0
  %1177 = vmatpush1.msra.mxu0 %v69
  %1178 = vmatprep.subr.mxu0 0.0
  %1179 = vmatpush1.msra.mxu0 %v70
  %1180 = vmatprep.subr.mxu0 0.0
  %1181 = vmatpush1.msra.mxu0 %v71
  %1182 = vmatprep.subr.mxu0 0.0
  %1183 = vmatpush1.msra.mxu0 %v72
  %1184 = vmatprep.subr.mxu0 0.0
  %1185 = vmatpush1.msra.mxu0 0.0
  %1186 = vmatprep.subr.mxu0 0.0
  %1187 = vmatpush1.msra.mxu0 0.0
  %1188 = vmatprep.subr.mxu0 0.0
  %1189 = vmatpush1.msra.mxu0 0.0
  %1190 = vmatprep.subr.mxu0 0.0
  %1191 = vmatpush1.msra.mxu0 0.0
  %1192 = vmatprep.subr.mxu0 0.0
  %1193 = vmatpush1.msra.mxu0 0.0
  %1194 = vmatprep.subr.mxu0 0.0
  %1195 = vmatpush1.msra.mxu0 0.0
  %1196 = vmatprep.subr.mxu0 0.0
  %1197 = vmatpush1.msra.mxu0 0.0
  %1198 = vmatprep.subr.mxu0 0.0
  %1199 = vmatpush1.msra.mxu0 0.0
  %1200 = vmatprep.subr.mxu0 0.0
  %1201 = vmatpush1.msra.mxu0 0.0
  %1202 = vmatprep.subr.mxu0 0.0
  %1203 = vmatpush1.msra.mxu0 0.0
  %1204 = vmatprep.subr.mxu0 0.0
  %1205 = vmatpush1.msra.mxu0 0.0
  %1206 = vmatprep.subr.mxu0 0.0
  %1207 = vmatpush1.msra.mxu0 0.0
  %1208 = vmatprep.subr.mxu0 0.0
  %1209 = vmatpush1.msra.mxu0 0.0
  %1210 = vmatprep.subr.mxu0 0.0
  %1211 = vmatpush1.msra.mxu0 0.0
  %1212 = vmatprep.subr.mxu0 0.0
  %1213 = vmatpush1.msra.mxu0 0.0
  %1214 = vmatprep.subr.mxu0 0.0
  %1215 = vmatpush1.msra.mxu0 0.0
  %1216 = vmatprep.subr.mxu0 0.0
  %1217 = vmatpush1.msra.mxu0 0.0
  %1218 = vmatprep.subr.mxu0 0.0
  %1219 = vmatpush1.msra.mxu0 0.0
  %1220 = vmatprep.subr.mxu0 0.0
  %1221 = vmatpush1.msra.mxu0 0.0
  %1222 = vmatprep.subr.mxu0 0.0
  %1223 = vmatpush1.msra.mxu0 0.0
  %1224 = vmatprep.subr.mxu0 0.0
  %1225 = vmatpush1.msra.mxu0 0.0
  %1226 = vmatprep.subr.mxu0 0.0
  %1227 = vmatpush1.msra.mxu0 0.0
  %1228 = vmatprep.subr.mxu0 0.0
  %1229 = vmatpush1.msra.mxu0 0.0
  %1230 = vmatprep.subr.mxu0 0.0
  %1231 = vmatpush1.msra.mxu0 0.0
  %1232 = vmatprep.subr.mxu0 0.0
  %1233 = vmatpush1.msra.mxu0 0.0
  %1234 = vmatprep.subr.mxu0 0.0
  %1235 = vmatpush1.msra.mxu0 0.0
  %1236 = vmatprep.subr.mxu0 0.0
  %1237 = vmatpush1.msra.mxu0 0.0
  %1238 = vmatprep.subr.mxu0 0.0
  %1239 = vmatpush1.msra.mxu0 0.0
  %1240 = vmatprep.mubr.f32.mxu0 0.0
  %1241 = vmatmul.mubr.f32.gmra.mrb[0].mxu0 %v1174
  %v1242 = vpop.f32.mrb[0].mxu0
  %v1243 = vadd.f32 0.0, %v1242
  %v1244 = vpop.f32.mrb[0].mxu0
  %1245 = vdwg.mxu0
  %1247 = vrot.lane.b32.xlu0 %v1170, 32
  %v1248 = vpop.permute.xlu0 %1247
  %v1249 = vsel %vm267, %v1248, 0
  %1251 = vmatprep.subr.mxu0 0.0
  %1252 = vmatpush1.msra.mxu0 %v65
  %1253 = vmatprep.subr.mxu0 0.0
  %1254 = vmatpush1.msra.mxu0 %v66
  %1255 = vmatprep.subr.mxu0 0.0
  %1256 = vmatpush1.msra.mxu0 %v67
  %1257 = vmatprep.subr.mxu0 0.0
  %1258 = vmatpush1.msra.mxu0 %v68
  %1259 = vmatprep.subr.mxu0 0.0
  %1260 = vmatpush1.msra.mxu0 0.0
  %1261 = vmatprep.subr.mxu0 0.0
  %1262 = vmatpush1.msra.mxu0 0.0
  %1263 = vmatprep.subr.mxu0 0.0
  %1264 = vmatpush1.msra.mxu0 0.0
  %1265 = vmatprep.subr.mxu0 0.0
  %1266 = vmatpush1.msra.mxu0 0.0
  %1267 = vmatprep.subr.mxu0 0.0
  %1268 = vmatpush1.msra.mxu0 0.0
  %1269 = vmatprep.subr.mxu0 0.0
  %1270 = vmatpush1.msra.mxu0 0.0
  %1271 = vmatprep.subr.mxu0 0.0
  %1272 = vmatpush1.msra.mxu0 0.0
  %1273 = vmatprep.subr.mxu0 0.0
  %1274 = vmatpush1.msra.mxu0 0.0
  %1275 = vmatprep.subr.mxu0 0.0
  %1276 = vmatpush1.msra.mxu0 0.0
  %1277 = vmatprep.subr.mxu0 0.0
  %1278 = vmatpush1.msra.mxu0 0.0
  %1279 = vmatprep.subr.mxu0 0.0
  %1280 = vmatpush1.msra.mxu0 0.0
  %1281 = vmatprep.subr.mxu0 0.0
  %1282 = vmatpush1.msra.mxu0 0.0
  %1283 = vmatprep.subr.mxu0 0.0
  %1284 = vmatpush1.msra.mxu0 0.0
  %1285 = vmatprep.subr.mxu0 0.0
  %1286 = vmatpush1.msra.mxu0 0.0
  %1287 = vmatprep.subr.mxu0 0.0
  %1288 = vmatpush1.msra.mxu0 0.0
  %1289 = vmatprep.subr.mxu0 0.0
  %1290 = vmatpush1.msra.mxu0 0.0
  %1291 = vmatprep.subr.mxu0 0.0
  %1292 = vmatpush1.msra.mxu0 0.0
  %1293 = vmatprep.subr.mxu0 0.0
  %1294 = vmatpush1.msra.mxu0 0.0
  %1295 = vmatprep.subr.mxu0 0.0
  %1296 = vmatpush1.msra.mxu0 0.0
  %1297 = vmatprep.subr.mxu0 0.0
  %1298 = vmatpush1.msra.mxu0 0.0
  %1299 = vmatprep.subr.mxu0 0.0
  %1300 = vmatpush1.msra.mxu0 0.0
  %1301 = vmatprep.subr.mxu0 0.0
  %1302 = vmatpush1.msra.mxu0 0.0
  %1303 = vmatprep.subr.mxu0 0.0
  %1304 = vmatpush1.msra.mxu0 0.0
  %1305 = vmatprep.subr.mxu0 0.0
  %1306 = vmatpush1.msra.mxu0 0.0
  %1307 = vmatprep.subr.mxu0 0.0
  %1308 = vmatpush1.msra.mxu0 0.0
  %1309 = vmatprep.subr.mxu0 0.0
  %1310 = vmatpush1.msra.mxu0 0.0
  %1311 = vmatprep.subr.mxu0 0.0
  %1312 = vmatpush1.msra.mxu0 0.0
  %1313 = vmatprep.subr.mxu0 0.0
  %1314 = vmatpush1.msra.mxu0 0.0
  %1315 = vmatprep.mubr.f32.mxu0 0.0
  %1316 = vmatmul.mubr.f32.gmra.mrb[0].mxu0 %v1249
  %v1317 = vpop.f32.mrb[0].mxu0
  %v1318 = vadd.f32 %v1243, %v1317
  %v1319 = vpop.f32.mrb[0].mxu0
  %1320 = vdwg.mxu0
  %v1321 = vadd.f32 %v1318, %v94
  %v1322 = vxor.u32 %v1321, 2147483648
  %v1323 = vmul.f32 %v1322, 1.442695
  %v1324 = vpow.pop %v1323
  %v1325 = vadd.f32 %v1324, 1.0
  %v1326 = vrcp.pop %v1325
  %v1327 = vmul.f32 1.0, %v1326
  %v1328 = vtanh.pop %v1321
  %v1329 = vmul.f32 %v1327, %v1069
  %1331 = vrot.lane.b32.xlu0 %v1328, 64
  %v1332 = vpop.permute.xlu0 %1331
  %v1334 = vmul.f32 %v1327, %v1332
  %1336 = vrot.lane.b32.xlu0 %v1334, 32
  %v1337 = vpop.permute.xlu0 %1336
  %v1339 = vadd.f32 %v1329, %v1337
  %v1340 = vtanh.pop %v1339
  %1342 = vrot.lane.b32.xlu0 %v1340, 64
  %v1343 = vpop.permute.xlu0 %1342
  %v1345 = vmul.f32 %v1327, %v1343
  %1346 = vmatprep.subr.mxu0 0.0
  %1347 = vmatpush1.msra.mxu0 %v61
  %1348 = vmatprep.subr.mxu0 0.0
  %1349 = vmatpush1.msra.mxu0 %v62
  %1350 = vmatprep.subr.mxu0 0.0
  %1351 = vmatpush1.msra.mxu0 %v63
  %1352 = vmatprep.subr.mxu0 0.0
  %1353 = vmatpush1.msra.mxu0 %v64
  %1354 = vmatprep.subr.mxu0 0.0
  %1355 = vmatpush1.msra.mxu0 0.0
  %1356 = vmatprep.subr.mxu0 0.0
  %1357 = vmatpush1.msra.mxu0 0.0
  %1358 = vmatprep.subr.mxu0 0.0
  %1359 = vmatpush1.msra.mxu0 0.0
  %1360 = vmatprep.subr.mxu0 0.0
  %1361 = vmatpush1.msra.mxu0 0.0
  %1362 = vmatprep.subr.mxu0 0.0
  %1363 = vmatpush1.msra.mxu0 0.0
  %1364 = vmatprep.subr.mxu0 0.0
  %1365 = vmatpush1.msra.mxu0 0.0
  %1366 = vmatprep.subr.mxu0 0.0
  %1367 = vmatpush1.msra.mxu0 0.0
  %1368 = vmatprep.subr.mxu0 0.0
  %1369 = vmatpush1.msra.mxu0 0.0
  %1370 = vmatprep.subr.mxu0 0.0
  %1371 = vmatpush1.msra.mxu0 0.0
  %1372 = vmatprep.subr.mxu0 0.0
  %1373 = vmatpush1.msra.mxu0 0.0
  %1374 = vmatprep.subr.mxu0 0.0
  %1375 = vmatpush1.msra.mxu0 0.0
  %1376 = vmatprep.subr.mxu0 0.0
  %1377 = vmatpush1.msra.mxu0 0.0
  %1378 = vmatprep.subr.mxu0 0.0
  %1379 = vmatpush1.msra.mxu0 0.0
  %1380 = vmatprep.subr.mxu0 0.0
  %1381 = vmatpush1.msra.mxu0 0.0
  %1382 = vmatprep.subr.mxu0 0.0
  %1383 = vmatpush1.msra.mxu0 0.0
  %1384 = vmatprep.subr.mxu0 0.0
  %1385 = vmatpush1.msra.mxu0 0.0
  %1386 = vmatprep.subr.mxu0 0.0
  %1387 = vmatpush1.msra.mxu0 0.0
  %1388 = vmatprep.subr.mxu0 0.0
  %1389 = vmatpush1.msra.mxu0 0.0
  %1390 = vmatprep.subr.mxu0 0.0
  %1391 = vmatpush1.msra.mxu0 0.0
  %1392 = vmatprep.subr.mxu0 0.0
  %1393 = vmatpush1.msra.mxu0 0.0
  %1394 = vmatprep.subr.mxu0 0.0
  %1395 = vmatpush1.msra.mxu0 0.0
  %1396 = vmatprep.subr.mxu0 0.0
  %1397 = vmatpush1.msra.mxu0 0.0
  %1398 = vmatprep.subr.mxu0 0.0
  %1399 = vmatpush1.msra.mxu0 0.0
  %1400 = vmatprep.subr.mxu0 0.0
  %1401 = vmatpush1.msra.mxu0 0.0
  %1402 = vmatprep.subr.mxu0 0.0
  %1403 = vmatpush1.msra.mxu0 0.0
  %1404 = vmatprep.subr.mxu0 0.0
  %1405 = vmatpush1.msra.mxu0 0.0
  %1406 = vmatprep.subr.mxu0 0.0
  %1407 = vmatpush1.msra.mxu0 0.0
  %1408 = vmatprep.subr.mxu0 0.0
  %1409 = vmatpush1.msra.mxu0 0.0
  %1410 = vmatprep.mubr.f32.mxu0 0.0
  %1411 = vmatmul.mubr.f32.gmra.mrb[0].mxu0 %v1249
  %v1412 = vpop.f32.mrb[0].mxu0
  %v1413 = vadd.f32 0.0, %v1412
  %v1414 = vpop.f32.mrb[0].mxu0
  %1415 = vdwg.mxu0
  %v1416 = vadd.f32 %v249, %v1413
  %v1417 = vxor.u32 %v1416, 2147483648
  %v1418 = vmul.f32 %v1417, 1.442695
  %v1419 = vpow.pop %v1418
  %v1420 = vadd.f32 %v1419, 1.0
  %v1421 = vrcp.pop %v1420
  %v1422 = vmul.f32 1.0, %v1421
  %v1423 = vtanh.pop %v1416
  %v1424 = vmul.f32 %v1422, %v1164
  %1426 = vrot.lane.b32.xlu0 %v1423, 64
  %v1427 = vpop.permute.xlu0 %1426
  %v1429 = vmul.f32 %v1422, %v1427
  %1431 = vrot.lane.b32.xlu0 %v1429, 32
  %v1432 = vpop.permute.xlu0 %1431
  %v1434 = vadd.f32 %v1424, %v1432
  %v1435 = vtanh.pop %v1434
  %1437 = vrot.lane.b32.xlu0 %v1435, 64
  %v1438 = vpop.permute.xlu0 %1437
  %v1440 = vmul.f32 %v1422, %v1438
  %1442 = vrot.lane.b32.xlu0 %v1345, 32
  %v1443 = vpop.permute.xlu0 %1442
  %v1444 = vsel %vm267, %v1443, 0
  %1446 = vmatprep.subr.mxu0 0.0
  %1447 = vmatpush1.msra.mxu0 %v69
  %1448 = vmatprep.subr.mxu0 0.0
  %1449 = vmatpush1.msra.mxu0 %v70
  %1450 = vmatprep.subr.mxu0 0.0
  %1451 = vmatpush1.msra.mxu0 %v71
  %1452 = vmatprep.subr.mxu0 0.0
  %1453 = vmatpush1.msra.mxu0 %v72
  %1454 = vmatprep.subr.mxu0 0.0
  %1455 = vmatpush1.msra.mxu0 0.0
  %1456 = vmatprep.subr.mxu0 0.0
  %1457 = vmatpush1.msra.mxu0 0.0
  %1458 = vmatprep.subr.mxu0 0.0
  %1459 = vmatpush1.msra.mxu0 0.0
  %1460 = vmatprep.subr.mxu0 0.0
  %1461 = vmatpush1.msra.mxu0 0.0
  %1462 = vmatprep.subr.mxu0 0.0
  %1463 = vmatpush1.msra.mxu0 0.0
  %1464 = vmatprep.subr.mxu0 0.0
  %1465 = vmatpush1.msra.mxu0 0.0
  %1466 = vmatprep.subr.mxu0 0.0
  %1467 = vmatpush1.msra.mxu0 0.0
  %1468 = vmatprep.subr.mxu0 0.0
  %1469 = vmatpush1.msra.mxu0 0.0
  %1470 = vmatprep.subr.mxu0 0.0
  %1471 = vmatpush1.msra.mxu0 0.0
  %1472 = vmatprep.subr.mxu0 0.0
  %1473 = vmatpush1.msra.mxu0 0.0
  %1474 = vmatprep.subr.mxu0 0.0
  %1475 = vmatpush1.msra.mxu0 0.0
  %1476 = vmatprep.subr.mxu0 0.0
  %1477 = vmatpush1.msra.mxu0 0.0
  %1478 = vmatprep.subr.mxu0 0.0
  %1479 = vmatpush1.msra.mxu0 0.0
  %1480 = vmatprep.subr.mxu0 0.0
  %1481 = vmatpush1.msra.mxu0 0.0
  %1482 = vmatprep.subr.mxu0 0.0
  %1483 = vmatpush1.msra.mxu0 0.0
  %1484 = vmatprep.subr.mxu0 0.0
  %1485 = vmatpush1.msra.mxu0 0.0
  %1486 = vmatprep.subr.mxu0 0.0
  %1487 = vmatpush1.msra.mxu0 0.0
  %1488 = vmatprep.subr.mxu0 0.0
  %1489 = vmatpush1.msra.mxu0 0.0
  %1490 = vmatprep.subr.mxu0 0.0
  %1491 = vmatpush1.msra.mxu0 0.0
  %1492 = vmatprep.subr.mxu0 0.0
  %1493 = vmatpush1.msra.mxu0 0.0
  %1494 = vmatprep.subr.mxu0 0.0
  %1495 = vmatpush1.msra.mxu0 0.0
  %1496 = vmatprep.subr.mxu0 0.0
  %1497 = vmatpush1.msra.mxu0 0.0
  %1498 = vmatprep.subr.mxu0 0.0
  %1499 = vmatpush1.msra.mxu0 0.0
  %1500 = vmatprep.subr.mxu0 0.0
  %1501 = vmatpush1.msra.mxu0 0.0
  %1502 = vmatprep.subr.mxu0 0.0
  %1503 = vmatpush1.msra.mxu0 0.0
  %1504 = vmatprep.subr.mxu0 0.0
  %1505 = vmatpush1.msra.mxu0 0.0
  %1506 = vmatprep.subr.mxu0 0.0
  %1507 = vmatpush1.msra.mxu0 0.0
  %1508 = vmatprep.subr.mxu0 0.0
  %1509 = vmatpush1.msra.mxu0 0.0
  %1510 = vmatprep.mubr.f32.mxu0 0.0
  %1511 = vmatmul.mubr.f32.gmra.mrb[0].mxu0 %v1444
  %v1512 = vpop.f32.mrb[0].mxu0
  %v1513 = vadd.f32 0.0, %v1512
  %v1514 = vpop.f32.mrb[0].mxu0
  %1515 = vdwg.mxu0
  %1517 = vrot.lane.b32.xlu0 %v1440, 32
  %v1518 = vpop.permute.xlu0 %1517
  %v1519 = vsel %vm267, %v1518, 0
  %1521 = vmatprep.subr.mxu0 0.0
  %1522 = vmatpush1.msra.mxu0 %v65
  %1523 = vmatprep.subr.mxu0 0.0
  %1524 = vmatpush1.msra.mxu0 %v66
  %1525 = vmatprep.subr.mxu0 0.0
  %1526 = vmatpush1.msra.mxu0 %v67
  %1527 = vmatprep.subr.mxu0 0.0
  %1528 = vmatpush1.msra.mxu0 %v68
  %1529 = vmatprep.subr.mxu0 0.0
  %1530 = vmatpush1.msra.mxu0 0.0
  %1531 = vmatprep.subr.mxu0 0.0
  %1532 = vmatpush1.msra.mxu0 0.0
  %1533 = vmatprep.subr.mxu0 0.0
  %1534 = vmatpush1.msra.mxu0 0.0
  %1535 = vmatprep.subr.mxu0 0.0
  %1536 = vmatpush1.msra.mxu0 0.0
  %1537 = vmatprep.subr.mxu0 0.0
  %1538 = vmatpush1.msra.mxu0 0.0
  %1539 = vmatprep.subr.mxu0 0.0
  %1540 = vmatpush1.msra.mxu0 0.0
  %1541 = vmatprep.subr.mxu0 0.0
  %1542 = vmatpush1.msra.mxu0 0.0
  %1543 = vmatprep.subr.mxu0 0.0
  %1544 = vmatpush1.msra.mxu0 0.0
  %1545 = vmatprep.subr.mxu0 0.0
  %1546 = vmatpush1.msra.mxu0 0.0
  %1547 = vmatprep.subr.mxu0 0.0
  %1548 = vmatpush1.msra.mxu0 0.0
  %1549 = vmatprep.subr.mxu0 0.0
  %1550 = vmatpush1.msra.mxu0 0.0
  %1551 = vmatprep.subr.mxu0 0.0
  %1552 = vmatpush1.msra.mxu0 0.0
  %1553 = vmatprep.subr.mxu0 0.0
  %1554 = vmatpush1.msra.mxu0 0.0
  %1555 = vmatprep.subr.mxu0 0.0
  %1556 = vmatpush1.msra.mxu0 0.0
  %1557 = vmatprep.subr.mxu0 0.0
  %1558 = vmatpush1.msra.mxu0 0.0
  %1559 = vmatprep.subr.mxu0 0.0
  %1560 = vmatpush1.msra.mxu0 0.0
  %1561 = vmatprep.subr.mxu0 0.0
  %1562 = vmatpush1.msra.mxu0 0.0
  %1563 = vmatprep.subr.mxu0 0.0
  %1564 = vmatpush1.msra.mxu0 0.0
  %1565 = vmatprep.subr.mxu0 0.0
  %1566 = vmatpush1.msra.mxu0 0.0
  %1567 = vmatprep.subr.mxu0 0.0
  %1568 = vmatpush1.msra.mxu0 0.0
  %1569 = vmatprep.subr.mxu0 0.0
  %1570 = vmatpush1.msra.mxu0 0.0
  %1571 = vmatprep.subr.mxu0 0.0
  %1572 = vmatpush1.msra.mxu0 0.0
  %1573 = vmatprep.subr.mxu0 0.0
  %1574 = vmatpush1.msra.mxu0 0.0
  %1575 = vmatprep.subr.mxu0 0.0
  %1576 = vmatpush1.msra.mxu0 0.0
  %1577 = vmatprep.subr.mxu0 0.0
  %1578 = vmatpush1.msra.mxu0 0.0
  %1579 = vmatprep.subr.mxu0 0.0
  %1580 = vmatpush1.msra.mxu0 0.0
  %1581 = vmatprep.subr.mxu0 0.0
  %1582 = vmatpush1.msra.mxu0 0.0
  %1583 = vmatprep.subr.mxu0 0.0
  %1584 = vmatpush1.msra.mxu0 0.0
  %1585 = vmatprep.mubr.f32.mxu0 0.0
  %1586 = vmatmul.mubr.f32.gmra.mrb[0].mxu0 %v1519
  %v1587 = vpop.f32.mrb[0].mxu0
  %v1588 = vadd.f32 %v1513, %v1587
  %v1589 = vpop.f32.mrb[0].mxu0
  %1590 = vdwg.mxu0
  %v1591 = vadd.f32 %v1588, %v94
  %v1592 = vxor.u32 %v1591, 2147483648
  %v1593 = vmul.f32 %v1592, 1.442695
  %v1594 = vpow.pop %v1593
  %v1595 = vadd.f32 %v1594, 1.0
  %v1596 = vrcp.pop %v1595
  %v1597 = vmul.f32 1.0, %v1596
  %v1598 = vtanh.pop %v1591
  %v1599 = vmul.f32 %v1597, %v1339
  %1601 = vrot.lane.b32.xlu0 %v1598, 64
  %v1602 = vpop.permute.xlu0 %1601
  %v1604 = vmul.f32 %v1597, %v1602
  %1606 = vrot.lane.b32.xlu0 %v1604, 32
  %v1607 = vpop.permute.xlu0 %1606
  %v1609 = vadd.f32 %v1599, %v1607
  %v1610 = vtanh.pop %v1609
  %1612 = vrot.lane.b32.xlu0 %v1610, 64
  %v1613 = vpop.permute.xlu0 %1612
  %v1615 = vmul.f32 %v1597, %v1613
  %1616 = vmatprep.subr.mxu0 0.0
  %1617 = vmatpush1.msra.mxu0 %v61
  %1618 = vmatprep.subr.mxu0 0.0
  %1619 = vmatpush1.msra.mxu0 %v62
  %1620 = vmatprep.subr.mxu0 0.0
  %1621 = vmatpush1.msra.mxu0 %v63
  %1622 = vmatprep.subr.mxu0 0.0
  %1623 = vmatpush1.msra.mxu0 %v64
  %1624 = vmatprep.subr.mxu0 0.0
  %1625 = vmatpush1.msra.mxu0 0.0
  %1626 = vmatprep.subr.mxu0 0.0
  %1627 = vmatpush1.msra.mxu0 0.0
  %1628 = vmatprep.subr.mxu0 0.0
  %1629 = vmatpush1.msra.mxu0 0.0
  %1630 = vmatprep.subr.mxu0 0.0
  %1631 = vmatpush1.msra.mxu0 0.0
  %1632 = vmatprep.subr.mxu0 0.0
  %1633 = vmatpush1.msra.mxu0 0.0
  %1634 = vmatprep.subr.mxu0 0.0
  %1635 = vmatpush1.msra.mxu0 0.0
  %1636 = vmatprep.subr.mxu0 0.0
  %1637 = vmatpush1.msra.mxu0 0.0
  %1638 = vmatprep.subr.mxu0 0.0
  %1639 = vmatpush1.msra.mxu0 0.0
  %1640 = vmatprep.subr.mxu0 0.0
  %1641 = vmatpush1.msra.mxu0 0.0
  %1642 = vmatprep.subr.mxu0 0.0
  %1643 = vmatpush1.msra.mxu0 0.0
  %1644 = vmatprep.subr.mxu0 0.0
  %1645 = vmatpush1.msra.mxu0 0.0
  %1646 = vmatprep.subr.mxu0 0.0
  %1647 = vmatpush1.msra.mxu0 0.0
  %1648 = vmatprep.subr.mxu0 0.0
  %1649 = vmatpush1.msra.mxu0 0.0
  %1650 = vmatprep.subr.mxu0 0.0
  %1651 = vmatpush1.msra.mxu0 0.0
  %1652 = vmatprep.subr.mxu0 0.0
  %1653 = vmatpush1.msra.mxu0 0.0
  %1654 = vmatprep.subr.mxu0 0.0
  %1655 = vmatpush1.msra.mxu0 0.0
  %1656 = vmatprep.subr.mxu0 0.0
  %1657 = vmatpush1.msra.mxu0 0.0
  %1658 = vmatprep.subr.mxu0 0.0
  %1659 = vmatpush1.msra.mxu0 0.0
  %1660 = vmatprep.subr.mxu0 0.0
  %1661 = vmatpush1.msra.mxu0 0.0
  %1662 = vmatprep.subr.mxu0 0.0
  %1663 = vmatpush1.msra.mxu0 0.0
  %1664 = vmatprep.subr.mxu0 0.0
  %1665 = vmatpush1.msra.mxu0 0.0
  %1666 = vmatprep.subr.mxu0 0.0
  %1667 = vmatpush1.msra.mxu0 0.0
  %1668 = vmatprep.subr.mxu0 0.0
  %1669 = vmatpush1.msra.mxu0 0.0
  %1670 = vmatprep.subr.mxu0 0.0
  %1671 = vmatpush1.msra.mxu0 0.0
  %1672 = vmatprep.subr.mxu0 0.0
  %1673 = vmatpush1.msra.mxu0 0.0
  %1674 = vmatprep.subr.mxu0 0.0
  %1675 = vmatpush1.msra.mxu0 0.0
  %1676 = vmatprep.subr.mxu0 0.0
  %1677 = vmatpush1.msra.mxu0 0.0
  %1678 = vmatprep.subr.mxu0 0.0
  %1679 = vmatpush1.msra.mxu0 0.0
  %1680 = vmatprep.mubr.f32.mxu0 0.0
  %1681 = vmatmul.mubr.f32.gmra.mrb[0].mxu0 %v1519
  %v1682 = vpop.f32.mrb[0].mxu0
  %v1683 = vadd.f32 0.0, %v1682
  %v1684 = vpop.f32.mrb[0].mxu0
  %1685 = vdwg.mxu0
  %v1686 = vadd.f32 %v254, %v1683
  %v1687 = vxor.u32 %v1686, 2147483648
  %v1688 = vmul.f32 %v1687, 1.442695
  %v1689 = vpow.pop %v1688
  %v1690 = vadd.f32 %v1689, 1.0
  %v1691 = vrcp.pop %v1690
  %v1692 = vmul.f32 1.0, %v1691
  %v1693 = vtanh.pop %v1686
  %v1694 = vmul.f32 %v1692, %v1434
  %1696 = vrot.lane.b32.xlu0 %v1693, 64
  %v1697 = vpop.permute.xlu0 %1696
  %v1699 = vmul.f32 %v1692, %v1697
  %1701 = vrot.lane.b32.xlu0 %v1699, 32
  %v1702 = vpop.permute.xlu0 %1701
  %v1704 = vadd.f32 %v1694, %v1702
  %v1705 = vtanh.pop %v1704
  %1707 = vrot.lane.b32.xlu0 %v1705, 64
  %v1708 = vpop.permute.xlu0 %1707
  %v1710 = vmul.f32 %v1692, %v1708
  %1712 = vrot.lane.b32.xlu0 %v1615, 32
  %v1713 = vpop.permute.xlu0 %1712
  %v1714 = vsel %vm267, %v1713, 0
  %1716 = vmatprep.subr.mxu0 0.0
  %1717 = vmatpush1.msra.mxu0 %v69
  %1718 = vmatprep.subr.mxu0 0.0
  %1719 = vmatpush1.msra.mxu0 %v70
  %1720 = vmatprep.subr.mxu0 0.0
  %1721 = vmatpush1.msra.mxu0 %v71
  %1722 = vmatprep.subr.mxu0 0.0
  %1723 = vmatpush1.msra.mxu0 %v72
  %1724 = vmatprep.subr.mxu0 0.0
  %1725 = vmatpush1.msra.mxu0 0.0
  %1726 = vmatprep.subr.mxu0 0.0
  %1727 = vmatpush1.msra.mxu0 0.0
  %1728 = vmatprep.subr.mxu0 0.0
  %1729 = vmatpush1.msra.mxu0 0.0
  %1730 = vmatprep.subr.mxu0 0.0
  %1731 = vmatpush1.msra.mxu0 0.0
  %1732 = vmatprep.subr.mxu0 0.0
  %1733 = vmatpush1.msra.mxu0 0.0
  %1734 = vmatprep.subr.mxu0 0.0
  %1735 = vmatpush1.msra.mxu0 0.0
  %1736 = vmatprep.subr.mxu0 0.0
  %1737 = vmatpush1.msra.mxu0 0.0
  %1738 = vmatprep.subr.mxu0 0.0
  %1739 = vmatpush1.msra.mxu0 0.0
  %1740 = vmatprep.subr.mxu0 0.0
  %1741 = vmatpush1.msra.mxu0 0.0
  %1742 = vmatprep.subr.mxu0 0.0
  %1743 = vmatpush1.msra.mxu0 0.0
  %1744 = vmatprep.subr.mxu0 0.0
  %1745 = vmatpush1.msra.mxu0 0.0
  %1746 = vmatprep.subr.mxu0 0.0
  %1747 = vmatpush1.msra.mxu0 0.0
  %1748 = vmatprep.subr.mxu0 0.0
  %1749 = vmatpush1.msra.mxu0 0.0
  %1750 = vmatprep.subr.mxu0 0.0
  %1751 = vmatpush1.msra.mxu0 0.0
  %1752 = vmatprep.subr.mxu0 0.0
  %1753 = vmatpush1.msra.mxu0 0.0
  %1754 = vmatprep.subr.mxu0 0.0
  %1755 = vmatpush1.msra.mxu0 0.0
  %1756 = vmatprep.subr.mxu0 0.0
  %1757 = vmatpush1.msra.mxu0 0.0
  %1758 = vmatprep.subr.mxu0 0.0
  %1759 = vmatpush1.msra.mxu0 0.0
  %1760 = vmatprep.subr.mxu0 0.0
  %1761 = vmatpush1.msra.mxu0 0.0
  %1762 = vmatprep.subr.mxu0 0.0
  %1763 = vmatpush1.msra.mxu0 0.0
  %1764 = vmatprep.subr.mxu0 0.0
  %1765 = vmatpush1.msra.mxu0 0.0
  %1766 = vmatprep.subr.mxu0 0.0
  %1767 = vmatpush1.msra.mxu0 0.0
  %1768 = vmatprep.subr.mxu0 0.0
  %1769 = vmatpush1.msra.mxu0 0.0
  %1770 = vmatprep.subr.mxu0 0.0
  %1771 = vmatpush1.msra.mxu0 0.0
  %1772 = vmatprep.subr.mxu0 0.0
  %1773 = vmatpush1.msra.mxu0 0.0
  %1774 = vmatprep.subr.mxu0 0.0
  %1775 = vmatpush1.msra.mxu0 0.0
  %1776 = vmatprep.subr.mxu0 0.0
  %1777 = vmatpush1.msra.mxu0 0.0
  %1778 = vmatprep.subr.mxu0 0.0
  %1779 = vmatpush1.msra.mxu0 0.0
  %1780 = vmatprep.mubr.f32.mxu0 0.0
  %1781 = vmatmul.mubr.f32.gmra.mrb[0].mxu0 %v1714
  %v1782 = vpop.f32.mrb[0].mxu0
  %v1783 = vadd.f32 0.0, %v1782
  %v1784 = vpop.f32.mrb[0].mxu0
  %1785 = vdwg.mxu0
  %1787 = vrot.lane.b32.xlu0 %v1710, 32
  %v1788 = vpop.permute.xlu0 %1787
  %v1789 = vsel %vm267, %v1788, 0
  %1791 = vmatprep.subr.mxu0 0.0
  %1792 = vmatpush1.msra.mxu0 %v65
  %1793 = vmatprep.subr.mxu0 0.0
  %1794 = vmatpush1.msra.mxu0 %v66
  %1795 = vmatprep.subr.mxu0 0.0
  %1796 = vmatpush1.msra.mxu0 %v67
  %1797 = vmatprep.subr.mxu0 0.0
  %1798 = vmatpush1.msra.mxu0 %v68
  %1799 = vmatprep.subr.mxu0 0.0
  %1800 = vmatpush1.msra.mxu0 0.0
  %1801 = vmatprep.subr.mxu0 0.0
  %1802 = vmatpush1.msra.mxu0 0.0
  %1803 = vmatprep.subr.mxu0 0.0
  %1804 = vmatpush1.msra.mxu0 0.0
  %1805 = vmatprep.subr.mxu0 0.0
  %1806 = vmatpush1.msra.mxu0 0.0
  %1807 = vmatprep.subr.mxu0 0.0
  %1808 = vmatpush1.msra.mxu0 0.0
  %1809 = vmatprep.subr.mxu0 0.0
  %1810 = vmatpush1.msra.mxu0 0.0
  %1811 = vmatprep.subr.mxu0 0.0
  %1812 = vmatpush1.msra.mxu0 0.0
  %1813 = vmatprep.subr.mxu0 0.0
  %1814 = vmatpush1.msra.mxu0 0.0
  %1815 = vmatprep.subr.mxu0 0.0
  %1816 = vmatpush1.msra.mxu0 0.0
  %1817 = vmatprep.subr.mxu0 0.0
  %1818 = vmatpush1.msra.mxu0 0.0
  %1819 = vmatprep.subr.mxu0 0.0
  %1820 = vmatpush1.msra.mxu0 0.0
  %1821 = vmatprep.subr.mxu0 0.0
  %1822 = vmatpush1.msra.mxu0 0.0
  %1823 = vmatprep.subr.mxu0 0.0
  %1824 = vmatpush1.msra.mxu0 0.0
  %1825 = vmatprep.subr.mxu0 0.0
  %1826 = vmatpush1.msra.mxu0 0.0
  %1827 = vmatprep.subr.mxu0 0.0
  %1828 = vmatpush1.msra.mxu0 0.0
  %1829 = vmatprep.subr.mxu0 0.0
  %1830 = vmatpush1.msra.mxu0 0.0
  %1831 = vmatprep.subr.mxu0 0.0
  %1832 = vmatpush1.msra.mxu0 0.0
  %1833 = vmatprep.subr.mxu0 0.0
  %1834 = vmatpush1.msra.mxu0 0.0
  %1835 = vmatprep.subr.mxu0 0.0
  %1836 = vmatpush1.msra.mxu0 0.0
  %1837 = vmatprep.subr.mxu0 0.0
  %1838 = vmatpush1.msra.mxu0 0.0
  %1839 = vmatprep.subr.mxu0 0.0
  %1840 = vmatpush1.msra.mxu0 0.0
  %1841 = vmatprep.subr.mxu0 0.0
  %1842 = vmatpush1.msra.mxu0 0.0
  %1843 = vmatprep.subr.mxu0 0.0
  %1844 = vmatpush1.msra.mxu0 0.0
  %1845 = vmatprep.subr.mxu0 0.0
  %1846 = vmatpush1.msra.mxu0 0.0
  %1847 = vmatprep.subr.mxu0 0.0
  %1848 = vmatpush1.msra.mxu0 0.0
  %1849 = vmatprep.subr.mxu0 0.0
  %1850 = vmatpush1.msra.mxu0 0.0
  %1851 = vmatprep.subr.mxu0 0.0
  %1852 = vmatpush1.msra.mxu0 0.0
  %1853 = vmatprep.subr.mxu0 0.0
  %1854 = vmatpush1.msra.mxu0 0.0
  %1855 = vmatprep.mubr.f32.mxu0 0.0
  %1856 = vmatmul.mubr.f32.gmra.mrb[0].mxu0 %v1789
  %v1857 = vpop.f32.mrb[0].mxu0
  %v1858 = vadd.f32 %v1783, %v1857
  %v1859 = vpop.f32.mrb[0].mxu0
  %1860 = vdwg.mxu0
  %v1861 = vadd.f32 %v1858, %v94
  %v1862 = vxor.u32 %v1861, 2147483648
  %v1863 = vmul.f32 %v1862, 1.442695
  %v1864 = vpow.pop %v1863
  %v1865 = vadd.f32 %v1864, 1.0
  %v1866 = vrcp.pop %v1865
  %v1867 = vmul.f32 1.0, %v1866
  %v1868 = vtanh.pop %v1861
  %v1869 = vmul.f32 %v1867, %v1609
  %1871 = vrot.lane.b32.xlu0 %v1868, 64
  %v1872 = vpop.permute.xlu0 %1871
  %v1874 = vmul.f32 %v1867, %v1872
  %1876 = vrot.lane.b32.xlu0 %v1874, 32
  %v1877 = vpop.permute.xlu0 %1876
  %v1879 = vadd.f32 %v1869, %v1877
  %v1880 = vtanh.pop %v1879
  %1882 = vrot.lane.b32.xlu0 %v1880, 64
  %v1883 = vpop.permute.xlu0 %1882
  %v1885 = vmul.f32 %v1867, %v1883
  %1886 = vmatprep.subr.mxu0 0.0
  %1887 = vmatpush1.msra.mxu0 %v61
  %1888 = vmatprep.subr.mxu0 0.0
  %1889 = vmatpush1.msra.mxu0 %v62
  %1890 = vmatprep.subr.mxu0 0.0
  %1891 = vmatpush1.msra.mxu0 %v63
  %1892 = vmatprep.subr.mxu0 0.0
  %1893 = vmatpush1.msra.mxu0 %v64
  %1894 = vmatprep.subr.mxu0 0.0
  %1895 = vmatpush1.msra.mxu0 0.0
  %1896 = vmatprep.subr.mxu0 0.0
  %1897 = vmatpush1.msra.mxu0 0.0
  %1898 = vmatprep.subr.mxu0 0.0
  %1899 = vmatpush1.msra.mxu0 0.0
  %1900 = vmatprep.subr.mxu0 0.0
  %1901 = vmatpush1.msra.mxu0 0.0
  %1902 = vmatprep.subr.mxu0 0.0
  %1903 = vmatpush1.msra.mxu0 0.0
  %1904 = vmatprep.subr.mxu0 0.0
  %1905 = vmatpush1.msra.mxu0 0.0
  %1906 = vmatprep.subr.mxu0 0.0
  %1907 = vmatpush1.msra.mxu0 0.0
  %1908 = vmatprep.subr.mxu0 0.0
  %1909 = vmatpush1.msra.mxu0 0.0
  %1910 = vmatprep.subr.mxu0 0.0
  %1911 = vmatpush1.msra.mxu0 0.0
  %1912 = vmatprep.subr.mxu0 0.0
  %1913 = vmatpush1.msra.mxu0 0.0
  %1914 = vmatprep.subr.mxu0 0.0
  %1915 = vmatpush1.msra.mxu0 0.0
  %1916 = vmatprep.subr.mxu0 0.0
  %1917 = vmatpush1.msra.mxu0 0.0
  %1918 = vmatprep.subr.mxu0 0.0
  %1919 = vmatpush1.msra.mxu0 0.0
  %1920 = vmatprep.subr.mxu0 0.0
  %1921 = vmatpush1.msra.mxu0 0.0
  %1922 = vmatprep.subr.mxu0 0.0
  %1923 = vmatpush1.msra.mxu0 0.0
  %1924 = vmatprep.subr.mxu0 0.0
  %1925 = vmatpush1.msra.mxu0 0.0
  %1926 = vmatprep.subr.mxu0 0.0
  %1927 = vmatpush1.msra.mxu0 0.0
  %1928 = vmatprep.subr.mxu0 0.0
  %1929 = vmatpush1.msra.mxu0 0.0
  %1930 = vmatprep.subr.mxu0 0.0
  %1931 = vmatpush1.msra.mxu0 0.0
  %1932 = vmatprep.subr.mxu0 0.0
  %1933 = vmatpush1.msra.mxu0 0.0
  %1934 = vmatprep.subr.mxu0 0.0
  %1935 = vmatpush1.msra.mxu0 0.0
  %1936 = vmatprep.subr.mxu0 0.0
  %1937 = vmatpush1.msra.mxu0 0.0
  %1938 = vmatprep.subr.mxu0 0.0
  %1939 = vmatpush1.msra.mxu0 0.0
  %1940 = vmatprep.subr.mxu0 0.0
  %1941 = vmatpush1.msra.mxu0 0.0
  %1942 = vmatprep.subr.mxu0 0.0
  %1943 = vmatpush1.msra.mxu0 0.0
  %1944 = vmatprep.subr.mxu0 0.0
  %1945 = vmatpush1.msra.mxu0 0.0
  %1946 = vmatprep.subr.mxu0 0.0
  %1947 = vmatpush1.msra.mxu0 0.0
  %1948 = vmatprep.subr.mxu0 0.0
  %1949 = vmatpush1.msra.mxu0 0.0
  %1950 = vmatprep.mubr.f32.mxu0 0.0
  %1951 = vmatmul.mubr.f32.gmra.mrb[0].mxu0 %v1789
  %v1952 = vpop.f32.mrb[0].mxu0
  %v1953 = vadd.f32 0.0, %v1952
  %v1954 = vpop.f32.mrb[0].mxu0
  %1955 = vdwg.mxu0
  %v1956 = vadd.f32 %v259, %v1953
  %v1957 = vxor.u32 %v1956, 2147483648
  %v1958 = vmul.f32 %v1957, 1.442695
  %v1959 = vpow.pop %v1958
  %v1960 = vadd.f32 %v1959, 1.0
  %v1961 = vrcp.pop %v1960
  %v1962 = vmul.f32 1.0, %v1961
  %v1963 = vtanh.pop %v1956
  %v1964 = vmul.f32 %v1962, %v1704
  %1966 = vrot.lane.b32.xlu0 %v1963, 64
  %v1967 = vpop.permute.xlu0 %1966
  %v1969 = vmul.f32 %v1962, %v1967
  %1971 = vrot.lane.b32.xlu0 %v1969, 32
  %v1972 = vpop.permute.xlu0 %1971
  %v1974 = vadd.f32 %v1964, %v1972
  %v1975 = vtanh.pop %v1974
  %1977 = vrot.lane.b32.xlu0 %v1975, 64
  %v1978 = vpop.permute.xlu0 %1977
  %v1980 = vmul.f32 %v1962, %v1978
  %1982 = vrot.lane.b32.xlu0 %v1885, 32
  %v1983 = vpop.permute.xlu0 %1982
  %v1984 = vsel %vm267, %v1983, 0
  %1986 = vmatprep.subr.mxu0 0.0
  %1987 = vmatpush1.msra.mxu0 %v69
  %1988 = vmatprep.subr.mxu0 0.0
  %1989 = vmatpush1.msra.mxu0 %v70
  %1990 = vmatprep.subr.mxu0 0.0
  %1991 = vmatpush1.msra.mxu0 %v71
  %1992 = vmatprep.subr.mxu0 0.0
  %1993 = vmatpush1.msra.mxu0 %v72
  %1994 = vmatprep.subr.mxu0 0.0
  %1995 = vmatpush1.msra.mxu0 0.0
  %1996 = vmatprep.subr.mxu0 0.0
  %1997 = vmatpush1.msra.mxu0 0.0
  %1998 = vmatprep.subr.mxu0 0.0
  %1999 = vmatpush1.msra.mxu0 0.0
  %2000 = vmatprep.subr.mxu0 0.0
  %2001 = vmatpush1.msra.mxu0 0.0
  %2002 = vmatprep.subr.mxu0 0.0
  %2003 = vmatpush1.msra.mxu0 0.0
  %2004 = vmatprep.subr.mxu0 0.0
  %2005 = vmatpush1.msra.mxu0 0.0
  %2006 = vmatprep.subr.mxu0 0.0
  %2007 = vmatpush1.msra.mxu0 0.0
  %2008 = vmatprep.subr.mxu0 0.0
  %2009 = vmatpush1.msra.mxu0 0.0
  %2010 = vmatprep.subr.mxu0 0.0
  %2011 = vmatpush1.msra.mxu0 0.0
  %2012 = vmatprep.subr.mxu0 0.0
  %2013 = vmatpush1.msra.mxu0 0.0
  %2014 = vmatprep.subr.mxu0 0.0
  %2015 = vmatpush1.msra.mxu0 0.0
  %2016 = vmatprep.subr.mxu0 0.0
  %2017 = vmatpush1.msra.mxu0 0.0
  %2018 = vmatprep.subr.mxu0 0.0
  %2019 = vmatpush1.msra.mxu0 0.0
  %2020 = vmatprep.subr.mxu0 0.0
  %2021 = vmatpush1.msra.mxu0 0.0
  %2022 = vmatprep.subr.mxu0 0.0
  %2023 = vmatpush1.msra.mxu0 0.0
  %2024 = vmatprep.subr.mxu0 0.0
  %2025 = vmatpush1.msra.mxu0 0.0
  %2026 = vmatprep.subr.mxu0 0.0
  %2027 = vmatpush1.msra.mxu0 0.0
  %2028 = vmatprep.subr.mxu0 0.0
  %2029 = vmatpush1.msra.mxu0 0.0
  %2030 = vmatprep.subr.mxu0 0.0
  %2031 = vmatpush1.msra.mxu0 0.0
  %2032 = vmatprep.subr.mxu0 0.0
  %2033 = vmatpush1.msra.mxu0 0.0
  %2034 = vmatprep.subr.mxu0 0.0
  %2035 = vmatpush1.msra.mxu0 0.0
  %2036 = vmatprep.subr.mxu0 0.0
  %2037 = vmatpush1.msra.mxu0 0.0
  %2038 = vmatprep.subr.mxu0 0.0
  %2039 = vmatpush1.msra.mxu0 0.0
  %2040 = vmatprep.subr.mxu0 0.0
  %2041 = vmatpush1.msra.mxu0 0.0
  %2042 = vmatprep.subr.mxu0 0.0
  %2043 = vmatpush1.msra.mxu0 0.0
  %2044 = vmatprep.subr.mxu0 0.0
  %2045 = vmatpush1.msra.mxu0 0.0
  %2046 = vmatprep.subr.mxu0 0.0
  %2047 = vmatpush1.msra.mxu0 0.0
  %2048 = vmatprep.subr.mxu0 0.0
  %2049 = vmatpush1.msra.mxu0 0.0
  %2050 = vmatprep.mubr.f32.mxu0 0.0
  %2051 = vmatmul.mubr.f32.gmra.mrb[0].mxu0 %v1984
  %v2052 = vpop.f32.mrb[0].mxu0
  %v2053 = vadd.f32 0.0, %v2052
  %v2054 = vpop.f32.mrb[0].mxu0
  %2055 = vdwg.mxu0
  %2057 = vrot.lane.b32.xlu0 %v1980, 32
  %v2058 = vpop.permute.xlu0 %2057
  %v2059 = vsel %vm267, %v2058, 0
  %2061 = vmatprep.subr.mxu0 0.0
  %2062 = vmatpush1.msra.mxu0 %v65
  %2063 = vmatprep.subr.mxu0 0.0
  %2064 = vmatpush1.msra.mxu0 %v66
  %2065 = vmatprep.subr.mxu0 0.0
  %2066 = vmatpush1.msra.mxu0 %v67
  %2067 = vmatprep.subr.mxu0 0.0
  %2068 = vmatpush1.msra.mxu0 %v68
  %2069 = vmatprep.subr.mxu0 0.0
  %2070 = vmatpush1.msra.mxu0 0.0
  %2071 = vmatprep.subr.mxu0 0.0
  %2072 = vmatpush1.msra.mxu0 0.0
  %2073 = vmatprep.subr.mxu0 0.0
  %2074 = vmatpush1.msra.mxu0 0.0
  %2075 = vmatprep.subr.mxu0 0.0
  %2076 = vmatpush1.msra.mxu0 0.0
  %2077 = vmatprep.subr.mxu0 0.0
  %2078 = vmatpush1.msra.mxu0 0.0
  %2079 = vmatprep.subr.mxu0 0.0
  %2080 = vmatpush1.msra.mxu0 0.0
  %2081 = vmatprep.subr.mxu0 0.0
  %2082 = vmatpush1.msra.mxu0 0.0
  %2083 = vmatprep.subr.mxu0 0.0
  %2084 = vmatpush1.msra.mxu0 0.0
  %2085 = vmatprep.subr.mxu0 0.0
  %2086 = vmatpush1.msra.mxu0 0.0
  %2087 = vmatprep.subr.mxu0 0.0
  %2088 = vmatpush1.msra.mxu0 0.0
  %2089 = vmatprep.subr.mxu0 0.0
  %2090 = vmatpush1.msra.mxu0 0.0
  %2091 = vmatprep.subr.mxu0 0.0
  %2092 = vmatpush1.msra.mxu0 0.0
  %2093 = vmatprep.subr.mxu0 0.0
  %2094 = vmatpush1.msra.mxu0 0.0
  %2095 = vmatprep.subr.mxu0 0.0
  %2096 = vmatpush1.msra.mxu0 0.0
  %2097 = vmatprep.subr.mxu0 0.0
  %2098 = vmatpush1.msra.mxu0 0.0
  %2099 = vmatprep.subr.mxu0 0.0
  %2100 = vmatpush1.msra.mxu0 0.0
  %2101 = vmatprep.subr.mxu0 0.0
  %2102 = vmatpush1.msra.mxu0 0.0
  %2103 = vmatprep.subr.mxu0 0.0
  %2104 = vmatpush1.msra.mxu0 0.0
  %2105 = vmatprep.subr.mxu0 0.0
  %2106 = vmatpush1.msra.mxu0 0.0
  %2107 = vmatprep.subr.mxu0 0.0
  %2108 = vmatpush1.msra.mxu0 0.0
  %2109 = vmatprep.subr.mxu0 0.0
  %2110 = vmatpush1.msra.mxu0 0.0
  %2111 = vmatprep.subr.mxu0 0.0
  %2112 = vmatpush1.msra.mxu0 0.0
  %2113 = vmatprep.subr.mxu0 0.0
  %2114 = vmatpush1.msra.mxu0 0.0
  %2115 = vmatprep.subr.mxu0 0.0
  %2116 = vmatpush1.msra.mxu0 0.0
  %2117 = vmatprep.subr.mxu0 0.0
  %2118 = vmatpush1.msra.mxu0 0.0
  %2119 = vmatprep.subr.mxu0 0.0
  %2120 = vmatpush1.msra.mxu0 0.0
  %2121 = vmatprep.subr.mxu0 0.0
  %2122 = vmatpush1.msra.mxu0 0.0
  %2123 = vmatprep.subr.mxu0 0.0
  %2124 = vmatpush1.msra.mxu0 0.0
  %2125 = vmatprep.mubr.f32.mxu0 0.0
  %2126 = vmatmul.mubr.f32.gmra.mrb[0].mxu0 %v2059
  %v2127 = vpop.f32.mrb[0].mxu0
  %v2128 = vadd.f32 %v2053, %v2127
  %v2129 = vpop.f32.mrb[0].mxu0
  %2130 = vdwg.mxu0
  %v2131 = vadd.f32 %v2128, %v94
  %v2132 = vxor.u32 %v2131, 2147483648
  %v2133 = vmul.f32 %v2132, 1.442695
  %v2134 = vpow.pop %v2133
  %v2135 = vadd.f32 %v2134, 1.0
  %v2136 = vrcp.pop %v2135
  %v2137 = vmul.f32 1.0, %v2136
  %v2138 = vtanh.pop %v2131
  %v2139 = vmul.f32 %v2137, %v1879
  %2141 = vrot.lane.b32.xlu0 %v2138, 64
  %v2142 = vpop.permute.xlu0 %2141
  %v2144 = vmul.f32 %v2137, %v2142
  %2146 = vrot.lane.b32.xlu0 %v2144, 32
  %v2147 = vpop.permute.xlu0 %2146
  %v2149 = vadd.f32 %v2139, %v2147
  %v2150 = vtanh.pop %v2149
  %2152 = vrot.lane.b32.xlu0 %v2150, 64
  %v2153 = vpop.permute.xlu0 %2152
  %v2155 = vmul.f32 %v2137, %v2153
  %2156 = vmatprep.subr.mxu0 0.0
  %2157 = vmatpush1.msra.mxu0 %v61
  %2158 = vmatprep.subr.mxu0 0.0
  %2159 = vmatpush1.msra.mxu0 %v62
  %2160 = vmatprep.subr.mxu0 0.0
  %2161 = vmatpush1.msra.mxu0 %v63
  %2162 = vmatprep.subr.mxu0 0.0
  %2163 = vmatpush1.msra.mxu0 %v64
  %2164 = vmatprep.subr.mxu0 0.0
  %2165 = vmatpush1.msra.mxu0 0.0
  %2166 = vmatprep.subr.mxu0 0.0
  %2167 = vmatpush1.msra.mxu0 0.0
  %2168 = vmatprep.subr.mxu0 0.0
  %2169 = vmatpush1.msra.mxu0 0.0
  %2170 = vmatprep.subr.mxu0 0.0
  %2171 = vmatpush1.msra.mxu0 0.0
  %2172 = vmatprep.subr.mxu0 0.0
  %2173 = vmatpush1.msra.mxu0 0.0
  %2174 = vmatprep.subr.mxu0 0.0
  %2175 = vmatpush1.msra.mxu0 0.0
  %2176 = vmatprep.subr.mxu0 0.0
  %2177 = vmatpush1.msra.mxu0 0.0
  %2178 = vmatprep.subr.mxu0 0.0
  %2179 = vmatpush1.msra.mxu0 0.0
  %2180 = vmatprep.subr.mxu0 0.0
  %2181 = vmatpush1.msra.mxu0 0.0
  %2182 = vmatprep.subr.mxu0 0.0
  %2183 = vmatpush1.msra.mxu0 0.0
  %2184 = vmatprep.subr.mxu0 0.0
  %2185 = vmatpush1.msra.mxu0 0.0
  %2186 = vmatprep.subr.mxu0 0.0
  %2187 = vmatpush1.msra.mxu0 0.0
  %2188 = vmatprep.subr.mxu0 0.0
  %2189 = vmatpush1.msra.mxu0 0.0
  %2190 = vmatprep.subr.mxu0 0.0
  %2191 = vmatpush1.msra.mxu0 0.0
  %2192 = vmatprep.subr.mxu0 0.0
  %2193 = vmatpush1.msra.mxu0 0.0
  %2194 = vmatprep.subr.mxu0 0.0
  %2195 = vmatpush1.msra.mxu0 0.0
  %2196 = vmatprep.subr.mxu0 0.0
  %2197 = vmatpush1.msra.mxu0 0.0
  %2198 = vmatprep.subr.mxu0 0.0
  %2199 = vmatpush1.msra.mxu0 0.0
  %2200 = vmatprep.subr.mxu0 0.0
  %2201 = vmatpush1.msra.mxu0 0.0
  %2202 = vmatprep.subr.mxu0 0.0
  %2203 = vmatpush1.msra.mxu0 0.0
  %2204 = vmatprep.subr.mxu0 0.0
  %2205 = vmatpush1.msra.mxu0 0.0
  %2206 = vmatprep.subr.mxu0 0.0
  %2207 = vmatpush1.msra.mxu0 0.0
  %2208 = vmatprep.subr.mxu0 0.0
  %2209 = vmatpush1.msra.mxu0 0.0
  %2210 = vmatprep.subr.mxu0 0.0
  %2211 = vmatpush1.msra.mxu0 0.0
  %2212 = vmatprep.subr.mxu0 0.0
  %2213 = vmatpush1.msra.mxu0 0.0
  %2214 = vmatprep.subr.mxu0 0.0
  %2215 = vmatpush1.msra.mxu0 0.0
  %2216 = vmatprep.subr.mxu0 0.0
  %2217 = vmatpush1.msra.mxu0 0.0
  %2218 = vmatprep.subr.mxu0 0.0
  %2219 = vmatpush1.msra.mxu0 0.0
  %2220 = vmatprep.mubr.f32.mxu0 0.0
  %2221 = vmatmul.mubr.f32.gmra.mrb[0].mxu0 %v2059
  %v2222 = vpop.f32.mrb[0].mxu0
  %v2223 = vadd.f32 0.0, %v2222
  %v2224 = vpop.f32.mrb[0].mxu0
  %2225 = vdwg.mxu0
  %v2226 = vadd.f32 %v264, %v2223
  %v2227 = vxor.u32 %v2226, 2147483648
  %v2228 = vmul.f32 %v2227, 1.442695
  %v2229 = vpow.pop %v2228
  %v2230 = vadd.f32 %v2229, 1.0
  %v2231 = vrcp.pop %v2230
  %v2232 = vmul.f32 1.0, %v2231
  %v2233 = vtanh.pop %v2226
  %v2234 = vmul.f32 %v2232, %v1974
  %2236 = vrot.lane.b32.xlu0 %v2233, 64
  %v2237 = vpop.permute.xlu0 %2236
  %v2239 = vmul.f32 %v2232, %v2237
  %2241 = vrot.lane.b32.xlu0 %v2239, 32
  %v2242 = vpop.permute.xlu0 %2241
  %v2244 = vadd.f32 %v2234, %v2242
  %v2245 = vtanh.pop %v2244
  %2247 = vrot.lane.b32.xlu0 %v2245, 64
  %v2248 = vpop.permute.xlu0 %2247
  %v2250 = vmul.f32 %v2232, %v2248
  %2252 = vrot.lane.b32.xlu0 %v2155, 32
  %v2253 = vpop.permute.xlu0 %2252
  %v2254 = vsel %vm267, %v2253, 0
  %2256 = vmatprep.subr.mxu0 0.0
  %2257 = vmatpush1.msra.mxu0 %v69
  %2258 = vmatprep.subr.mxu0 0.0
  %2259 = vmatpush1.msra.mxu0 %v70
  %2260 = vmatprep.subr.mxu0 0.0
  %2261 = vmatpush1.msra.mxu0 %v71
  %2262 = vmatprep.subr.mxu0 0.0
  %2263 = vmatpush1.msra.mxu0 %v72
  %2264 = vmatprep.subr.mxu0 0.0
  %2265 = vmatpush1.msra.mxu0 0.0
  %2266 = vmatprep.subr.mxu0 0.0
  %2267 = vmatpush1.msra.mxu0 0.0
  %2268 = vmatprep.subr.mxu0 0.0
  %2269 = vmatpush1.msra.mxu0 0.0
  %2270 = vmatprep.subr.mxu0 0.0
  %2271 = vmatpush1.msra.mxu0 0.0
  %2272 = vmatprep.subr.mxu0 0.0
  %2273 = vmatpush1.msra.mxu0 0.0
  %2274 = vmatprep.subr.mxu0 0.0
  %2275 = vmatpush1.msra.mxu0 0.0
  %2276 = vmatprep.subr.mxu0 0.0
  %2277 = vmatpush1.msra.mxu0 0.0
  %2278 = vmatprep.subr.mxu0 0.0
  %2279 = vmatpush1.msra.mxu0 0.0
  %2280 = vmatprep.subr.mxu0 0.0
  %2281 = vmatpush1.msra.mxu0 0.0
  %2282 = vmatprep.subr.mxu0 0.0
  %2283 = vmatpush1.msra.mxu0 0.0
  %2284 = vmatprep.subr.mxu0 0.0
  %2285 = vmatpush1.msra.mxu0 0.0
  %2286 = vmatprep.subr.mxu0 0.0
  %2287 = vmatpush1.msra.mxu0 0.0
  %2288 = vmatprep.subr.mxu0 0.0
  %2289 = vmatpush1.msra.mxu0 0.0
  %2290 = vmatprep.subr.mxu0 0.0
  %2291 = vmatpush1.msra.mxu0 0.0
  %2292 = vmatprep.subr.mxu0 0.0
  %2293 = vmatpush1.msra.mxu0 0.0
  %2294 = vmatprep.subr.mxu0 0.0
  %2295 = vmatpush1.msra.mxu0 0.0
  %2296 = vmatprep.subr.mxu0 0.0
  %2297 = vmatpush1.msra.mxu0 0.0
  %2298 = vmatprep.subr.mxu0 0.0
  %2299 = vmatpush1.msra.mxu0 0.0
  %2300 = vmatprep.subr.mxu0 0.0
  %2301 = vmatpush1.msra.mxu0 0.0
  %2302 = vmatprep.subr.mxu0 0.0
  %2303 = vmatpush1.msra.mxu0 0.0
  %2304 = vmatprep.subr.mxu0 0.0
  %2305 = vmatpush1.msra.mxu0 0.0
  %2306 = vmatprep.subr.mxu0 0.0
  %2307 = vmatpush1.msra.mxu0 0.0
  %2308 = vmatprep.subr.mxu0 0.0
  %2309 = vmatpush1.msra.mxu0 0.0
  %2310 = vmatprep.subr.mxu0 0.0
  %2311 = vmatpush1.msra.mxu0 0.0
  %2312 = vmatprep.subr.mxu0 0.0
  %2313 = vmatpush1.msra.mxu0 0.0
  %2314 = vmatprep.subr.mxu0 0.0
  %2315 = vmatpush1.msra.mxu0 0.0
  %2316 = vmatprep.subr.mxu0 0.0
  %2317 = vmatpush1.msra.mxu0 0.0
  %2318 = vmatprep.subr.mxu0 0.0
  %2319 = vmatpush1.msra.mxu0 0.0
  %2320 = vmatprep.mubr.f32.mxu0 0.0
  %2321 = vmatmul.mubr.f32.gmra.mrb[0].mxu0 %v2254
  %v2322 = vpop.f32.mrb[0].mxu0
  %v2323 = vadd.f32 0.0, %v2322
  %v2324 = vpop.f32.mrb[0].mxu0
  %2325 = vdwg.mxu0
  %2327 = vrot.lane.b32.xlu0 %v2250, 32
  %v2328 = vpop.permute.xlu0 %2327
  %v2329 = vsel %vm267, %v2328, 0
  %2331 = vmatprep.subr.mxu0 0.0
  %2332 = vmatpush1.msra.mxu0 %v65
  %2333 = vmatprep.subr.mxu0 0.0
  %2334 = vmatpush1.msra.mxu0 %v66
  %2335 = vmatprep.subr.mxu0 0.0
  %2336 = vmatpush1.msra.mxu0 %v67
  %2337 = vmatprep.subr.mxu0 0.0
  %2338 = vmatpush1.msra.mxu0 %v68
  %2339 = vmatprep.subr.mxu0 0.0
  %2340 = vmatpush1.msra.mxu0 0.0
  %2341 = vmatprep.subr.mxu0 0.0
  %2342 = vmatpush1.msra.mxu0 0.0
  %2343 = vmatprep.subr.mxu0 0.0
  %2344 = vmatpush1.msra.mxu0 0.0
  %2345 = vmatprep.subr.mxu0 0.0
  %2346 = vmatpush1.msra.mxu0 0.0
  %2347 = vmatprep.subr.mxu0 0.0
  %2348 = vmatpush1.msra.mxu0 0.0
  %2349 = vmatprep.subr.mxu0 0.0
  %2350 = vmatpush1.msra.mxu0 0.0
  %2351 = vmatprep.subr.mxu0 0.0
  %2352 = vmatpush1.msra.mxu0 0.0
  %2353 = vmatprep.subr.mxu0 0.0
  %2354 = vmatpush1.msra.mxu0 0.0
  %2355 = vmatprep.subr.mxu0 0.0
  %2356 = vmatpush1.msra.mxu0 0.0
  %2357 = vmatprep.subr.mxu0 0.0
  %2358 = vmatpush1.msra.mxu0 0.0
  %2359 = vmatprep.subr.mxu0 0.0
  %2360 = vmatpush1.msra.mxu0 0.0
  %2361 = vmatprep.subr.mxu0 0.0
  %2362 = vmatpush1.msra.mxu0 0.0
  %2363 = vmatprep.subr.mxu0 0.0
  %2364 = vmatpush1.msra.mxu0 0.0
  %2365 = vmatprep.subr.mxu0 0.0
  %2366 = vmatpush1.msra.mxu0 0.0
  %2367 = vmatprep.subr.mxu0 0.0
  %2368 = vmatpush1.msra.mxu0 0.0
  %2369 = vmatprep.subr.mxu0 0.0
  %2370 = vmatpush1.msra.mxu0 0.0
  %2371 = vmatprep.subr.mxu0 0.0
  %2372 = vmatpush1.msra.mxu0 0.0
  %2373 = vmatprep.subr.mxu0 0.0
  %2374 = vmatpush1.msra.mxu0 0.0
  %2375 = vmatprep.subr.mxu0 0.0
  %2376 = vmatpush1.msra.mxu0 0.0
  %2377 = vmatprep.subr.mxu0 0.0
  %2378 = vmatpush1.msra.mxu0 0.0
  %2379 = vmatprep.subr.mxu0 0.0
  %2380 = vmatpush1.msra.mxu0 0.0
  %2381 = vmatprep.subr.mxu0 0.0
  %2382 = vmatpush1.msra.mxu0 0.0
  %2383 = vmatprep.subr.mxu0 0.0
  %2384 = vmatpush1.msra.mxu0 0.0
  %2385 = vmatprep.subr.mxu0 0.0
  %2386 = vmatpush1.msra.mxu0 0.0
  %2387 = vmatprep.subr.mxu0 0.0
  %2388 = vmatpush1.msra.mxu0 0.0
  %2389 = vmatprep.subr.mxu0 0.0
  %2390 = vmatpush1.msra.mxu0 0.0
  %2391 = vmatprep.subr.mxu0 0.0
  %2392 = vmatpush1.msra.mxu0 0.0
  %2393 = vmatprep.subr.mxu0 0.0
  %2394 = vmatpush1.msra.mxu0 0.0
  %2395 = vmatprep.mubr.f32.mxu0 0.0
  %2396 = vmatmul.mubr.f32.gmra.mrb[0].mxu0 %v2329
  %v2397 = vpop.f32.mrb[0].mxu0
  %v2398 = vadd.f32 %v2323, %v2397
  %v2399 = vpop.f32.mrb[0].mxu0
  %2400 = vdwg.mxu0
  %v2401 = vadd.f32 %v2398, %v94
  %v2402 = vxor.u32 %v2401, 2147483648
  %v2403 = vmul.f32 %v2402, 1.442695
  %v2404 = vpow.pop %v2403
  %v2405 = vadd.f32 %v2404, 1.0
  %v2406 = vrcp.pop %v2405
  %v2407 = vmul.f32 1.0, %v2406
  %v2408 = vtanh.pop %v2401
  %v2409 = vmul.f32 %v2407, %v2149
  %2411 = vrot.lane.b32.xlu0 %v2408, 64
  %v2412 = vpop.permute.xlu0 %2411
  %v2414 = vmul.f32 %v2407, %v2412
  %2416 = vrot.lane.b32.xlu0 %v2414, 32
  %v2417 = vpop.permute.xlu0 %2416
  %v2419 = vadd.f32 %v2409, %v2417
  %v2420 = vtanh.pop %v2419
  %2422 = vrot.lane.b32.xlu0 %v2420, 64
  %v2423 = vpop.permute.xlu0 %2422
  %v2425 = vmul.f32 %v2407, %v2423
  %v2426 = vld [vmem:[%s1] sm:$0xff]
  %v2427 = vld [vmem:[%s8] sm:$0x1]
  %2429 = vset.pattern.permute.xlu0 0
  %2430 = vperm.xlu0 %2429, %v2426
  %v2431 = vpop.permute.xlu0 %2430
  %v2434 = vlaneseq
  %v2435 = vshrl.u32 %v2434, 7
  %v2436 = vsub.s32 0, %v2435
  %v2437 = vrot.slane %v2427, %v2436
  %v2439 = vmul.f32 %v2431, %v2437
  %2440 = vmatprep.subr.mxu0 0.0
  %2441 = vmatpush1.msra.mxu0 %v73
  %2442 = vmatprep.subr.mxu0 0.0
  %2443 = vmatpush1.msra.mxu0 %v74
  %2444 = vmatprep.subr.mxu0 0.0
  %2445 = vmatpush1.msra.mxu0 %v75
  %2446 = vmatprep.subr.mxu0 0.0
  %2447 = vmatpush1.msra.mxu0 %v76
  %2448 = vmatprep.subr.mxu0 0.0
  %2449 = vmatpush1.msra.mxu0 0.0
  %2450 = vmatprep.subr.mxu0 0.0
  %2451 = vmatpush1.msra.mxu0 0.0
  %2452 = vmatprep.subr.mxu0 0.0
  %2453 = vmatpush1.msra.mxu0 0.0
  %2454 = vmatprep.subr.mxu0 0.0
  %2455 = vmatpush1.msra.mxu0 0.0
  %2456 = vmatprep.subr.mxu0 0.0
  %2457 = vmatpush1.msra.mxu0 0.0
  %2458 = vmatprep.subr.mxu0 0.0
  %2459 = vmatpush1.msra.mxu0 0.0
  %2460 = vmatprep.subr.mxu0 0.0
  %2461 = vmatpush1.msra.mxu0 0.0
  %2462 = vmatprep.subr.mxu0 0.0
  %2463 = vmatpush1.msra.mxu0 0.0
  %2464 = vmatprep.subr.mxu0 0.0
  %2465 = vmatpush1.msra.mxu0 0.0
  %2466 = vmatprep.subr.mxu0 0.0
  %2467 = vmatpush1.msra.mxu0 0.0
  %2468 = vmatprep.subr.mxu0 0.0
  %2469 = vmatpush1.msra.mxu0 0.0
  %2470 = vmatprep.subr.mxu0 0.0
  %2471 = vmatpush1.msra.mxu0 0.0
  %2472 = vmatprep.subr.mxu0 0.0
  %2473 = vmatpush1.msra.mxu0 0.0
  %2474 = vmatprep.subr.mxu0 0.0
  %2475 = vmatpush1.msra.mxu0 0.0
  %2476 = vmatprep.subr.mxu0 0.0
  %2477 = vmatpush1.msra.mxu0 0.0
  %2478 = vmatprep.subr.mxu0 0.0
  %2479 = vmatpush1.msra.mxu0 0.0
  %2480 = vmatprep.subr.mxu0 0.0
  %2481 = vmatpush1.msra.mxu0 0.0
  %2482 = vmatprep.subr.mxu0 0.0
  %2483 = vmatpush1.msra.mxu0 0.0
  %2484 = vmatprep.subr.mxu0 0.0
  %2485 = vmatpush1.msra.mxu0 0.0
  %2486 = vmatprep.subr.mxu0 0.0
  %2487 = vmatpush1.msra.mxu0 0.0
  %2488 = vmatprep.subr.mxu0 0.0
  %2489 = vmatpush1.msra.mxu0 0.0
  %2490 = vmatprep.subr.mxu0 0.0
  %2491 = vmatpush1.msra.mxu0 0.0
  %2492 = vmatprep.subr.mxu0 0.0
  %2493 = vmatpush1.msra.mxu0 0.0
  %2494 = vmatprep.subr.mxu0 0.0
  %2495 = vmatpush1.msra.mxu0 0.0
  %2496 = vmatprep.subr.mxu0 0.0
  %2497 = vmatpush1.msra.mxu0 0.0
  %2498 = vmatprep.subr.mxu0 0.0
  %2499 = vmatpush1.msra.mxu0 0.0
  %2500 = vmatprep.subr.mxu0 0.0
  %2501 = vmatpush1.msra.mxu0 0.0
  %2502 = vmatprep.subr.mxu0 0.0
  %2503 = vmatpush1.msra.mxu0 0.0
  %2504 = vmatprep.mubr.f32.mxu0 0.0
  %2505 = vmatmul.mubr.f32.gmra.mrb[0].mxu0 %v2329
  %v2506 = vpop.f32.mrb[0].mxu0
  %v2507 = vadd.f32 0.0, %v2506
  %v2508 = vpop.f32.mrb[0].mxu0
  %2509 = vdwg.mxu0
  %v2510 = vadd.f32 %v2439, %v2507
  %v2511 = vadd.f32 %v2510, %v101
  %v2512 = vxor.u32 %v2511, 2147483648
  %v2513 = vmul.f32 %v2512, 1.442695
  %v2514 = vpow.pop %v2513
  %v2515 = vadd.f32 %v2514, 1.0
  %v2516 = vrcp.pop %v2515
  %v2517 = vmul.f32 1.0, %v2516
  %v2518 = vtanh.pop %v2511
  %v2519 = vmul.f32 %v2517, %v2244
  %2521 = vrot.lane.b32.xlu0 %v2518, 64
  %v2522 = vpop.permute.xlu0 %2521
  %v2524 = vmul.f32 %v2517, %v2522
  %2526 = vrot.lane.b32.xlu0 %v2524, 32
  %v2527 = vpop.permute.xlu0 %2526
  %v2529 = vadd.f32 %v2519, %v2527
  %v2530 = vtanh.pop %v2529
  %2532 = vrot.lane.b32.xlu0 %v2530, 64
  %v2533 = vpop.permute.xlu0 %2532
  %v2535 = vmul.f32 %v2517, %v2533
  %2537 = vrot.lane.b32.xlu0 %v2425, 32
  %v2538 = vpop.permute.xlu0 %2537
  %v2539 = vsel %vm267, %v2538, 0
  %2541 = vmatprep.subr.mxu0 0.0
  %2542 = vmatpush1.msra.mxu0 %v85
  %2543 = vmatprep.subr.mxu0 0.0
  %2544 = vmatpush1.msra.mxu0 %v86
  %2545 = vmatprep.subr.mxu0 0.0
  %2546 = vmatpush1.msra.mxu0 %v87
  %2547 = vmatprep.subr.mxu0 0.0
  %2548 = vmatpush1.msra.mxu0 %v88
  %2549 = vmatprep.subr.mxu0 0.0
  %2550 = vmatpush1.msra.mxu0 0.0
  %2551 = vmatprep.subr.mxu0 0.0
  %2552 = vmatpush1.msra.mxu0 0.0
  %2553 = vmatprep.subr.mxu0 0.0
  %2554 = vmatpush1.msra.mxu0 0.0
  %2555 = vmatprep.subr.mxu0 0.0
  %2556 = vmatpush1.msra.mxu0 0.0
  %2557 = vmatprep.subr.mxu0 0.0
  %2558 = vmatpush1.msra.mxu0 0.0
  %2559 = vmatprep.subr.mxu0 0.0
  %2560 = vmatpush1.msra.mxu0 0.0
  %2561 = vmatprep.subr.mxu0 0.0
  %2562 = vmatpush1.msra.mxu0 0.0
  %2563 = vmatprep.subr.mxu0 0.0
  %2564 = vmatpush1.msra.mxu0 0.0
  %2565 = vmatprep.subr.mxu0 0.0
  %2566 = vmatpush1.msra.mxu0 0.0
  %2567 = vmatprep.subr.mxu0 0.0
  %2568 = vmatpush1.msra.mxu0 0.0
  %2569 = vmatprep.subr.mxu0 0.0
  %2570 = vmatpush1.msra.mxu0 0.0
  %2571 = vmatprep.subr.mxu0 0.0
  %2572 = vmatpush1.msra.mxu0 0.0
  %2573 = vmatprep.subr.mxu0 0.0
  %2574 = vmatpush1.msra.mxu0 0.0
  %2575 = vmatprep.subr.mxu0 0.0
  %2576 = vmatpush1.msra.mxu0 0.0
  %2577 = vmatprep.subr.mxu0 0.0
  %2578 = vmatpush1.msra.mxu0 0.0
  %2579 = vmatprep.subr.mxu0 0.0
  %2580 = vmatpush1.msra.mxu0 0.0
  %2581 = vmatprep.subr.mxu0 0.0
  %2582 = vmatpush1.msra.mxu0 0.0
  %2583 = vmatprep.subr.mxu0 0.0
  %2584 = vmatpush1.msra.mxu0 0.0
  %2585 = vmatprep.subr.mxu0 0.0
  %2586 = vmatpush1.msra.mxu0 0.0
  %2587 = vmatprep.subr.mxu0 0.0
  %2588 = vmatpush1.msra.mxu0 0.0
  %2589 = vmatprep.subr.mxu0 0.0
  %2590 = vmatpush1.msra.mxu0 0.0
  %2591 = vmatprep.subr.mxu0 0.0
  %2592 = vmatpush1.msra.mxu0 0.0
  %2593 = vmatprep.subr.mxu0 0.0
  %2594 = vmatpush1.msra.mxu0 0.0
  %2595 = vmatprep.subr.mxu0 0.0
  %2596 = vmatpush1.msra.mxu0 0.0
  %2597 = vmatprep.subr.mxu0 0.0
  %2598 = vmatpush1.msra.mxu0 0.0
  %2599 = vmatprep.subr.mxu0 0.0
  %2600 = vmatpush1.msra.mxu0 0.0
  %2601 = vmatprep.subr.mxu0 0.0
  %2602 = vmatpush1.msra.mxu0 0.0
  %2603 = vmatprep.subr.mxu0 0.0
  %2604 = vmatpush1.msra.mxu0 0.0
  %2605 = vmatprep.mubr.f32.mxu0 0.0
  %2606 = vmatmul.mubr.f32.gmra.mrb[0].mxu0 %v2539
  %v2607 = vpop.f32.mrb[0].mxu0
  %v2608 = vadd.f32 0.0, %v2607
  %v2609 = vpop.f32.mrb[0].mxu0
  %2610 = vdwg.mxu0
  %2612 = vrot.lane.b32.xlu0 %v2535, 32
  %v2613 = vpop.permute.xlu0 %2612
  %v2614 = vsel %vm267, %v2613, 0
  %2616 = vmatprep.subr.mxu0 0.0
  %2617 = vmatpush1.msra.mxu0 %v81
  %2618 = vmatprep.subr.mxu0 0.0
  %2619 = vmatpush1.msra.mxu0 %v82
  %2620 = vmatprep.subr.mxu0 0.0
  %2621 = vmatpush1.msra.mxu0 %v83
  %2622 = vmatprep.subr.mxu0 0.0
  %2623 = vmatpush1.msra.mxu0 %v84
  %2624 = vmatprep.subr.mxu0 0.0
  %2625 = vmatpush1.msra.mxu0 0.0
  %2626 = vmatprep.subr.mxu0 0.0
  %2627 = vmatpush1.msra.mxu0 0.0
  %2628 = vmatprep.subr.mxu0 0.0
  %2629 = vmatpush1.msra.mxu0 0.0
  %2630 = vmatprep.subr.mxu0 0.0
  %2631 = vmatpush1.msra.mxu0 0.0
  %2632 = vmatprep.subr.mxu0 0.0
  %2633 = vmatpush1.msra.mxu0 0.0
  %2634 = vmatprep.subr.mxu0 0.0
  %2635 = vmatpush1.msra.mxu0 0.0
  %2636 = vmatprep.subr.mxu0 0.0
  %2637 = vmatpush1.msra.mxu0 0.0
  %2638 = vmatprep.subr.mxu0 0.0
  %2639 = vmatpush1.msra.mxu0 0.0
  %2640 = vmatprep.subr.mxu0 0.0
  %2641 = vmatpush1.msra.mxu0 0.0
  %2642 = vmatprep.subr.mxu0 0.0
  %2643 = vmatpush1.msra.mxu0 0.0
  %2644 = vmatprep.subr.mxu0 0.0
  %2645 = vmatpush1.msra.mxu0 0.0
  %2646 = vmatprep.subr.mxu0 0.0
  %2647 = vmatpush1.msra.mxu0 0.0
  %2648 = vmatprep.subr.mxu0 0.0
  %2649 = vmatpush1.msra.mxu0 0.0
  %2650 = vmatprep.subr.mxu0 0.0
  %2651 = vmatpush1.msra.mxu0 0.0
  %2652 = vmatprep.subr.mxu0 0.0
  %2653 = vmatpush1.msra.mxu0 0.0
  %2654 = vmatprep.subr.mxu0 0.0
  %2655 = vmatpush1.msra.mxu0 0.0
  %2656 = vmatprep.subr.mxu0 0.0
  %2657 = vmatpush1.msra.mxu0 0.0
  %2658 = vmatprep.subr.mxu0 0.0
  %2659 = vmatpush1.msra.mxu0 0.0
  %2660 = vmatprep.subr.mxu0 0.0
  %2661 = vmatpush1.msra.mxu0 0.0
  %2662 = vmatprep.subr.mxu0 0.0
  %2663 = vmatpush1.msra.mxu0 0.0
  %2664 = vmatprep.subr.mxu0 0.0
  %2665 = vmatpush1.msra.mxu0 0.0
  %2666 = vmatprep.subr.mxu0 0.0
  %2667 = vmatpush1.msra.mxu0 0.0
  %2668 = vmatprep.subr.mxu0 0.0
  %2669 = vmatpush1.msra.mxu0 0.0
  %2670 = vmatprep.subr.mxu0 0.0
  %2671 = vmatpush1.msra.mxu0 0.0
  %2672 = vmatprep.subr.mxu0 0.0
  %2673 = vmatpush1.msra.mxu0 0.0
  %2674 = vmatprep.subr.mxu0 0.0
  %2675 = vmatpush1.msra.mxu0 0.0
  %2676 = vmatprep.subr.mxu0 0.0
  %2677 = vmatpush1.msra.mxu0 0.0
  %2678 = vmatprep.subr.mxu0 0.0
  %2679 = vmatpush1.msra.mxu0 0.0
  %2680 = vmatprep.mubr.f32.mxu0 0.0
  %2681 = vmatmul.mubr.f32.gmra.mrb[0].mxu0 %v2614
  %v2682 = vpop.f32.mrb[0].mxu0
  %v2683 = vadd.f32 %v2608, %v2682
  %v2684 = vpop.f32.mrb[0].mxu0
  %2685 = vdwg.mxu0
  %v2686 = vadd.f32 %v2683, %v115
  %v2687 = vxor.u32 %v2686, 2147483648
  %v2688 = vmul.f32 %v2687, 1.442695
  %v2689 = vpow.pop %v2688
  %v2690 = vadd.f32 %v2689, 1.0
  %v2691 = vrcp.pop %v2690
  %v2692 = vmul.f32 1.0, %v2691
  %v2693 = vtanh.pop %v2686
  %v2694 = vmul.f32 %v2692, %v2419
  %2696 = vrot.lane.b32.xlu0 %v2693, 64
  %v2697 = vpop.permute.xlu0 %2696
  %v2699 = vmul.f32 %v2692, %v2697
  %2701 = vrot.lane.b32.xlu0 %v2699, 32
  %v2702 = vpop.permute.xlu0 %2701
  %v2704 = vadd.f32 %v2694, %v2702
  %v2705 = vtanh.pop %v2704
  %2707 = vrot.lane.b32.xlu0 %v2705, 64
  %v2708 = vpop.permute.xlu0 %2707
  %v2710 = vmul.f32 %v2692, %v2708
  %2711 = vmatprep.subr.mxu0 0.0
  %2712 = vmatpush1.msra.mxu0 %v73
  %2713 = vmatprep.subr.mxu0 0.0
  %2714 = vmatpush1.msra.mxu0 %v74
  %2715 = vmatprep.subr.mxu0 0.0
  %2716 = vmatpush1.msra.mxu0 %v75
  %2717 = vmatprep.subr.mxu0 0.0
  %2718 = vmatpush1.msra.mxu0 %v76
  %2719 = vmatprep.subr.mxu0 0.0
  %2720 = vmatpush1.msra.mxu0 0.0
  %2721 = vmatprep.subr.mxu0 0.0
  %2722 = vmatpush1.msra.mxu0 0.0
  %2723 = vmatprep.subr.mxu0 0.0
  %2724 = vmatpush1.msra.mxu0 0.0
  %2725 = vmatprep.subr.mxu0 0.0
  %2726 = vmatpush1.msra.mxu0 0.0
  %2727 = vmatprep.subr.mxu0 0.0
  %2728 = vmatpush1.msra.mxu0 0.0
  %2729 = vmatprep.subr.mxu0 0.0
  %2730 = vmatpush1.msra.mxu0 0.0
  %2731 = vmatprep.subr.mxu0 0.0
  %2732 = vmatpush1.msra.mxu0 0.0
  %2733 = vmatprep.subr.mxu0 0.0
  %2734 = vmatpush1.msra.mxu0 0.0
  %2735 = vmatprep.subr.mxu0 0.0
  %2736 = vmatpush1.msra.mxu0 0.0
  %2737 = vmatprep.subr.mxu0 0.0
  %2738 = vmatpush1.msra.mxu0 0.0
  %2739 = vmatprep.subr.mxu0 0.0
  %2740 = vmatpush1.msra.mxu0 0.0
  %2741 = vmatprep.subr.mxu0 0.0
  %2742 = vmatpush1.msra.mxu0 0.0
  %2743 = vmatprep.subr.mxu0 0.0
  %2744 = vmatpush1.msra.mxu0 0.0
  %2745 = vmatprep.subr.mxu0 0.0
  %2746 = vmatpush1.msra.mxu0 0.0
  %2747 = vmatprep.subr.mxu0 0.0
  %2748 = vmatpush1.msra.mxu0 0.0
  %2749 = vmatprep.subr.mxu0 0.0
  %2750 = vmatpush1.msra.mxu0 0.0
  %2751 = vmatprep.subr.mxu0 0.0
  %2752 = vmatpush1.msra.mxu0 0.0
  %2753 = vmatprep.subr.mxu0 0.0
  %2754 = vmatpush1.msra.mxu0 0.0
  %2755 = vmatprep.subr.mxu0 0.0
  %2756 = vmatpush1.msra.mxu0 0.0
  %2757 = vmatprep.subr.mxu0 0.0
  %2758 = vmatpush1.msra.mxu0 0.0
  %2759 = vmatprep.subr.mxu0 0.0
  %2760 = vmatpush1.msra.mxu0 0.0
  %2761 = vmatprep.subr.mxu0 0.0
  %2762 = vmatpush1.msra.mxu0 0.0
  %2763 = vmatprep.subr.mxu0 0.0
  %2764 = vmatpush1.msra.mxu0 0.0
  %2765 = vmatprep.subr.mxu0 0.0
  %2766 = vmatpush1.msra.mxu0 0.0
  %2767 = vmatprep.subr.mxu0 0.0
  %2768 = vmatpush1.msra.mxu0 0.0
  %2769 = vmatprep.subr.mxu0 0.0
  %2770 = vmatpush1.msra.mxu0 0.0
  %2771 = vmatprep.subr.mxu0 0.0
  %2772 = vmatpush1.msra.mxu0 0.0
  %2773 = vmatprep.subr.mxu0 0.0
  %2774 = vmatpush1.msra.mxu0 0.0
  %2775 = vmatprep.mubr.f32.mxu0 0.0
  %2776 = vmatmul.mubr.f32.gmra.mrb[0].mxu0 %v2614
  %v2777 = vpop.f32.mrb[0].mxu0
  %v2778 = vadd.f32 0.0, %v2777
  %v2779 = vpop.f32.mrb[0].mxu0
  %2780 = vdwg.mxu0
  %2782 = vrot.lane.b32.xlu0 %v2710, 32
  %v2783 = vpop.permute.xlu0 %2782
  %v2784 = vsel %vm267, %v2783, 0
  %2786 = vmatprep.subr.mxu0 0.0
  %2787 = vmatpush1.msra.mxu0 %v77
  %2788 = vmatprep.subr.mxu0 0.0
  %2789 = vmatpush1.msra.mxu0 %v78
  %2790 = vmatprep.subr.mxu0 0.0
  %2791 = vmatpush1.msra.mxu0 %v79
  %2792 = vmatprep.subr.mxu0 0.0
  %2793 = vmatpush1.msra.mxu0 %v80
  %2794 = vmatprep.subr.mxu0 0.0
  %2795 = vmatpush1.msra.mxu0 0.0
  %2796 = vmatprep.subr.mxu0 0.0
  %2797 = vmatpush1.msra.mxu0 0.0
  %2798 = vmatprep.subr.mxu0 0.0
  %2799 = vmatpush1.msra.mxu0 0.0
  %2800 = vmatprep.subr.mxu0 0.0
  %2801 = vmatpush1.msra.mxu0 0.0
  %2802 = vmatprep.subr.mxu0 0.0
  %2803 = vmatpush1.msra.mxu0 0.0
  %2804 = vmatprep.subr.mxu0 0.0
  %2805 = vmatpush1.msra.mxu0 0.0
  %2806 = vmatprep.subr.mxu0 0.0
  %2807 = vmatpush1.msra.mxu0 0.0
  %2808 = vmatprep.subr.mxu0 0.0
  %2809 = vmatpush1.msra.mxu0 0.0
  %2810 = vmatprep.subr.mxu0 0.0
  %2811 = vmatpush1.msra.mxu0 0.0
  %2812 = vmatprep.subr.mxu0 0.0
  %2813 = vmatpush1.msra.mxu0 0.0
  %2814 = vmatprep.subr.mxu0 0.0
  %2815 = vmatpush1.msra.mxu0 0.0
  %2816 = vmatprep.subr.mxu0 0.0
  %2817 = vmatpush1.msra.mxu0 0.0
  %2818 = vmatprep.subr.mxu0 0.0
  %2819 = vmatpush1.msra.mxu0 0.0
  %2820 = vmatprep.subr.mxu0 0.0
  %2821 = vmatpush1.msra.mxu0 0.0
  %2822 = vmatprep.subr.mxu0 0.0
  %2823 = vmatpush1.msra.mxu0 0.0
  %2824 = vmatprep.subr.mxu0 0.0
  %2825 = vmatpush1.msra.mxu0 0.0
  %2826 = vmatprep.subr.mxu0 0.0
  %2827 = vmatpush1.msra.mxu0 0.0
  %2828 = vmatprep.subr.mxu0 0.0
  %2829 = vmatpush1.msra.mxu0 0.0
  %2830 = vmatprep.subr.mxu0 0.0
  %2831 = vmatpush1.msra.mxu0 0.0
  %2832 = vmatprep.subr.mxu0 0.0
  %2833 = vmatpush1.msra.mxu0 0.0
  %2834 = vmatprep.subr.mxu0 0.0
  %2835 = vmatpush1.msra.mxu0 0.0
  %2836 = vmatprep.subr.mxu0 0.0
  %2837 = vmatpush1.msra.mxu0 0.0
  %2838 = vmatprep.subr.mxu0 0.0
  %2839 = vmatpush1.msra.mxu0 0.0
  %2840 = vmatprep.subr.mxu0 0.0
  %2841 = vmatpush1.msra.mxu0 0.0
  %2842 = vmatprep.subr.mxu0 0.0
  %2843 = vmatpush1.msra.mxu0 0.0
  %2844 = vmatprep.subr.mxu0 0.0
  %2845 = vmatpush1.msra.mxu0 0.0
  %2846 = vmatprep.subr.mxu0 0.0
  %2847 = vmatpush1.msra.mxu0 0.0
  %2848 = vmatprep.subr.mxu0 0.0
  %2849 = vmatpush1.msra.mxu0 0.0
  %2850 = vmatprep.mubr.f32.mxu0 0.0
  %2851 = vmatmul.mubr.f32.gmra.mrb[0].mxu0 %v2784
  %v2852 = vpop.f32.mrb[0].mxu0
  %v2853 = vadd.f32 %v2778, %v2852
  %v2854 = vpop.f32.mrb[0].mxu0
  %2855 = vdwg.mxu0
  %v2856 = vadd.f32 %v2853, %v108
  %v2857 = vxor.u32 %v2856, 2147483648
  %v2858 = vmul.f32 %v2857, 1.442695
  %v2859 = vpow.pop %v2858
  %v2860 = vadd.f32 %v2859, 1.0
  %v2861 = vrcp.pop %v2860
  %v2862 = vmul.f32 1.0, %v2861
  %v2863 = vtanh.pop %v2856
  %v2864 = vmul.f32 %v2862, %v2529
  %2866 = vrot.lane.b32.xlu0 %v2863, 64
  %v2867 = vpop.permute.xlu0 %2866
  %v2869 = vmul.f32 %v2862, %v2867
  %2871 = vrot.lane.b32.xlu0 %v2869, 32
  %v2872 = vpop.permute.xlu0 %2871
  %v2874 = vadd.f32 %v2864, %v2872
  %v2875 = vtanh.pop %v2874
  %2877 = vrot.lane.b32.xlu0 %v2875, 64
  %v2878 = vpop.permute.xlu0 %2877
  %v2880 = vmul.f32 %v2862, %v2878
  %2881 = vmatprep.subr.mxu0 0.0
  %2882 = vmatpush1.msra.mxu0 %v85
  %2883 = vmatprep.subr.mxu0 0.0
  %2884 = vmatpush1.msra.mxu0 %v86
  %2885 = vmatprep.subr.mxu0 0.0
  %2886 = vmatpush1.msra.mxu0 %v87
  %2887 = vmatprep.subr.mxu0 0.0
  %2888 = vmatpush1.msra.mxu0 %v88
  %2889 = vmatprep.subr.mxu0 0.0
  %2890 = vmatpush1.msra.mxu0 0.0
  %2891 = vmatprep.subr.mxu0 0.0
  %2892 = vmatpush1.msra.mxu0 0.0
  %2893 = vmatprep.subr.mxu0 0.0
  %2894 = vmatpush1.msra.mxu0 0.0
  %2895 = vmatprep.subr.mxu0 0.0
  %2896 = vmatpush1.msra.mxu0 0.0
  %2897 = vmatprep.subr.mxu0 0.0
  %2898 = vmatpush1.msra.mxu0 0.0
  %2899 = vmatprep.subr.mxu0 0.0
  %2900 = vmatpush1.msra.mxu0 0.0
  %2901 = vmatprep.subr.mxu0 0.0
  %2902 = vmatpush1.msra.mxu0 0.0
  %2903 = vmatprep.subr.mxu0 0.0
  %2904 = vmatpush1.msra.mxu0 0.0
  %2905 = vmatprep.subr.mxu0 0.0
  %2906 = vmatpush1.msra.mxu0 0.0
  %2907 = vmatprep.subr.mxu0 0.0
  %2908 = vmatpush1.msra.mxu0 0.0
  %2909 = vmatprep.subr.mxu0 0.0
  %2910 = vmatpush1.msra.mxu0 0.0
  %2911 = vmatprep.subr.mxu0 0.0
  %2912 = vmatpush1.msra.mxu0 0.0
  %2913 = vmatprep.subr.mxu0 0.0
  %2914 = vmatpush1.msra.mxu0 0.0
  %2915 = vmatprep.subr.mxu0 0.0
  %2916 = vmatpush1.msra.mxu0 0.0
  %2917 = vmatprep.subr.mxu0 0.0
  %2918 = vmatpush1.msra.mxu0 0.0
  %2919 = vmatprep.subr.mxu0 0.0
  %2920 = vmatpush1.msra.mxu0 0.0
  %2921 = vmatprep.subr.mxu0 0.0
  %2922 = vmatpush1.msra.mxu0 0.0
  %2923 = vmatprep.subr.mxu0 0.0
  %2924 = vmatpush1.msra.mxu0 0.0
  %2925 = vmatprep.subr.mxu0 0.0
  %2926 = vmatpush1.msra.mxu0 0.0
  %2927 = vmatprep.subr.mxu0 0.0
  %2928 = vmatpush1.msra.mxu0 0.0
  %2929 = vmatprep.subr.mxu0 0.0
  %2930 = vmatpush1.msra.mxu0 0.0
  %2931 = vmatprep.subr.mxu0 0.0
  %2932 = vmatpush1.msra.mxu0 0.0
  %2933 = vmatprep.subr.mxu0 0.0
  %2934 = vmatpush1.msra.mxu0 0.0
  %2935 = vmatprep.subr.mxu0 0.0
  %2936 = vmatpush1.msra.mxu0 0.0
  %2937 = vmatprep.subr.mxu0 0.0
  %2938 = vmatpush1.msra.mxu0 0.0
  %2939 = vmatprep.subr.mxu0 0.0
  %2940 = vmatpush1.msra.mxu0 0.0
  %2941 = vmatprep.subr.mxu0 0.0
  %2942 = vmatpush1.msra.mxu0 0.0
  %2943 = vmatprep.subr.mxu0 0.0
  %2944 = vmatpush1.msra.mxu0 0.0
  %2945 = vmatprep.mubr.f32.mxu0 0.0
  %2946 = vmatmul.mubr.f32.gmra.mrb[0].mxu0 %v2784
  %v2947 = vpop.f32.mrb[0].mxu0
  %v2948 = vadd.f32 0.0, %v2947
  %v2949 = vpop.f32.mrb[0].mxu0
  %2950 = vdwg.mxu0
  %2952 = vrot.lane.b32.xlu0 %v2880, 32
  %v2953 = vpop.permute.xlu0 %2952
  %v2954 = vsel %vm267, %v2953, 0
  %2956 = vmatprep.subr.mxu0 0.0
  %2957 = vmatpush1.msra.mxu0 %v81
  %2958 = vmatprep.subr.mxu0 0.0
  %2959 = vmatpush1.msra.mxu0 %v82
  %2960 = vmatprep.subr.mxu0 0.0
  %2961 = vmatpush1.msra.mxu0 %v83
  %2962 = vmatprep.subr.mxu0 0.0
  %2963 = vmatpush1.msra.mxu0 %v84
  %2964 = vmatprep.subr.mxu0 0.0
  %2965 = vmatpush1.msra.mxu0 0.0
  %2966 = vmatprep.subr.mxu0 0.0
  %2967 = vmatpush1.msra.mxu0 0.0
  %2968 = vmatprep.subr.mxu0 0.0
  %2969 = vmatpush1.msra.mxu0 0.0
  %2970 = vmatprep.subr.mxu0 0.0
  %2971 = vmatpush1.msra.mxu0 0.0
  %2972 = vmatprep.subr.mxu0 0.0
  %2973 = vmatpush1.msra.mxu0 0.0
  %2974 = vmatprep.subr.mxu0 0.0
  %2975 = vmatpush1.msra.mxu0 0.0
  %2976 = vmatprep.subr.mxu0 0.0
  %2977 = vmatpush1.msra.mxu0 0.0
  %2978 = vmatprep.subr.mxu0 0.0
  %2979 = vmatpush1.msra.mxu0 0.0
  %2980 = vmatprep.subr.mxu0 0.0
  %2981 = vmatpush1.msra.mxu0 0.0
  %2982 = vmatprep.subr.mxu0 0.0
  %2983 = vmatpush1.msra.mxu0 0.0
  %2984 = vmatprep.subr.mxu0 0.0
  %2985 = vmatpush1.msra.mxu0 0.0
  %2986 = vmatprep.subr.mxu0 0.0
  %2987 = vmatpush1.msra.mxu0 0.0
  %2988 = vmatprep.subr.mxu0 0.0
  %2989 = vmatpush1.msra.mxu0 0.0
  %2990 = vmatprep.subr.mxu0 0.0
  %2991 = vmatpush1.msra.mxu0 0.0
  %2992 = vmatprep.subr.mxu0 0.0
  %2993 = vmatpush1.msra.mxu0 0.0
  %2994 = vmatprep.subr.mxu0 0.0
  %2995 = vmatpush1.msra.mxu0 0.0
  %2996 = vmatprep.subr.mxu0 0.0
  %2997 = vmatpush1.msra.mxu0 0.0
  %2998 = vmatprep.subr.mxu0 0.0
  %2999 = vmatpush1.msra.mxu0 0.0
  %3000 = vmatprep.subr.mxu0 0.0
  %3001 = vmatpush1.msra.mxu0 0.0
  %3002 = vmatprep.subr.mxu0 0.0
  %3003 = vmatpush1.msra.mxu0 0.0
  %3004 = vmatprep.subr.mxu0 0.0
  %3005 = vmatpush1.msra.mxu0 0.0
  %3006 = vmatprep.subr.mxu0 0.0
  %3007 = vmatpush1.msra.mxu0 0.0
  %3008 = vmatprep.subr.mxu0 0.0
  %3009 = vmatpush1.msra.mxu0 0.0
  %3010 = vmatprep.subr.mxu0 0.0
  %3011 = vmatpush1.msra.mxu0 0.0
  %3012 = vmatprep.subr.mxu0 0.0
  %3013 = vmatpush1.msra.mxu0 0.0
  %3014 = vmatprep.subr.mxu0 0.0
  %3015 = vmatpush1.msra.mxu0 0.0
  %3016 = vmatprep.subr.mxu0 0.0
  %3017 = vmatpush1.msra.mxu0 0.0
  %3018 = vmatprep.subr.mxu0 0.0
  %3019 = vmatpush1.msra.mxu0 0.0
  %3020 = vmatprep.mubr.f32.mxu0 0.0
  %3021 = vmatmul.mubr.f32.gmra.mrb[0].mxu0 %v2954
  %v3022 = vpop.f32.mrb[0].mxu0
  %v3023 = vadd.f32 %v2948, %v3022
  %v3024 = vpop.f32.mrb[0].mxu0
  %3025 = vdwg.mxu0
  %v3026 = vadd.f32 %v3023, %v115
  %v3027 = vxor.u32 %v3026, 2147483648
  %v3028 = vmul.f32 %v3027, 1.442695
  %v3029 = vpow.pop %v3028
  %v3030 = vadd.f32 %v3029, 1.0
  %v3031 = vrcp.pop %v3030
  %v3032 = vmul.f32 1.0, %v3031
  %v3033 = vtanh.pop %v3026
  %v3034 = vmul.f32 %v3032, %v2704
  %3036 = vrot.lane.b32.xlu0 %v3033, 64
  %v3037 = vpop.permute.xlu0 %3036
  %v3039 = vmul.f32 %v3032, %v3037
  %3041 = vrot.lane.b32.xlu0 %v3039, 32
  %v3042 = vpop.permute.xlu0 %3041
  %v3044 = vadd.f32 %v3034, %v3042
  %v3045 = vtanh.pop %v3044
  %3047 = vrot.lane.b32.xlu0 %v3045, 64
  %v3048 = vpop.permute.xlu0 %3047
  %v3050 = vmul.f32 %v3032, %v3048
  %3051 = vmatprep.subr.mxu0 0.0
  %3052 = vmatpush1.msra.mxu0 %v73
  %3053 = vmatprep.subr.mxu0 0.0
  %3054 = vmatpush1.msra.mxu0 %v74
  %3055 = vmatprep.subr.mxu0 0.0
  %3056 = vmatpush1.msra.mxu0 %v75
  %3057 = vmatprep.subr.mxu0 0.0
  %3058 = vmatpush1.msra.mxu0 %v76
  %3059 = vmatprep.subr.mxu0 0.0
  %3060 = vmatpush1.msra.mxu0 0.0
  %3061 = vmatprep.subr.mxu0 0.0
  %3062 = vmatpush1.msra.mxu0 0.0
  %3063 = vmatprep.subr.mxu0 0.0
  %3064 = vmatpush1.msra.mxu0 0.0
  %3065 = vmatprep.subr.mxu0 0.0
  %3066 = vmatpush1.msra.mxu0 0.0
  %3067 = vmatprep.subr.mxu0 0.0
  %3068 = vmatpush1.msra.mxu0 0.0
  %3069 = vmatprep.subr.mxu0 0.0
  %3070 = vmatpush1.msra.mxu0 0.0
  %3071 = vmatprep.subr.mxu0 0.0
  %3072 = vmatpush1.msra.mxu0 0.0
  %3073 = vmatprep.subr.mxu0 0.0
  %3074 = vmatpush1.msra.mxu0 0.0
  %3075 = vmatprep.subr.mxu0 0.0
  %3076 = vmatpush1.msra.mxu0 0.0
  %3077 = vmatprep.subr.mxu0 0.0
  %3078 = vmatpush1.msra.mxu0 0.0
  %3079 = vmatprep.subr.mxu0 0.0
  %3080 = vmatpush1.msra.mxu0 0.0
  %3081 = vmatprep.subr.mxu0 0.0
  %3082 = vmatpush1.msra.mxu0 0.0
  %3083 = vmatprep.subr.mxu0 0.0
  %3084 = vmatpush1.msra.mxu0 0.0
  %3085 = vmatprep.subr.mxu0 0.0
  %3086 = vmatpush1.msra.mxu0 0.0
  %3087 = vmatprep.subr.mxu0 0.0
  %3088 = vmatpush1.msra.mxu0 0.0
  %3089 = vmatprep.subr.mxu0 0.0
  %3090 = vmatpush1.msra.mxu0 0.0
  %3091 = vmatprep.subr.mxu0 0.0
  %3092 = vmatpush1.msra.mxu0 0.0
  %3093 = vmatprep.subr.mxu0 0.0
  %3094 = vmatpush1.msra.mxu0 0.0
  %3095 = vmatprep.subr.mxu0 0.0
  %3096 = vmatpush1.msra.mxu0 0.0
  %3097 = vmatprep.subr.mxu0 0.0
  %3098 = vmatpush1.msra.mxu0 0.0
  %3099 = vmatprep.subr.mxu0 0.0
  %3100 = vmatpush1.msra.mxu0 0.0
  %3101 = vmatprep.subr.mxu0 0.0
  %3102 = vmatpush1.msra.mxu0 0.0
  %3103 = vmatprep.subr.mxu0 0.0
  %3104 = vmatpush1.msra.mxu0 0.0
  %3105 = vmatprep.subr.mxu0 0.0
  %3106 = vmatpush1.msra.mxu0 0.0
  %3107 = vmatprep.subr.mxu0 0.0
  %3108 = vmatpush1.msra.mxu0 0.0
  %3109 = vmatprep.subr.mxu0 0.0
  %3110 = vmatpush1.msra.mxu0 0.0
  %3111 = vmatprep.subr.mxu0 0.0
  %3112 = vmatpush1.msra.mxu0 0.0
  %3113 = vmatprep.subr.mxu0 0.0
  %3114 = vmatpush1.msra.mxu0 0.0
  %3115 = vmatprep.mubr.f32.mxu0 0.0
  %3116 = vmatmul.mubr.f32.gmra.mrb[0].mxu0 %v2954
  %v3117 = vpop.f32.mrb[0].mxu0
  %v3118 = vadd.f32 0.0, %v3117
  %v3119 = vpop.f32.mrb[0].mxu0
  %3120 = vdwg.mxu0
  %3122 = vrot.lane.b32.xlu0 %v3050, 32
  %v3123 = vpop.permute.xlu0 %3122
  %v3124 = vsel %vm267, %v3123, 0
  %3126 = vmatprep.subr.mxu0 0.0
  %3127 = vmatpush1.msra.mxu0 %v77
  %3128 = vmatprep.subr.mxu0 0.0
  %3129 = vmatpush1.msra.mxu0 %v78
  %3130 = vmatprep.subr.mxu0 0.0
  %3131 = vmatpush1.msra.mxu0 %v79
  %3132 = vmatprep.subr.mxu0 0.0
  %3133 = vmatpush1.msra.mxu0 %v80
  %3134 = vmatprep.subr.mxu0 0.0
  %3135 = vmatpush1.msra.mxu0 0.0
  %3136 = vmatprep.subr.mxu0 0.0
  %3137 = vmatpush1.msra.mxu0 0.0
  %3138 = vmatprep.subr.mxu0 0.0
  %3139 = vmatpush1.msra.mxu0 0.0
  %3140 = vmatprep.subr.mxu0 0.0
  %3141 = vmatpush1.msra.mxu0 0.0
  %3142 = vmatprep.subr.mxu0 0.0
  %3143 = vmatpush1.msra.mxu0 0.0
  %3144 = vmatprep.subr.mxu0 0.0
  %3145 = vmatpush1.msra.mxu0 0.0
  %3146 = vmatprep.subr.mxu0 0.0
  %3147 = vmatpush1.msra.mxu0 0.0
  %3148 = vmatprep.subr.mxu0 0.0
  %3149 = vmatpush1.msra.mxu0 0.0
  %3150 = vmatprep.subr.mxu0 0.0
  %3151 = vmatpush1.msra.mxu0 0.0
  %3152 = vmatprep.subr.mxu0 0.0
  %3153 = vmatpush1.msra.mxu0 0.0
  %3154 = vmatprep.subr.mxu0 0.0
  %3155 = vmatpush1.msra.mxu0 0.0
  %3156 = vmatprep.subr.mxu0 0.0
  %3157 = vmatpush1.msra.mxu0 0.0
  %3158 = vmatprep.subr.mxu0 0.0
  %3159 = vmatpush1.msra.mxu0 0.0
  %3160 = vmatprep.subr.mxu0 0.0
  %3161 = vmatpush1.msra.mxu0 0.0
  %3162 = vmatprep.subr.mxu0 0.0
  %3163 = vmatpush1.msra.mxu0 0.0
  %3164 = vmatprep.subr.mxu0 0.0
  %3165 = vmatpush1.msra.mxu0 0.0
  %3166 = vmatprep.subr.mxu0 0.0
  %3167 = vmatpush1.msra.mxu0 0.0
  %3168 = vmatprep.subr.mxu0 0.0
  %3169 = vmatpush1.msra.mxu0 0.0
  %3170 = vmatprep.subr.mxu0 0.0
  %3171 = vmatpush1.msra.mxu0 0.0
  %3172 = vmatprep.subr.mxu0 0.0
  %3173 = vmatpush1.msra.mxu0 0.0
  %3174 = vmatprep.subr.mxu0 0.0
  %3175 = vmatpush1.msra.mxu0 0.0
  %3176 = vmatprep.subr.mxu0 0.0
  %3177 = vmatpush1.msra.mxu0 0.0
  %3178 = vmatprep.subr.mxu0 0.0
  %3179 = vmatpush1.msra.mxu0 0.0
  %3180 = vmatprep.subr.mxu0 0.0
  %3181 = vmatpush1.msra.mxu0 0.0
  %3182 = vmatprep.subr.mxu0 0.0
  %3183 = vmatpush1.msra.mxu0 0.0
  %3184 = vmatprep.subr.mxu0 0.0
  %3185 = vmatpush1.msra.mxu0 0.0
  %3186 = vmatprep.subr.mxu0 0.0
  %3187 = vmatpush1.msra.mxu0 0.0
  %3188 = vmatprep.subr.mxu0 0.0
  %3189 = vmatpush1.msra.mxu0 0.0
  %3190 = vmatprep.mubr.f32.mxu0 0.0
  %3191 = vmatmul.mubr.f32.gmra.mrb[0].mxu0 %v3124
  %v3192 = vpop.f32.mrb[0].mxu0
  %v3193 = vadd.f32 %v3118, %v3192
  %v3194 = vpop.f32.mrb[0].mxu0
  %3195 = vdwg.mxu0
  %v3196 = vadd.f32 %v3193, %v108
  %v3197 = vxor.u32 %v3196, 2147483648
  %v3198 = vmul.f32 %v3197, 1.442695
  %v3199 = vpow.pop %v3198
  %v3200 = vadd.f32 %v3199, 1.0
  %v3201 = vrcp.pop %v3200
  %v3202 = vmul.f32 1.0, %v3201
  %v3203 = vtanh.pop %v3196
  %v3204 = vmul.f32 %v3202, %v2874
  %3206 = vrot.lane.b32.xlu0 %v3203, 64
  %v3207 = vpop.permute.xlu0 %3206
  %v3209 = vmul.f32 %v3202, %v3207
  %3211 = vrot.lane.b32.xlu0 %v3209, 32
  %v3212 = vpop.permute.xlu0 %3211
  %v3214 = vadd.f32 %v3204, %v3212
  %v3215 = vtanh.pop %v3214
  %3217 = vrot.lane.b32.xlu0 %v3215, 64
  %v3218 = vpop.permute.xlu0 %3217
  %v3220 = vmul.f32 %v3202, %v3218
  %3221 = vmatprep.subr.mxu0 0.0
  %3222 = vmatpush1.msra.mxu0 %v85
  %3223 = vmatprep.subr.mxu0 0.0
  %3224 = vmatpush1.msra.mxu0 %v86
  %3225 = vmatprep.subr.mxu0 0.0
  %3226 = vmatpush1.msra.mxu0 %v87
  %3227 = vmatprep.subr.mxu0 0.0
  %3228 = vmatpush1.msra.mxu0 %v88
  %3229 = vmatprep.subr.mxu0 0.0
  %3230 = vmatpush1.msra.mxu0 0.0
  %3231 = vmatprep.subr.mxu0 0.0
  %3232 = vmatpush1.msra.mxu0 0.0
  %3233 = vmatprep.subr.mxu0 0.0
  %3234 = vmatpush1.msra.mxu0 0.0
  %3235 = vmatprep.subr.mxu0 0.0
  %3236 = vmatpush1.msra.mxu0 0.0
  %3237 = vmatprep.subr.mxu0 0.0
  %3238 = vmatpush1.msra.mxu0 0.0
  %3239 = vmatprep.subr.mxu0 0.0
  %3240 = vmatpush1.msra.mxu0 0.0
  %3241 = vmatprep.subr.mxu0 0.0
  %3242 = vmatpush1.msra.mxu0 0.0
  %3243 = vmatprep.subr.mxu0 0.0
  %3244 = vmatpush1.msra.mxu0 0.0
  %3245 = vmatprep.subr.mxu0 0.0
  %3246 = vmatpush1.msra.mxu0 0.0
  %3247 = vmatprep.subr.mxu0 0.0
  %3248 = vmatpush1.msra.mxu0 0.0
  %3249 = vmatprep.subr.mxu0 0.0
  %3250 = vmatpush1.msra.mxu0 0.0
  %3251 = vmatprep.subr.mxu0 0.0
  %3252 = vmatpush1.msra.mxu0 0.0
  %3253 = vmatprep.subr.mxu0 0.0
  %3254 = vmatpush1.msra.mxu0 0.0
  %3255 = vmatprep.subr.mxu0 0.0
  %3256 = vmatpush1.msra.mxu0 0.0
  %3257 = vmatprep.subr.mxu0 0.0
  %3258 = vmatpush1.msra.mxu0 0.0
  %3259 = vmatprep.subr.mxu0 0.0
  %3260 = vmatpush1.msra.mxu0 0.0
  %3261 = vmatprep.subr.mxu0 0.0
  %3262 = vmatpush1.msra.mxu0 0.0
  %3263 = vmatprep.subr.mxu0 0.0
  %3264 = vmatpush1.msra.mxu0 0.0
  %3265 = vmatprep.subr.mxu0 0.0
  %3266 = vmatpush1.msra.mxu0 0.0
  %3267 = vmatprep.subr.mxu0 0.0
  %3268 = vmatpush1.msra.mxu0 0.0
  %3269 = vmatprep.subr.mxu0 0.0
  %3270 = vmatpush1.msra.mxu0 0.0
  %3271 = vmatprep.subr.mxu0 0.0
  %3272 = vmatpush1.msra.mxu0 0.0
  %3273 = vmatprep.subr.mxu0 0.0
  %3274 = vmatpush1.msra.mxu0 0.0
  %3275 = vmatprep.subr.mxu0 0.0
  %3276 = vmatpush1.msra.mxu0 0.0
  %3277 = vmatprep.subr.mxu0 0.0
  %3278 = vmatpush1.msra.mxu0 0.0
  %3279 = vmatprep.subr.mxu0 0.0
  %3280 = vmatpush1.msra.mxu0 0.0
  %3281 = vmatprep.subr.mxu0 0.0
  %3282 = vmatpush1.msra.mxu0 0.0
  %3283 = vmatprep.subr.mxu0 0.0
  %3284 = vmatpush1.msra.mxu0 0.0
  %3285 = vmatprep.mubr.f32.mxu0 0.0
  %3286 = vmatmul.mubr.f32.gmra.mrb[0].mxu0 %v3124
  %v3287 = vpop.f32.mrb[0].mxu0
  %v3288 = vadd.f32 0.0, %v3287
  %v3289 = vpop.f32.mrb[0].mxu0
  %3290 = vdwg.mxu0
  %3292 = vrot.lane.b32.xlu0 %v3220, 32
  %v3293 = vpop.permute.xlu0 %3292
  %v3294 = vsel %vm267, %v3293, 0
  %3296 = vmatprep.subr.mxu0 0.0
  %3297 = vmatpush1.msra.mxu0 %v81
  %3298 = vmatprep.subr.mxu0 0.0
  %3299 = vmatpush1.msra.mxu0 %v82
  %3300 = vmatprep.subr.mxu0 0.0
  %3301 = vmatpush1.msra.mxu0 %v83
  %3302 = vmatprep.subr.mxu0 0.0
  %3303 = vmatpush1.msra.mxu0 %v84
  %3304 = vmatprep.subr.mxu0 0.0
  %3305 = vmatpush1.msra.mxu0 0.0
  %3306 = vmatprep.subr.mxu0 0.0
  %3307 = vmatpush1.msra.mxu0 0.0
  %3308 = vmatprep.subr.mxu0 0.0
  %3309 = vmatpush1.msra.mxu0 0.0
  %3310 = vmatprep.subr.mxu0 0.0
  %3311 = vmatpush1.msra.mxu0 0.0
  %3312 = vmatprep.subr.mxu0 0.0
  %3313 = vmatpush1.msra.mxu0 0.0
  %3314 = vmatprep.subr.mxu0 0.0
  %3315 = vmatpush1.msra.mxu0 0.0
  %3316 = vmatprep.subr.mxu0 0.0
  %3317 = vmatpush1.msra.mxu0 0.0
  %3318 = vmatprep.subr.mxu0 0.0
  %3319 = vmatpush1.msra.mxu0 0.0
  %3320 = vmatprep.subr.mxu0 0.0
  %3321 = vmatpush1.msra.mxu0 0.0
  %3322 = vmatprep.subr.mxu0 0.0
  %3323 = vmatpush1.msra.mxu0 0.0
  %3324 = vmatprep.subr.mxu0 0.0
  %3325 = vmatpush1.msra.mxu0 0.0
  %3326 = vmatprep.subr.mxu0 0.0
  %3327 = vmatpush1.msra.mxu0 0.0
  %3328 = vmatprep.subr.mxu0 0.0
  %3329 = vmatpush1.msra.mxu0 0.0
  %3330 = vmatprep.subr.mxu0 0.0
  %3331 = vmatpush1.msra.mxu0 0.0
  %3332 = vmatprep.subr.mxu0 0.0
  %3333 = vmatpush1.msra.mxu0 0.0
  %3334 = vmatprep.subr.mxu0 0.0
  %3335 = vmatpush1.msra.mxu0 0.0
  %3336 = vmatprep.subr.mxu0 0.0
  %3337 = vmatpush1.msra.mxu0 0.0
  %3338 = vmatprep.subr.mxu0 0.0
  %3339 = vmatpush1.msra.mxu0 0.0
  %3340 = vmatprep.subr.mxu0 0.0
  %3341 = vmatpush1.msra.mxu0 0.0
  %3342 = vmatprep.subr.mxu0 0.0
  %3343 = vmatpush1.msra.mxu0 0.0
  %3344 = vmatprep.subr.mxu0 0.0
  %3345 = vmatpush1.msra.mxu0 0.0
  %3346 = vmatprep.subr.mxu0 0.0
  %3347 = vmatpush1.msra.mxu0 0.0
  %3348 = vmatprep.subr.mxu0 0.0
  %3349 = vmatpush1.msra.mxu0 0.0
  %3350 = vmatprep.subr.mxu0 0.0
  %3351 = vmatpush1.msra.mxu0 0.0
  %3352 = vmatprep.subr.mxu0 0.0
  %3353 = vmatpush1.msra.mxu0 0.0
  %3354 = vmatprep.subr.mxu0 0.0
  %3355 = vmatpush1.msra.mxu0 0.0
  %3356 = vmatprep.subr.mxu0 0.0
  %3357 = vmatpush1.msra.mxu0 0.0
  %3358 = vmatprep.subr.mxu0 0.0
  %3359 = vmatpush1.msra.mxu0 0.0
  %3360 = vmatprep.mubr.f32.mxu0 0.0
  %3361 = vmatmul.mubr.f32.gmra.mrb[0].mxu0 %v3294
  %v3362 = vpop.f32.mrb[0].mxu0
  %v3363 = vadd.f32 %v3288, %v3362
  %v3364 = vpop.f32.mrb[0].mxu0
  %3365 = vdwg.mxu0
  %v3366 = vadd.f32 %v3363, %v115
  %v3367 = vxor.u32 %v3366, 2147483648
  %v3368 = vmul.f32 %v3367, 1.442695
  %v3369 = vpow.pop %v3368
  %v3370 = vadd.f32 %v3369, 1.0
  %v3371 = vrcp.pop %v3370
  %v3372 = vmul.f32 1.0, %v3371
  %v3373 = vtanh.pop %v3366
  %v3374 = vmul.f32 %v3372, %v3044
  %3376 = vrot.lane.b32.xlu0 %v3373, 64
  %v3377 = vpop.permute.xlu0 %3376
  %v3379 = vmul.f32 %v3372, %v3377
  %3381 = vrot.lane.b32.xlu0 %v3379, 32
  %v3382 = vpop.permute.xlu0 %3381
  %v3384 = vadd.f32 %v3374, %v3382
  %v3385 = vtanh.pop %v3384
  %3387 = vrot.lane.b32.xlu0 %v3385, 64
  %v3388 = vpop.permute.xlu0 %3387
  %v3390 = vmul.f32 %v3372, %v3388
  %3391 = vmatprep.subr.mxu0 0.0
  %3392 = vmatpush1.msra.mxu0 %v73
  %3393 = vmatprep.subr.mxu0 0.0
  %3394 = vmatpush1.msra.mxu0 %v74
  %3395 = vmatprep.subr.mxu0 0.0
  %3396 = vmatpush1.msra.mxu0 %v75
  %3397 = vmatprep.subr.mxu0 0.0
  %3398 = vmatpush1.msra.mxu0 %v76
  %3399 = vmatprep.subr.mxu0 0.0
  %3400 = vmatpush1.msra.mxu0 0.0
  %3401 = vmatprep.subr.mxu0 0.0
  %3402 = vmatpush1.msra.mxu0 0.0
  %3403 = vmatprep.subr.mxu0 0.0
  %3404 = vmatpush1.msra.mxu0 0.0
  %3405 = vmatprep.subr.mxu0 0.0
  %3406 = vmatpush1.msra.mxu0 0.0
  %3407 = vmatprep.subr.mxu0 0.0
  %3408 = vmatpush1.msra.mxu0 0.0
  %3409 = vmatprep.subr.mxu0 0.0
  %3410 = vmatpush1.msra.mxu0 0.0
  %3411 = vmatprep.subr.mxu0 0.0
  %3412 = vmatpush1.msra.mxu0 0.0
  %3413 = vmatprep.subr.mxu0 0.0
  %3414 = vmatpush1.msra.mxu0 0.0
  %3415 = vmatprep.subr.mxu0 0.0
  %3416 = vmatpush1.msra.mxu0 0.0
  %3417 = vmatprep.subr.mxu0 0.0
  %3418 = vmatpush1.msra.mxu0 0.0
  %3419 = vmatprep.subr.mxu0 0.0
  %3420 = vmatpush1.msra.mxu0 0.0
  %3421 = vmatprep.subr.mxu0 0.0
  %3422 = vmatpush1.msra.mxu0 0.0
  %3423 = vmatprep.subr.mxu0 0.0
  %3424 = vmatpush1.msra.mxu0 0.0
  %3425 = vmatprep.subr.mxu0 0.0
  %3426 = vmatpush1.msra.mxu0 0.0
  %3427 = vmatprep.subr.mxu0 0.0
  %3428 = vmatpush1.msra.mxu0 0.0
  %3429 = vmatprep.subr.mxu0 0.0
  %3430 = vmatpush1.msra.mxu0 0.0
  %3431 = vmatprep.subr.mxu0 0.0
  %3432 = vmatpush1.msra.mxu0 0.0
  %3433 = vmatprep.subr.mxu0 0.0
  %3434 = vmatpush1.msra.mxu0 0.0
  %3435 = vmatprep.subr.mxu0 0.0
  %3436 = vmatpush1.msra.mxu0 0.0
  %3437 = vmatprep.subr.mxu0 0.0
  %3438 = vmatpush1.msra.mxu0 0.0
  %3439 = vmatprep.subr.mxu0 0.0
  %3440 = vmatpush1.msra.mxu0 0.0
  %3441 = vmatprep.subr.mxu0 0.0
  %3442 = vmatpush1.msra.mxu0 0.0
  %3443 = vmatprep.subr.mxu0 0.0
  %3444 = vmatpush1.msra.mxu0 0.0
  %3445 = vmatprep.subr.mxu0 0.0
  %3446 = vmatpush1.msra.mxu0 0.0
  %3447 = vmatprep.subr.mxu0 0.0
  %3448 = vmatpush1.msra.mxu0 0.0
  %3449 = vmatprep.subr.mxu0 0.0
  %3450 = vmatpush1.msra.mxu0 0.0
  %3451 = vmatprep.subr.mxu0 0.0
  %3452 = vmatpush1.msra.mxu0 0.0
  %3453 = vmatprep.subr.mxu0 0.0
  %3454 = vmatpush1.msra.mxu0 0.0
  %3455 = vmatprep.mubr.f32.mxu0 0.0
  %3456 = vmatmul.mubr.f32.gmra.mrb[0].mxu0 %v3294
  %v3457 = vpop.f32.mrb[0].mxu0
  %v3458 = vadd.f32 0.0, %v3457
  %v3459 = vpop.f32.mrb[0].mxu0
  %3460 = vdwg.mxu0
  %3462 = vrot.lane.b32.xlu0 %v3390, 32
  %v3463 = vpop.permute.xlu0 %3462
  %v3464 = vsel %vm267, %v3463, 0
  %3466 = vmatprep.subr.mxu0 0.0
  %3467 = vmatpush1.msra.mxu0 %v77
  %3468 = vmatprep.subr.mxu0 0.0
  %3469 = vmatpush1.msra.mxu0 %v78
  %3470 = vmatprep.subr.mxu0 0.0
  %3471 = vmatpush1.msra.mxu0 %v79
  %3472 = vmatprep.subr.mxu0 0.0
  %3473 = vmatpush1.msra.mxu0 %v80
  %3474 = vmatprep.subr.mxu0 0.0
  %3475 = vmatpush1.msra.mxu0 0.0
  %3476 = vmatprep.subr.mxu0 0.0
  %3477 = vmatpush1.msra.mxu0 0.0
  %3478 = vmatprep.subr.mxu0 0.0
  %3479 = vmatpush1.msra.mxu0 0.0
  %3480 = vmatprep.subr.mxu0 0.0
  %3481 = vmatpush1.msra.mxu0 0.0
  %3482 = vmatprep.subr.mxu0 0.0
  %3483 = vmatpush1.msra.mxu0 0.0
  %3484 = vmatprep.subr.mxu0 0.0
  %3485 = vmatpush1.msra.mxu0 0.0
  %3486 = vmatprep.subr.mxu0 0.0
  %3487 = vmatpush1.msra.mxu0 0.0
  %3488 = vmatprep.subr.mxu0 0.0
  %3489 = vmatpush1.msra.mxu0 0.0
  %3490 = vmatprep.subr.mxu0 0.0
  %3491 = vmatpush1.msra.mxu0 0.0
  %3492 = vmatprep.subr.mxu0 0.0
  %3493 = vmatpush1.msra.mxu0 0.0
  %3494 = vmatprep.subr.mxu0 0.0
  %3495 = vmatpush1.msra.mxu0 0.0
  %3496 = vmatprep.subr.mxu0 0.0
  %3497 = vmatpush1.msra.mxu0 0.0
  %3498 = vmatprep.subr.mxu0 0.0
  %3499 = vmatpush1.msra.mxu0 0.0
  %3500 = vmatprep.subr.mxu0 0.0
  %3501 = vmatpush1.msra.mxu0 0.0
  %3502 = vmatprep.subr.mxu0 0.0
  %3503 = vmatpush1.msra.mxu0 0.0
  %3504 = vmatprep.subr.mxu0 0.0
  %3505 = vmatpush1.msra.mxu0 0.0
  %3506 = vmatprep.subr.mxu0 0.0
  %3507 = vmatpush1.msra.mxu0 0.0
  %3508 = vmatprep.subr.mxu0 0.0
  %3509 = vmatpush1.msra.mxu0 0.0
  %3510 = vmatprep.subr.mxu0 0.0
  %3511 = vmatpush1.msra.mxu0 0.0
  %3512 = vmatprep.subr.mxu0 0.0
  %3513 = vmatpush1.msra.mxu0 0.0
  %3514 = vmatprep.subr.mxu0 0.0
  %3515 = vmatpush1.msra.mxu0 0.0
  %3516 = vmatprep.subr.mxu0 0.0
  %3517 = vmatpush1.msra.mxu0 0.0
  %3518 = vmatprep.subr.mxu0 0.0
  %3519 = vmatpush1.msra.mxu0 0.0
  %3520 = vmatprep.subr.mxu0 0.0
  %3521 = vmatpush1.msra.mxu0 0.0
  %3522 = vmatprep.subr.mxu0 0.0
  %3523 = vmatpush1.msra.mxu0 0.0
  %3524 = vmatprep.subr.mxu0 0.0
  %3525 = vmatpush1.msra.mxu0 0.0
  %3526 = vmatprep.subr.mxu0 0.0
  %3527 = vmatpush1.msra.mxu0 0.0
  %3528 = vmatprep.subr.mxu0 0.0
  %3529 = vmatpush1.msra.mxu0 0.0
  %3530 = vmatprep.mubr.f32.mxu0 0.0
  %3531 = vmatmul.mubr.f32.gmra.mrb[0].mxu0 %v3464
  %v3532 = vpop.f32.mrb[0].mxu0
  %v3533 = vadd.f32 %v3458, %v3532
  %v3534 = vpop.f32.mrb[0].mxu0
  %3535 = vdwg.mxu0
  %v3536 = vadd.f32 %v3533, %v108
  %v3537 = vxor.u32 %v3536, 2147483648
  %v3538 = vmul.f32 %v3537, 1.442695
  %v3539 = vpow.pop %v3538
  %v3540 = vadd.f32 %v3539, 1.0
  %v3541 = vrcp.pop %v3540
  %v3542 = vmul.f32 1.0, %v3541
  %v3543 = vtanh.pop %v3536
  %v3544 = vmul.f32 %v3542, %v3214
  %3546 = vrot.lane.b32.xlu0 %v3543, 64
  %v3547 = vpop.permute.xlu0 %3546
  %v3549 = vmul.f32 %v3542, %v3547
  %3551 = vrot.lane.b32.xlu0 %v3549, 32
  %v3552 = vpop.permute.xlu0 %3551
  %v3554 = vadd.f32 %v3544, %v3552
  %v3555 = vtanh.pop %v3554
  %3557 = vrot.lane.b32.xlu0 %v3555, 64
  %v3558 = vpop.permute.xlu0 %3557
  %v3560 = vmul.f32 %v3542, %v3558
  %3561 = vmatprep.subr.mxu0 0.0
  %3562 = vmatpush1.msra.mxu0 %v85
  %3563 = vmatprep.subr.mxu0 0.0
  %3564 = vmatpush1.msra.mxu0 %v86
  %3565 = vmatprep.subr.mxu0 0.0
  %3566 = vmatpush1.msra.mxu0 %v87
  %3567 = vmatprep.subr.mxu0 0.0
  %3568 = vmatpush1.msra.mxu0 %v88
  %3569 = vmatprep.subr.mxu0 0.0
  %3570 = vmatpush1.msra.mxu0 0.0
  %3571 = vmatprep.subr.mxu0 0.0
  %3572 = vmatpush1.msra.mxu0 0.0
  %3573 = vmatprep.subr.mxu0 0.0
  %3574 = vmatpush1.msra.mxu0 0.0
  %3575 = vmatprep.subr.mxu0 0.0
  %3576 = vmatpush1.msra.mxu0 0.0
  %3577 = vmatprep.subr.mxu0 0.0
  %3578 = vmatpush1.msra.mxu0 0.0
  %3579 = vmatprep.subr.mxu0 0.0
  %3580 = vmatpush1.msra.mxu0 0.0
  %3581 = vmatprep.subr.mxu0 0.0
  %3582 = vmatpush1.msra.mxu0 0.0
  %3583 = vmatprep.subr.mxu0 0.0
  %3584 = vmatpush1.msra.mxu0 0.0
  %3585 = vmatprep.subr.mxu0 0.0
  %3586 = vmatpush1.msra.mxu0 0.0
  %3587 = vmatprep.subr.mxu0 0.0
  %3588 = vmatpush1.msra.mxu0 0.0
  %3589 = vmatprep.subr.mxu0 0.0
  %3590 = vmatpush1.msra.mxu0 0.0
  %3591 = vmatprep.subr.mxu0 0.0
  %3592 = vmatpush1.msra.mxu0 0.0
  %3593 = vmatprep.subr.mxu0 0.0
  %3594 = vmatpush1.msra.mxu0 0.0
  %3595 = vmatprep.subr.mxu0 0.0
  %3596 = vmatpush1.msra.mxu0 0.0
  %3597 = vmatprep.subr.mxu0 0.0
  %3598 = vmatpush1.msra.mxu0 0.0
  %3599 = vmatprep.subr.mxu0 0.0
  %3600 = vmatpush1.msra.mxu0 0.0
  %3601 = vmatprep.subr.mxu0 0.0
  %3602 = vmatpush1.msra.mxu0 0.0
  %3603 = vmatprep.subr.mxu0 0.0
  %3604 = vmatpush1.msra.mxu0 0.0
  %3605 = vmatprep.subr.mxu0 0.0
  %3606 = vmatpush1.msra.mxu0 0.0
  %3607 = vmatprep.subr.mxu0 0.0
  %3608 = vmatpush1.msra.mxu0 0.0
  %3609 = vmatprep.subr.mxu0 0.0
  %3610 = vmatpush1.msra.mxu0 0.0
  %3611 = vmatprep.subr.mxu0 0.0
  %3612 = vmatpush1.msra.mxu0 0.0
  %3613 = vmatprep.subr.mxu0 0.0
  %3614 = vmatpush1.msra.mxu0 0.0
  %3615 = vmatprep.subr.mxu0 0.0
  %3616 = vmatpush1.msra.mxu0 0.0
  %3617 = vmatprep.subr.mxu0 0.0
  %3618 = vmatpush1.msra.mxu0 0.0
  %3619 = vmatprep.subr.mxu0 0.0
  %3620 = vmatpush1.msra.mxu0 0.0
  %3621 = vmatprep.subr.mxu0 0.0
  %3622 = vmatpush1.msra.mxu0 0.0
  %3623 = vmatprep.subr.mxu0 0.0
  %3624 = vmatpush1.msra.mxu0 0.0
  %3625 = vmatprep.mubr.f32.mxu0 0.0
  %3626 = vmatmul.mubr.f32.gmra.mrb[0].mxu0 %v3464
  %v3627 = vpop.f32.mrb[0].mxu0
  %v3628 = vadd.f32 0.0, %v3627
  %v3629 = vpop.f32.mrb[0].mxu0
  %3630 = vdwg.mxu0
  %3632 = vrot.lane.b32.xlu0 %v3560, 32
  %v3633 = vpop.permute.xlu0 %3632
  %v3634 = vsel %vm267, %v3633, 0
  %3636 = vmatprep.subr.mxu0 0.0
  %3637 = vmatpush1.msra.mxu0 %v81
  %3638 = vmatprep.subr.mxu0 0.0
  %3639 = vmatpush1.msra.mxu0 %v82
  %3640 = vmatprep.subr.mxu0 0.0
  %3641 = vmatpush1.msra.mxu0 %v83
  %3642 = vmatprep.subr.mxu0 0.0
  %3643 = vmatpush1.msra.mxu0 %v84
  %3644 = vmatprep.subr.mxu0 0.0
  %3645 = vmatpush1.msra.mxu0 0.0
  %3646 = vmatprep.subr.mxu0 0.0
  %3647 = vmatpush1.msra.mxu0 0.0
  %3648 = vmatprep.subr.mxu0 0.0
  %3649 = vmatpush1.msra.mxu0 0.0
  %3650 = vmatprep.subr.mxu0 0.0
  %3651 = vmatpush1.msra.mxu0 0.0
  %3652 = vmatprep.subr.mxu0 0.0
  %3653 = vmatpush1.msra.mxu0 0.0
  %3654 = vmatprep.subr.mxu0 0.0
  %3655 = vmatpush1.msra.mxu0 0.0
  %3656 = vmatprep.subr.mxu0 0.0
  %3657 = vmatpush1.msra.mxu0 0.0
  %3658 = vmatprep.subr.mxu0 0.0
  %3659 = vmatpush1.msra.mxu0 0.0
  %3660 = vmatprep.subr.mxu0 0.0
  %3661 = vmatpush1.msra.mxu0 0.0
  %3662 = vmatprep.subr.mxu0 0.0
  %3663 = vmatpush1.msra.mxu0 0.0
  %3664 = vmatprep.subr.mxu0 0.0
  %3665 = vmatpush1.msra.mxu0 0.0
  %3666 = vmatprep.subr.mxu0 0.0
  %3667 = vmatpush1.msra.mxu0 0.0
  %3668 = vmatprep.subr.mxu0 0.0
  %3669 = vmatpush1.msra.mxu0 0.0
  %3670 = vmatprep.subr.mxu0 0.0
  %3671 = vmatpush1.msra.mxu0 0.0
  %3672 = vmatprep.subr.mxu0 0.0
  %3673 = vmatpush1.msra.mxu0 0.0
  %3674 = vmatprep.subr.mxu0 0.0
  %3675 = vmatpush1.msra.mxu0 0.0
  %3676 = vmatprep.subr.mxu0 0.0
  %3677 = vmatpush1.msra.mxu0 0.0
  %3678 = vmatprep.subr.mxu0 0.0
  %3679 = vmatpush1.msra.mxu0 0.0
  %3680 = vmatprep.subr.mxu0 0.0
  %3681 = vmatpush1.msra.mxu0 0.0
  %3682 = vmatprep.subr.mxu0 0.0
  %3683 = vmatpush1.msra.mxu0 0.0
  %3684 = vmatprep.subr.mxu0 0.0
  %3685 = vmatpush1.msra.mxu0 0.0
  %3686 = vmatprep.subr.mxu0 0.0
  %3687 = vmatpush1.msra.mxu0 0.0
  %3688 = vmatprep.subr.mxu0 0.0
  %3689 = vmatpush1.msra.mxu0 0.0
  %3690 = vmatprep.subr.mxu0 0.0
  %3691 = vmatpush1.msra.mxu0 0.0
  %3692 = vmatprep.subr.mxu0 0.0
  %3693 = vmatpush1.msra.mxu0 0.0
  %3694 = vmatprep.subr.mxu0 0.0
  %3695 = vmatpush1.msra.mxu0 0.0
  %3696 = vmatprep.subr.mxu0 0.0
  %3697 = vmatpush1.msra.mxu0 0.0
  %3698 = vmatprep.subr.mxu0 0.0
  %3699 = vmatpush1.msra.mxu0 0.0
  %3700 = vmatprep.mubr.f32.mxu0 0.0
  %3701 = vmatmul.mubr.f32.gmra.mrb[0].mxu0 %v3634
  %v3702 = vpop.f32.mrb[0].mxu0
  %v3703 = vadd.f32 %v3628, %v3702
  %v3704 = vpop.f32.mrb[0].mxu0
  %3705 = vdwg.mxu0
  %v3706 = vadd.f32 %v3703, %v115
  %v3707 = vxor.u32 %v3706, 2147483648
  %v3708 = vmul.f32 %v3707, 1.442695
  %v3709 = vpow.pop %v3708
  %v3710 = vadd.f32 %v3709, 1.0
  %v3711 = vrcp.pop %v3710
  %v3712 = vmul.f32 1.0, %v3711
  %v3713 = vtanh.pop %v3706
  %v3714 = vmul.f32 %v3712, %v3384
  %3716 = vrot.lane.b32.xlu0 %v3713, 64
  %v3717 = vpop.permute.xlu0 %3716
  %v3719 = vmul.f32 %v3712, %v3717
  %3721 = vrot.lane.b32.xlu0 %v3719, 32
  %v3722 = vpop.permute.xlu0 %3721
  %v3724 = vadd.f32 %v3714, %v3722
  %v3725 = vtanh.pop %v3724
  %3727 = vrot.lane.b32.xlu0 %v3725, 64
  %v3728 = vpop.permute.xlu0 %3727
  %v3730 = vmul.f32 %v3712, %v3728
  %3731 = vmatprep.subr.mxu0 0.0
  %3732 = vmatpush1.msra.mxu0 %v73
  %3733 = vmatprep.subr.mxu0 0.0
  %3734 = vmatpush1.msra.mxu0 %v74
  %3735 = vmatprep.subr.mxu0 0.0
  %3736 = vmatpush1.msra.mxu0 %v75
  %3737 = vmatprep.subr.mxu0 0.0
  %3738 = vmatpush1.msra.mxu0 %v76
  %3739 = vmatprep.subr.mxu0 0.0
  %3740 = vmatpush1.msra.mxu0 0.0
  %3741 = vmatprep.subr.mxu0 0.0
  %3742 = vmatpush1.msra.mxu0 0.0
  %3743 = vmatprep.subr.mxu0 0.0
  %3744 = vmatpush1.msra.mxu0 0.0
  %3745 = vmatprep.subr.mxu0 0.0
  %3746 = vmatpush1.msra.mxu0 0.0
  %3747 = vmatprep.subr.mxu0 0.0
  %3748 = vmatpush1.msra.mxu0 0.0
  %3749 = vmatprep.subr.mxu0 0.0
  %3750 = vmatpush1.msra.mxu0 0.0
  %3751 = vmatprep.subr.mxu0 0.0
  %3752 = vmatpush1.msra.mxu0 0.0
  %3753 = vmatprep.subr.mxu0 0.0
  %3754 = vmatpush1.msra.mxu0 0.0
  %3755 = vmatprep.subr.mxu0 0.0
  %3756 = vmatpush1.msra.mxu0 0.0
  %3757 = vmatprep.subr.mxu0 0.0
  %3758 = vmatpush1.msra.mxu0 0.0
  %3759 = vmatprep.subr.mxu0 0.0
  %3760 = vmatpush1.msra.mxu0 0.0
  %3761 = vmatprep.subr.mxu0 0.0
  %3762 = vmatpush1.msra.mxu0 0.0
  %3763 = vmatprep.subr.mxu0 0.0
  %3764 = vmatpush1.msra.mxu0 0.0
  %3765 = vmatprep.subr.mxu0 0.0
  %3766 = vmatpush1.msra.mxu0 0.0
  %3767 = vmatprep.subr.mxu0 0.0
  %3768 = vmatpush1.msra.mxu0 0.0
  %3769 = vmatprep.subr.mxu0 0.0
  %3770 = vmatpush1.msra.mxu0 0.0
  %3771 = vmatprep.subr.mxu0 0.0
  %3772 = vmatpush1.msra.mxu0 0.0
  %3773 = vmatprep.subr.mxu0 0.0
  %3774 = vmatpush1.msra.mxu0 0.0
  %3775 = vmatprep.subr.mxu0 0.0
  %3776 = vmatpush1.msra.mxu0 0.0
  %3777 = vmatprep.subr.mxu0 0.0
  %3778 = vmatpush1.msra.mxu0 0.0
  %3779 = vmatprep.subr.mxu0 0.0
  %3780 = vmatpush1.msra.mxu0 0.0
  %3781 = vmatprep.subr.mxu0 0.0
  %3782 = vmatpush1.msra.mxu0 0.0
  %3783 = vmatprep.subr.mxu0 0.0
  %3784 = vmatpush1.msra.mxu0 0.0
  %3785 = vmatprep.subr.mxu0 0.0
  %3786 = vmatpush1.msra.mxu0 0.0
  %3787 = vmatprep.subr.mxu0 0.0
  %3788 = vmatpush1.msra.mxu0 0.0
  %3789 = vmatprep.subr.mxu0 0.0
  %3790 = vmatpush1.msra.mxu0 0.0
  %3791 = vmatprep.subr.mxu0 0.0
  %3792 = vmatpush1.msra.mxu0 0.0
  %3793 = vmatprep.subr.mxu0 0.0
  %3794 = vmatpush1.msra.mxu0 0.0
  %3795 = vmatprep.mubr.f32.mxu0 0.0
  %3796 = vmatmul.mubr.f32.gmra.mrb[0].mxu0 %v3634
  %v3797 = vpop.f32.mrb[0].mxu0
  %v3798 = vadd.f32 0.0, %v3797
  %v3799 = vpop.f32.mrb[0].mxu0
  %3800 = vdwg.mxu0
  %3802 = vrot.lane.b32.xlu0 %v3730, 32
  %v3803 = vpop.permute.xlu0 %3802
  %v3804 = vsel %vm267, %v3803, 0
  %3806 = vmatprep.subr.mxu0 0.0
  %3807 = vmatpush1.msra.mxu0 %v77
  %3808 = vmatprep.subr.mxu0 0.0
  %3809 = vmatpush1.msra.mxu0 %v78
  %3810 = vmatprep.subr.mxu0 0.0
  %3811 = vmatpush1.msra.mxu0 %v79
  %3812 = vmatprep.subr.mxu0 0.0
  %3813 = vmatpush1.msra.mxu0 %v80
  %3814 = vmatprep.subr.mxu0 0.0
  %3815 = vmatpush1.msra.mxu0 0.0
  %3816 = vmatprep.subr.mxu0 0.0
  %3817 = vmatpush1.msra.mxu0 0.0
  %3818 = vmatprep.subr.mxu0 0.0
  %3819 = vmatpush1.msra.mxu0 0.0
  %3820 = vmatprep.subr.mxu0 0.0
  %3821 = vmatpush1.msra.mxu0 0.0
  %3822 = vmatprep.subr.mxu0 0.0
  %3823 = vmatpush1.msra.mxu0 0.0
  %3824 = vmatprep.subr.mxu0 0.0
  %3825 = vmatpush1.msra.mxu0 0.0
  %3826 = vmatprep.subr.mxu0 0.0
  %3827 = vmatpush1.msra.mxu0 0.0
  %3828 = vmatprep.subr.mxu0 0.0
  %3829 = vmatpush1.msra.mxu0 0.0
  %3830 = vmatprep.subr.mxu0 0.0
  %3831 = vmatpush1.msra.mxu0 0.0
  %3832 = vmatprep.subr.mxu0 0.0
  %3833 = vmatpush1.msra.mxu0 0.0
  %3834 = vmatprep.subr.mxu0 0.0
  %3835 = vmatpush1.msra.mxu0 0.0
  %3836 = vmatprep.subr.mxu0 0.0
  %3837 = vmatpush1.msra.mxu0 0.0
  %3838 = vmatprep.subr.mxu0 0.0
  %3839 = vmatpush1.msra.mxu0 0.0
  %3840 = vmatprep.subr.mxu0 0.0
  %3841 = vmatpush1.msra.mxu0 0.0
  %3842 = vmatprep.subr.mxu0 0.0
  %3843 = vmatpush1.msra.mxu0 0.0
  %3844 = vmatprep.subr.mxu0 0.0
  %3845 = vmatpush1.msra.mxu0 0.0
  %3846 = vmatprep.subr.mxu0 0.0
  %3847 = vmatpush1.msra.mxu0 0.0
  %3848 = vmatprep.subr.mxu0 0.0
  %3849 = vmatpush1.msra.mxu0 0.0
  %3850 = vmatprep.subr.mxu0 0.0
  %3851 = vmatpush1.msra.mxu0 0.0
  %3852 = vmatprep.subr.mxu0 0.0
  %3853 = vmatpush1.msra.mxu0 0.0
  %3854 = vmatprep.subr.mxu0 0.0
  %3855 = vmatpush1.msra.mxu0 0.0
  %3856 = vmatprep.subr.mxu0 0.0
  %3857 = vmatpush1.msra.mxu0 0.0
  %3858 = vmatprep.subr.mxu0 0.0
  %3859 = vmatpush1.msra.mxu0 0.0
  %3860 = vmatprep.subr.mxu0 0.0
  %3861 = vmatpush1.msra.mxu0 0.0
  %3862 = vmatprep.subr.mxu0 0.0
  %3863 = vmatpush1.msra.mxu0 0.0
  %3864 = vmatprep.subr.mxu0 0.0
  %3865 = vmatpush1.msra.mxu0 0.0
  %3866 = vmatprep.subr.mxu0 0.0
  %3867 = vmatpush1.msra.mxu0 0.0
  %3868 = vmatprep.subr.mxu0 0.0
  %3869 = vmatpush1.msra.mxu0 0.0
  %3870 = vmatprep.mubr.f32.mxu0 0.0
  %3871 = vmatmul.mubr.f32.gmra.mrb[0].mxu0 %v3804
  %v3872 = vpop.f32.mrb[0].mxu0
  %v3873 = vadd.f32 %v3798, %v3872
  %v3874 = vpop.f32.mrb[0].mxu0
  %3875 = vdwg.mxu0
  %v3876 = vadd.f32 %v3873, %v108
  %v3877 = vxor.u32 %v3876, 2147483648
  %v3878 = vmul.f32 %v3877, 1.442695
  %v3879 = vpow.pop %v3878
  %v3880 = vadd.f32 %v3879, 1.0
  %v3881 = vrcp.pop %v3880
  %v3882 = vmul.f32 1.0, %v3881
  %v3883 = vtanh.pop %v3876
  %v3884 = vmul.f32 %v3882, %v3554
  %3886 = vrot.lane.b32.xlu0 %v3883, 64
  %v3887 = vpop.permute.xlu0 %3886
  %v3889 = vmul.f32 %v3882, %v3887
  %3891 = vrot.lane.b32.xlu0 %v3889, 32
  %v3892 = vpop.permute.xlu0 %3891
  %v3894 = vadd.f32 %v3884, %v3892
  %v3895 = vtanh.pop %v3894
  %3897 = vrot.lane.b32.xlu0 %v3895, 64
  %v3898 = vpop.permute.xlu0 %3897
  %v3900 = vmul.f32 %v3882, %v3898
  %3901 = vmatprep.subr.mxu0 0.0
  %3902 = vmatpush1.msra.mxu0 %v85
  %3903 = vmatprep.subr.mxu0 0.0
  %3904 = vmatpush1.msra.mxu0 %v86
  %3905 = vmatprep.subr.mxu0 0.0
  %3906 = vmatpush1.msra.mxu0 %v87
  %3907 = vmatprep.subr.mxu0 0.0
  %3908 = vmatpush1.msra.mxu0 %v88
  %3909 = vmatprep.subr.mxu0 0.0
  %3910 = vmatpush1.msra.mxu0 0.0
  %3911 = vmatprep.subr.mxu0 0.0
  %3912 = vmatpush1.msra.mxu0 0.0
  %3913 = vmatprep.subr.mxu0 0.0
  %3914 = vmatpush1.msra.mxu0 0.0
  %3915 = vmatprep.subr.mxu0 0.0
  %3916 = vmatpush1.msra.mxu0 0.0
  %3917 = vmatprep.subr.mxu0 0.0
  %3918 = vmatpush1.msra.mxu0 0.0
  %3919 = vmatprep.subr.mxu0 0.0
  %3920 = vmatpush1.msra.mxu0 0.0
  %3921 = vmatprep.subr.mxu0 0.0
  %3922 = vmatpush1.msra.mxu0 0.0
  %3923 = vmatprep.subr.mxu0 0.0
  %3924 = vmatpush1.msra.mxu0 0.0
  %3925 = vmatprep.subr.mxu0 0.0
  %3926 = vmatpush1.msra.mxu0 0.0
  %3927 = vmatprep.subr.mxu0 0.0
  %3928 = vmatpush1.msra.mxu0 0.0
  %3929 = vmatprep.subr.mxu0 0.0
  %3930 = vmatpush1.msra.mxu0 0.0
  %3931 = vmatprep.subr.mxu0 0.0
  %3932 = vmatpush1.msra.mxu0 0.0
  %3933 = vmatprep.subr.mxu0 0.0
  %3934 = vmatpush1.msra.mxu0 0.0
  %3935 = vmatprep.subr.mxu0 0.0
  %3936 = vmatpush1.msra.mxu0 0.0
  %3937 = vmatprep.subr.mxu0 0.0
  %3938 = vmatpush1.msra.mxu0 0.0
  %3939 = vmatprep.subr.mxu0 0.0
  %3940 = vmatpush1.msra.mxu0 0.0
  %3941 = vmatprep.subr.mxu0 0.0
  %3942 = vmatpush1.msra.mxu0 0.0
  %3943 = vmatprep.subr.mxu0 0.0
  %3944 = vmatpush1.msra.mxu0 0.0
  %3945 = vmatprep.subr.mxu0 0.0
  %3946 = vmatpush1.msra.mxu0 0.0
  %3947 = vmatprep.subr.mxu0 0.0
  %3948 = vmatpush1.msra.mxu0 0.0
  %3949 = vmatprep.subr.mxu0 0.0
  %3950 = vmatpush1.msra.mxu0 0.0
  %3951 = vmatprep.subr.mxu0 0.0
  %3952 = vmatpush1.msra.mxu0 0.0
  %3953 = vmatprep.subr.mxu0 0.0
  %3954 = vmatpush1.msra.mxu0 0.0
  %3955 = vmatprep.subr.mxu0 0.0
  %3956 = vmatpush1.msra.mxu0 0.0
  %3957 = vmatprep.subr.mxu0 0.0
  %3958 = vmatpush1.msra.mxu0 0.0
  %3959 = vmatprep.subr.mxu0 0.0
  %3960 = vmatpush1.msra.mxu0 0.0
  %3961 = vmatprep.subr.mxu0 0.0
  %3962 = vmatpush1.msra.mxu0 0.0
  %3963 = vmatprep.subr.mxu0 0.0
  %3964 = vmatpush1.msra.mxu0 0.0
  %3965 = vmatprep.mubr.f32.mxu0 0.0
  %3966 = vmatmul.mubr.f32.gmra.mrb[0].mxu0 %v3804
  %v3967 = vpop.f32.mrb[0].mxu0
  %v3968 = vadd.f32 0.0, %v3967
  %v3969 = vpop.f32.mrb[0].mxu0
  %3970 = vdwg.mxu0
  %3972 = vrot.lane.b32.xlu0 %v3900, 32
  %v3973 = vpop.permute.xlu0 %3972
  %v3974 = vsel %vm267, %v3973, 0
  %3976 = vmatprep.subr.mxu0 0.0
  %3977 = vmatpush1.msra.mxu0 %v81
  %3978 = vmatprep.subr.mxu0 0.0
  %3979 = vmatpush1.msra.mxu0 %v82
  %3980 = vmatprep.subr.mxu0 0.0
  %3981 = vmatpush1.msra.mxu0 %v83
  %3982 = vmatprep.subr.mxu0 0.0
  %3983 = vmatpush1.msra.mxu0 %v84
  %3984 = vmatprep.subr.mxu0 0.0
  %3985 = vmatpush1.msra.mxu0 0.0
  %3986 = vmatprep.subr.mxu0 0.0
  %3987 = vmatpush1.msra.mxu0 0.0
  %3988 = vmatprep.subr.mxu0 0.0
  %3989 = vmatpush1.msra.mxu0 0.0
  %3990 = vmatprep.subr.mxu0 0.0
  %3991 = vmatpush1.msra.mxu0 0.0
  %3992 = vmatprep.subr.mxu0 0.0
  %3993 = vmatpush1.msra.mxu0 0.0
  %3994 = vmatprep.subr.mxu0 0.0
  %3995 = vmatpush1.msra.mxu0 0.0
  %3996 = vmatprep.subr.mxu0 0.0
  %3997 = vmatpush1.msra.mxu0 0.0
  %3998 = vmatprep.subr.mxu0 0.0
  %3999 = vmatpush1.msra.mxu0 0.0
  %4000 = vmatprep.subr.mxu0 0.0
  %4001 = vmatpush1.msra.mxu0 0.0
  %4002 = vmatprep.subr.mxu0 0.0
  %4003 = vmatpush1.msra.mxu0 0.0
  %4004 = vmatprep.subr.mxu0 0.0
  %4005 = vmatpush1.msra.mxu0 0.0
  %4006 = vmatprep.subr.mxu0 0.0
  %4007 = vmatpush1.msra.mxu0 0.0
  %4008 = vmatprep.subr.mxu0 0.0
  %4009 = vmatpush1.msra.mxu0 0.0
  %4010 = vmatprep.subr.mxu0 0.0
  %4011 = vmatpush1.msra.mxu0 0.0
  %4012 = vmatprep.subr.mxu0 0.0
  %4013 = vmatpush1.msra.mxu0 0.0
  %4014 = vmatprep.subr.mxu0 0.0
  %4015 = vmatpush1.msra.mxu0 0.0
  %4016 = vmatprep.subr.mxu0 0.0
  %4017 = vmatpush1.msra.mxu0 0.0
  %4018 = vmatprep.subr.mxu0 0.0
  %4019 = vmatpush1.msra.mxu0 0.0
  %4020 = vmatprep.subr.mxu0 0.0
  %4021 = vmatpush1.msra.mxu0 0.0
  %4022 = vmatprep.subr.mxu0 0.0
  %4023 = vmatpush1.msra.mxu0 0.0
  %4024 = vmatprep.subr.mxu0 0.0
  %4025 = vmatpush1.msra.mxu0 0.0
  %4026 = vmatprep.subr.mxu0 0.0
  %4027 = vmatpush1.msra.mxu0 0.0
  %4028 = vmatprep.subr.mxu0 0.0
  %4029 = vmatpush1.msra.mxu0 0.0
  %4030 = vmatprep.subr.mxu0 0.0
  %4031 = vmatpush1.msra.mxu0 0.0
  %4032 = vmatprep.subr.mxu0 0.0
  %4033 = vmatpush1.msra.mxu0 0.0
  %4034 = vmatprep.subr.mxu0 0.0
  %4035 = vmatpush1.msra.mxu0 0.0
  %4036 = vmatprep.subr.mxu0 0.0
  %4037 = vmatpush1.msra.mxu0 0.0
  %4038 = vmatprep.subr.mxu0 0.0
  %4039 = vmatpush1.msra.mxu0 0.0
  %4040 = vmatprep.mubr.f32.mxu0 0.0
  %4041 = vmatmul.mubr.f32.gmra.mrb[0].mxu0 %v3974
  %v4042 = vpop.f32.mrb[0].mxu0
  %v4043 = vadd.f32 %v3968, %v4042
  %v4044 = vpop.f32.mrb[0].mxu0
  %4045 = vdwg.mxu0
  %v4046 = vadd.f32 %v4043, %v115
  %v4047 = vxor.u32 %v4046, 2147483648
  %v4048 = vmul.f32 %v4047, 1.442695
  %v4049 = vpow.pop %v4048
  %v4050 = vadd.f32 %v4049, 1.0
  %v4051 = vrcp.pop %v4050
  %v4052 = vmul.f32 1.0, %v4051
  %v4053 = vtanh.pop %v4046
  %v4054 = vmul.f32 %v4052, %v3724
  %4056 = vrot.lane.b32.xlu0 %v4053, 64
  %v4057 = vpop.permute.xlu0 %4056
  %v4059 = vmul.f32 %v4052, %v4057
  %4061 = vrot.lane.b32.xlu0 %v4059, 32
  %v4062 = vpop.permute.xlu0 %4061
  %v4064 = vadd.f32 %v4054, %v4062
  %v4065 = vtanh.pop %v4064
  %4067 = vrot.lane.b32.xlu0 %v4065, 64
  %v4068 = vpop.permute.xlu0 %4067
  %v4070 = vmul.f32 %v4052, %v4068
  %4072 = vrot.lane.b32.xlu0 %v3050, 64
  %v4073 = vpop.permute.xlu0 %4072
  %4075 = vrot.lane.b32.xlu0 %v3390, 96
  %v4076 = vpop.permute.xlu0 %4075
  %4079 = vrot.lane.b32.xlu0 %v4070, 32
  %v4080 = vpop.permute.xlu0 %4079
  %v4081 = vsel %vm267, %v2783, %v4073
  %vm4082 = vcmask 523264
  %v4083 = vsel %vm4082, %v4081, %v4076
  %vm4084 = vcmask 785408
  %v4085 = vsel %vm4084, %v4083, %v3730
  %v4086 = vld [vmem:[%s16] sm:$0xff]
  %v4087 = vld [vmem:[%s16 + $0x8] sm:$0xff]
  %v4088 = vld [vmem:[%s16 + $0x10] sm:$0xff]
  %v4089 = vld [vmem:[%s16 + $0x18] sm:$0xff]
  %v4090 = vld [vmem:[%s16 + $0x20] sm:$0xff]
  %v4091 = vld [vmem:[%s16 + $0x28] sm:$0xff]
  %v4092 = vld [vmem:[%s16 + $0x30] sm:$0xff]
  %v4093 = vld [vmem:[%s16 + $0x38] sm:$0xff]
  %v4094 = vld [vmem:[%s16 + $0x40] sm:$0xff]
  %v4095 = vld [vmem:[%s16 + $0x48] sm:$0xff]
  %v4096 = vld [vmem:[%s16 + $0x50] sm:$0xff]
  %v4097 = vld [vmem:[%s16 + $0x58] sm:$0xff]
  %v4098 = vld [vmem:[%s16 + $0x60] sm:$0xff]
  %v4099 = vld [vmem:[%s16 + $0x68] sm:$0xff]
  %v4100 = vld [vmem:[%s16 + $0x70] sm:$0xff]
  %v4101 = vld [vmem:[%s16 + $0x78] sm:$0xff]
  %v4102 = vld [vmem:[%s16 + $0x80] sm:$0xff]
  %v4103 = vld [vmem:[%s16 + $0x88] sm:$0xff]
  %v4104 = vld [vmem:[%s16 + $0x90] sm:$0xff]
  %v4105 = vld [vmem:[%s16 + $0x98] sm:$0xff]
  %v4106 = vld [vmem:[#allocation2] sm:$0x1]
  %v4108 = vlaneseq
  %v4109 = vshrl.u32 %v4108, 7
  %v4110 = vsub.s32 0, %v4109
  %v4111 = vrot.slane %v4106, %v4110
  %4112 = vset.pattern.permute.xlu0 0
  %4113 = vperm.xlu0 %4112, %v4111
  %v4114 = vpop.permute.xlu0 %4113
  %v4116 = vsel %vm267, %v4080, 0
  %4118 = vmatprep.subr.mxu0 0.0
  %4119 = vmatpush1.msra.mxu0 %v4086
  %4120 = vmatprep.subr.mxu0 0.0
  %4121 = vmatpush1.msra.mxu0 %v4087
  %4122 = vmatprep.subr.mxu0 0.0
  %4123 = vmatpush1.msra.mxu0 %v4088
  %4124 = vmatprep.subr.mxu0 0.0
  %4125 = vmatpush1.msra.mxu0 %v4089
  %4126 = vmatprep.subr.mxu0 0.0
  %4127 = vmatpush1.msra.mxu0 %v4090
  %4128 = vmatprep.subr.mxu0 0.0
  %4129 = vmatpush1.msra.mxu0 %v4091
  %4130 = vmatprep.subr.mxu0 0.0
  %4131 = vmatpush1.msra.mxu0 %v4092
  %4132 = vmatprep.subr.mxu0 0.0
  %4133 = vmatpush1.msra.mxu0 %v4093
  %4134 = vmatprep.subr.mxu0 0.0
  %4135 = vmatpush1.msra.mxu0 %v4094
  %4136 = vmatprep.subr.mxu0 0.0
  %4137 = vmatpush1.msra.mxu0 %v4095
  %4138 = vmatprep.subr.mxu0 0.0
  %4139 = vmatpush1.msra.mxu0 %v4096
  %4140 = vmatprep.subr.mxu0 0.0
  %4141 = vmatpush1.msra.mxu0 %v4097
  %4142 = vmatprep.subr.mxu0 0.0
  %4143 = vmatpush1.msra.mxu0 %v4098
  %4144 = vmatprep.subr.mxu0 0.0
  %4145 = vmatpush1.msra.mxu0 %v4099
  %4146 = vmatprep.subr.mxu0 0.0
  %4147 = vmatpush1.msra.mxu0 %v4100
  %4148 = vmatprep.subr.mxu0 0.0
  %4149 = vmatpush1.msra.mxu0 %v4101
  %4150 = vmatprep.subr.mxu0 0.0
  %4151 = vmatpush1.msra.mxu0 %v4102
  %4152 = vmatprep.subr.mxu0 0.0
  %4153 = vmatpush1.msra.mxu0 %v4103
  %4154 = vmatprep.subr.mxu0 0.0
  %4155 = vmatpush1.msra.mxu0 %v4104
  %4156 = vmatprep.subr.mxu0 0.0
  %4157 = vmatpush1.msra.mxu0 %v4105
  %4158 = vmatprep.subr.mxu0 0.0
  %4159 = vmatpush1.msra.mxu0 0.0
  %4160 = vmatprep.subr.mxu0 0.0
  %4161 = vmatpush1.msra.mxu0 0.0
  %4162 = vmatprep.subr.mxu0 0.0
  %4163 = vmatpush1.msra.mxu0 0.0
  %4164 = vmatprep.subr.mxu0 0.0
  %4165 = vmatpush1.msra.mxu0 0.0
  %4166 = vmatprep.subr.mxu0 0.0
  %4167 = vmatpush1.msra.mxu0 0.0
  %4168 = vmatprep.subr.mxu0 0.0
  %4169 = vmatpush1.msra.mxu0 0.0
  %4170 = vmatprep.subr.mxu0 0.0
  %4171 = vmatpush1.msra.mxu0 0.0
  %4172 = vmatprep.subr.mxu0 0.0
  %4173 = vmatpush1.msra.mxu0 0.0
  %4174 = vmatprep.subr.mxu0 0.0
  %4175 = vmatpush1.msra.mxu0 0.0
  %4176 = vmatprep.subr.mxu0 0.0
  %4177 = vmatpush1.msra.mxu0 0.0
  %4178 = vmatprep.subr.mxu0 0.0
  %4179 = vmatpush1.msra.mxu0 0.0
  %4180 = vmatprep.subr.mxu0 0.0
  %4181 = vmatpush1.msra.mxu0 0.0
  %4182 = vmatprep.mubr.f32.mxu0 %v4116
  %4183 = vmatmul.mubr.f32.gmra.mrb[0].mxu0 %v4085
  %v4184 = vpop.f32.mrb[0].mxu0
  %v4185 = vadd.f32 %v4114, %v4184
  %v4186 = vpop.f32.mrb[0].mxu0
  %4187 = vdwg.mxu0
  %vm4188 = vcmask 39936
  %4189 = vst.msk [vmem:[%s18] sm:$0xff] %vm4188, %v4185
  // Predicated region
  $region74: #{lstm_multistep_forward.1} parent=0 // pred_check
    _
  $region75: #{lstm_multistep_forward.1} parent=0 // pred_check_branch
    %4191 = sbr.rel (0) target = $region77
  $region76: #{lstm_multistep_forward.1} parent=0 // pred_region
    _
  $region77: #{lstm_multistep_forward.1} parent=0 // pred_fallthru
    _
  // Predicated region
  $region78: #{lstm_multistep_forward.1} parent=0 // pred_check
    _
  $region79: #{lstm_multistep_forward.1} parent=0 // pred_check_branch
    %4193 = sbr.rel (0) target = $region81
  $region80: #{lstm_multistep_forward.1} parent=0 // pred_region
    _
  $region81: #{lstm_multistep_forward.1} parent=0 // pred_fallthru
    _

</llo_original>
